<compile_context>
chip_gen: v5e
topology: v5e:2x2
jax: 0.10.0
libtpu: 0.0.40
codegen_flags: <defaults>
</compile_context>

<pallas_src>
import functools
import math

import jax
import jax.numpy as jnp
from jax import lax
from jax.experimental import pallas as pl
from jax.experimental.pallas import tpu as pltpu


# ----------------------------- Fused Pallas kernel ---------------------------

def _make_autoencoder_kernel(num_layers, T, Bp, H):
    """Build the fused GRU-autoencoder kernel for static (num_layers, T, Bp, H)."""
    unroll = T if T <= 8 else 4  # cap unroll for large T (code size / vreg pressure)

    def gru_step(gi_rz_t, gi_n_t, h, whh_rz, whh_n, bhh_n_b):
        # gi_*: hoisted x_t @ W_ih (+ biases) ; h: (Bp, H) f32 carried in vregs.
        h_b = h.astype(jnp.bfloat16)
        gh_rz = jnp.dot(h_b, whh_rz, preferred_element_type=jnp.float32)
        gh_n = jnp.dot(h_b, whh_n, preferred_element_type=jnp.float32)
        rz = jax.nn.sigmoid(gi_rz_t + gh_rz)            # fused r|z: one EUP push
        r = rz[:, :H]
        z = rz[:, H:]
        n = jnp.tanh(gi_n_t + r * (gh_n + bhh_n_b))     # b_hh_n stays inside r*(.)
        return n + z * (h - n)                          # == (1 - z) * n + z * h

    def kernel(*refs):
        it = iter(refs)
        x_ref = next(it)                                              # (T*Bp, I) f32
        enc = [tuple(next(it) for _ in range(7)) for _ in range(num_layers)]
        enc_w_ref = next(it)                                          # (H, L)  bf16
        enc_b_ref = next(it)                                          # (1, L)  f32
        dec = [tuple(next(it) for _ in range(7)) for _ in range(num_layers)]
        dec_w_ref = next(it)                                          # (H, Ipad) bf16
        dec_b_ref = next(it)                                          # (1, Ipad) f32
        out_ref = next(it)                                            # (T*Bp, Ipad)
        seq_ref = next(it)                                            # (T*Bp, H)  scratch
        gi_rz_ref = next(it)                                          # (T*Bp, 2H) scratch
        gi_n_ref = next(it)                                           # (T*Bp, H)  scratch

        def hoist_gi(inp_bf16, layer):
            # One big matmul per layer for all timesteps; biases folded here
            # (one broadcast per layer, not per step).
            wih_rz, wih_n, _, _, b_rz, b_ih_n, _ = layer
            gi_rz_ref[...] = (
                jnp.dot(inp_bf16, wih_rz[...], preferred_element_type=jnp.float32)
                + b_rz[...]
            )
            gi_n_ref[...] = (
                jnp.dot(inp_bf16, wih_n[...], preferred_element_type=jnp.float32)
                + b_ih_n[...]
            )

        def recurrence(layer):
            _, _, whh_rz_ref, whh_n_ref, _, _, b_hh_n = layer
            whh_rz = whh_rz_ref[...]
            whh_n = whh_n_ref[...]
            bhh_n_b = jnp.broadcast_to(b_hh_n[...], (Bp, H))  # hoisted, once per layer

            def body(t, h):
                off = pl.multiple_of(t * Bp, Bp)
                h_new = gru_step(gi_rz_ref[pl.ds(off, Bp), :],
                                 gi_n_ref[pl.ds(off, Bp), :],
                                 h, whh_rz, whh_n, bhh_n_b)
                seq_ref[pl.ds(off, Bp), :] = h_new
                return h_new

            return lax.fori_loop(0, T, body, jnp.zeros((Bp, H), jnp.float32),
                                 unroll=unroll)

        # ------------------------------ encoder ------------------------------
        h_last = None
        for l in range(num_layers):
            inp = x_ref[...] if l == 0 else seq_ref[...]
            hoist_gi(inp.astype(jnp.bfloat16), enc[l])
            h_last = recurrence(enc[l])

        # Last hidden state of the top encoder layer -> latent (Bp, L).
        z_lat = (
            jnp.dot(h_last.astype(jnp.bfloat16), enc_w_ref[...],
                    preferred_element_type=jnp.float32)
            + enc_b_ref[...]
        )

        # ------------------------------ decoder ------------------------------
        # Layer 0: input is the latent repeated over time, so its Gi is constant
        # -- compute it once, never materialize the repeated latent.
        wih_rz, wih_n, whh_rz_ref, whh_n_ref, b_rz, b_ih_n, b_hh_n = dec[0]
        z_b = z_lat.astype(jnp.bfloat16)
        gi_rz_c = (jnp.dot(z_b, wih_rz[...], preferred_element_type=jnp.float32)
                   + b_rz[...])
        gi_n_c = (jnp.dot(z_b, wih_n[...], preferred_element_type=jnp.float32)
                  + b_ih_n[...])
        whh_rz0 = whh_rz_ref[...]
        whh_n0 = whh_n_ref[...]
        bhh_n_b0 = jnp.broadcast_to(b_hh_n[...], (Bp, H))

        def dec0_body(t, h):
            off = pl.multiple_of(t * Bp, Bp)
            h_new = gru_step(gi_rz_c, gi_n_c, h, whh_rz0, whh_n0, bhh_n_b0)
            seq_ref[pl.ds(off, Bp), :] = h_new
            return h_new

        lax.fori_loop(0, T, dec0_body, jnp.zeros((Bp, H), jnp.float32),
                      unroll=unroll)

        for l in range(1, num_layers):
            hoist_gi(seq_ref[...].astype(jnp.bfloat16), dec[l])
            recurrence(dec[l])

        # Fused decoder output Linear; lane-dense (padded-to-128) store.
        out_ref[...] = (
            jnp.dot(seq_ref[...].astype(jnp.bfloat16), dec_w_ref[...],
                    preferred_element_type=jnp.float32)
            + dec_b_ref[...]
        )

    return kernel


# ----------------------------- Wrapper ---------------------------------------

def _split_gru_layer(lp, H):
    """Split concatenated (r,z,n) gate weights into r|z and n blocks.

    Weights are pre-cast to bf16 (MXU-native); the r|z input/hidden biases are
    pre-summed so the kernel folds them into the hoisted Gi once per layer.
    """
    H2 = 2 * H
    return [
        lp["w_ih"][:, :H2].astype(jnp.bfloat16),            # (in, 2H)
        lp["w_ih"][:, H2:].astype(jnp.bfloat16),             # (in, H)
        lp["w_hh"][:, :H2].astype(jnp.bfloat16),             # (H, 2H)
        lp["w_hh"][:, H2:].astype(jnp.bfloat16),              # (H, H)
        (lp["b_ih"][:, :H2] + lp["b_hh"][:, :H2]).astype(jnp.float32),  # (1, 2H)
        lp["b_ih"][:, H2:].astype(jnp.float32),               # (1, H)
        lp["b_hh"][:, H2:].astype(jnp.float32),                # (1, H)
    ]


def gru_autoencoder_forward(params, x, *, num_layers, hidden_size):
    """x: (B, T, input_size) -> x_hat: (B, T, input_size)."""
    B, T, I = x.shape
    H = hidden_size
    Bp = ((B + 7) // 8) * 8            # pad batch to a multiple of 8 sublanes
    Ipad = ((I + 127) // 128) * 128    # lane-dense output width (unmasked stores)

    # TODO(synk): for large T*Bp, chunk x / x_hat over a time grid axis so HBM
    # traffic overlaps the recurrence, and avoid padded-row waste in layer 0.
    x_tm = jnp.transpose(x, (1, 0, 2)).astype(jnp.float32)   # (T, B, I) time-major
    x_tm = jnp.pad(x_tm, ((0, 0), (0, Bp - B), (0, 0)))       # (T, Bp, I)
    x2d = x_tm.reshape(T * Bp, I)                             # row t*Bp + b

    inputs = [x2d]
    for lp in params["enc_gru"]:
        inputs += _split_gru_layer(lp, H)
    inputs += [params["enc_lin_w"].astype(jnp.bfloat16), params["enc_lin_b"]]
    for lp in params["dec_gru"]:
        inputs += _split_gru_layer(lp, H)
    dec_w = jnp.pad(params["dec_lin_w"], ((0, 0), (0, Ipad - I))).astype(jnp.bfloat16)
    dec_b = jnp.pad(params["dec_lin_b"], ((0, 0), (0, Ipad - I)))
    inputs += [dec_w, dec_b]

    kernel = _make_autoencoder_kernel(num_layers, T, Bp, H)
    out2d = pl.pallas_call(
        kernel,
        out_shape=jax.ShapeDtypeStruct((T * Bp, Ipad), jnp.float32),
        scratch_shapes=[
            pltpu.VMEM((T * Bp, H), jnp.float32),        # current layer's output sequence
            pltpu.VMEM((T * Bp, 2 * H), jnp.float32),    # hoisted r|z input projections
            pltpu.VMEM((T * Bp, H), jnp.float32),        # hoisted n input projections
        ],
        compiler_params=pltpu.CompilerParams(vmem_limit_bytes=32 * 1024 * 1024),
    )(*inputs)

    x_hat = out2d.reshape(T, Bp, Ipad)[:, :B, :I]             # drop batch/lane padding
    return jnp.transpose(x_hat, (1, 0, 2))                    # back to (B, T, I)


# ----------------------------- Parameter setup --------------------------------

def init_params(key, input_size, hidden_size, latent_dim, num_layers):
    """Deterministic synthetic params; gate weights concatenated as (in, 3H), order (r,z,n)."""
    params = {"enc_gru": [], "dec_gru": []}
    k_gru = 1.0 / math.sqrt(hidden_size)
    H3 = 3 * hidden_size

    def gru_layer(key, in_dim):
        ks = jax.random.split(key, 4)
        return dict(
            w_ih=jax.random.uniform(ks[0], (in_dim, H3), jnp.float32, -k_gru, k_gru),
            w_hh=jax.random.uniform(ks[1], (hidden_size, H3), jnp.float32, -k_gru, k_gru),
            b_ih=jax.random.uniform(ks[2], (1, H3), jnp.float32, -k_gru, k_gru),
            b_hh=jax.random.uniform(ks[3], (1, H3), jnp.float32, -k_gru, k_gru),
        )

    keys = jax.random.split(key, 2 * num_layers + 4)
    ki = 0
    for l in range(num_layers):                                # encoder GRU stack
        in_dim = input_size if l == 0 else hidden_size
        params["enc_gru"].append(gru_layer(keys[ki], in_dim)); ki += 1
    k_lin = 1.0 / math.sqrt(hidden_size)
    params["enc_lin_w"] = jax.random.uniform(keys[ki], (hidden_size, latent_dim), jnp.float32, -k_lin, k_lin); ki += 1
    params["enc_lin_b"] = jax.random.uniform(keys[ki], (1, latent_dim), jnp.float32, -k_lin, k_lin); ki += 1
    for l in range(num_layers):                                # decoder GRU stack
        in_dim = latent_dim if l == 0 else hidden_size
        params["dec_gru"].append(gru_layer(keys[ki], in_dim)); ki += 1
    params["dec_lin_w"] = jax.random.uniform(keys[ki], (hidden_size, input_size), jnp.float32, -k_lin, k_lin); ki += 1
    params["dec_lin_b"] = jax.random.uniform(keys[ki], (1, input_size), jnp.float32, -k_lin, k_lin)
    return params


# ----------------------------- Pure-JAX reference -----------------------------

def _gru_layer_ref(x_tm, lp, H, mm):
    def step(h, x_t):
        gi = mm(x_t, lp["w_ih"]) + lp["b_ih"]
        gh = mm(h, lp["w_hh"]) + lp["b_hh"]
        r = jax.nn.sigmoid(gi[:, :H] + gh[:, :H])
        z = jax.nn.sigmoid(gi[:, H:2 * H] + gh[:, H:2 * H])
        n = jnp.tanh(gi[:, 2 * H:] + r * gh[:, 2 * H:])
        h_new = (1.0 - z) * n + z * h
        return h_new, h_new

    B = x_tm.shape[1]
    h0 = jnp.zeros((B, H), jnp.float32)
    _, ys = lax.scan(step, h0, x_tm)
    return ys


def forward_ref(params, x, hidden_size, matmul_dtype=jnp.float32):
    def mm(a, b):
        return jnp.dot(a.astype(matmul_dtype), b.astype(matmul_dtype),
                       preferred_element_type=jnp.float32)

    B, T, I = x.shape
    h = jnp.transpose(x, (1, 0, 2)).astype(jnp.float32)
    for lp in params["enc_gru"]:
        h = _gru_layer_ref(h, lp, hidden_size, mm)
    z = mm(h[-1], params["enc_lin_w"]) + params["enc_lin_b"]
    L = z.shape[-1]
    d = jnp.broadcast_to(z[None, :, :], (T, B, L))
    for lp in params["dec_gru"]:
        d = _gru_layer_ref(d, lp, hidden_size, mm)
    x_hat = (mm(d.reshape(T * B, hidden_size), params["dec_lin_w"]).reshape(T, B, I)
             + params["dec_lin_b"])
    return jnp.transpose(x_hat, (1, 0, 2))


# ----------------------------- Main -------------------------------------------

if __name__ == "__main__":
    batch, seq_len = 2, 8
    input_size, hidden_size, latent_dim, num_layers = 16, 32, 8, 2

    key = jax.random.PRNGKey(0)
    k_params, k_x = jax.random.split(key)
    params = init_params(k_params, input_size, hidden_size, latent_dim, num_layers)
    x = jax.random.normal(k_x, (batch, seq_len, input_size), jnp.float32)

    fwd = jax.jit(functools.partial(gru_autoencoder_forward,
                                    num_layers=num_layers, hidden_size=hidden_size))
    x_hat = jax.block_until_ready(fwd(params, x))
    assert x_hat.shape == (batch, seq_len, input_size), x_hat.shape

    # Tight check against a reference using the same bf16-operand / f32-accum matmuls.
    ref_bf16 = jax.block_until_ready(forward_ref(params, x, hidden_size, jnp.bfloat16))
    err = float(jnp.max(jnp.abs(x_hat - ref_bf16)))
    assert err < 1e-4, f"bf16-matmul reference mismatch: {err}"

    # Sanity check against the pure-f32 reference (difference is bf16 matmul rounding only).
    ref_f32 = jax.block_until_ready(forward_ref(params, x, hidden_size, jnp.float32))
    err_f32 = float(jnp.max(jnp.abs(x_hat - ref_f32)))
    assert err_f32 < 5e-2, f"f32 reference mismatch: {err_f32}"

    print("KERNEL_OK")
</pallas_src>

<mosaic_0001>
module attributes {stable_mosaic.version = 11 : i64} {
  func.func @kernel(%arg0: memref<64x16xf32, #tpu.memory_space<vmem>>, %arg1: memref<16x64xbf16, #tpu.memory_space<vmem>>, %arg2: memref<16x32xbf16, #tpu.memory_space<vmem>>, %arg3: memref<32x64xbf16, #tpu.memory_space<vmem>>, %arg4: memref<32x32xbf16, #tpu.memory_space<vmem>>, %arg5: memref<1x64xf32, #tpu.memory_space<vmem>>, %arg6: memref<1x32xf32, #tpu.memory_space<vmem>>, %arg7: memref<1x32xf32, #tpu.memory_space<vmem>>, %arg8: memref<32x64xbf16, #tpu.memory_space<vmem>>, %arg9: memref<32x32xbf16, #tpu.memory_space<vmem>>, %arg10: memref<32x64xbf16, #tpu.memory_space<vmem>>, %arg11: memref<32x32xbf16, #tpu.memory_space<vmem>>, %arg12: memref<1x64xf32, #tpu.memory_space<vmem>>, %arg13: memref<1x32xf32, #tpu.memory_space<vmem>>, %arg14: memref<1x32xf32, #tpu.memory_space<vmem>>, %arg15: memref<32x8xbf16, #tpu.memory_space<vmem>>, %arg16: memref<1x8xf32, #tpu.memory_space<vmem>>, %arg17: memref<8x64xbf16, #tpu.memory_space<vmem>>, %arg18: memref<8x32xbf16, #tpu.memory_space<vmem>>, %arg19: memref<32x64xbf16, #tpu.memory_space<vmem>>, %arg20: memref<32x32xbf16, #tpu.memory_space<vmem>>, %arg21: memref<1x64xf32, #tpu.memory_space<vmem>>, %arg22: memref<1x32xf32, #tpu.memory_space<vmem>>, %arg23: memref<1x32xf32, #tpu.memory_space<vmem>>, %arg24: memref<32x64xbf16, #tpu.memory_space<vmem>>, %arg25: memref<32x32xbf16, #tpu.memory_space<vmem>>, %arg26: memref<32x64xbf16, #tpu.memory_space<vmem>>, %arg27: memref<32x32xbf16, #tpu.memory_space<vmem>>, %arg28: memref<1x64xf32, #tpu.memory_space<vmem>>, %arg29: memref<1x32xf32, #tpu.memory_space<vmem>>, %arg30: memref<1x32xf32, #tpu.memory_space<vmem>>, %arg31: memref<32x128xbf16, #tpu.memory_space<vmem>>, %arg32: memref<1x128xf32, #tpu.memory_space<vmem>>, %arg33: memref<64x128xf32, #tpu.memory_space<vmem>>, %arg34: memref<64x32xf32, #tpu.memory_space<vmem>>, %arg35: memref<64x64xf32, #tpu.memory_space<vmem>>, %arg36: memref<64x32xf32, #tpu.memory_space<vmem>>) attributes {dimension_semantics = [], scalar_prefetch = 0 : i64, scratch_operands = 3 : i64, tpu.core_type = #tpu.core_type<tc>} {
    %c0 = arith.constant 0 : index
    %c0_0 = arith.constant 0 : index
    %0 = vector.load %arg0[%c0, %c0_0] : memref<64x16xf32, #tpu.memory_space<vmem>>, vector<64x16xf32>
    %1 = arith.truncf %0 : vector<64x16xf32> to vector<64x16xbf16>
    %c0_1 = arith.constant 0 : index
    %c0_2 = arith.constant 0 : index
    %2 = vector.load %arg1[%c0_1, %c0_2] : memref<16x64xbf16, #tpu.memory_space<vmem>>, vector<16x64xbf16>
    %cst = arith.constant dense<0.000000e+00> : vector<64x64xf32>
    %3 = tpu.matmul %1, %2, %cst {dimension_numbers = #tpu.dot_dimension_numbers<[1], [0], [0], [1], [0, 0, 1, 1], [], []>} : vector<64x16xbf16>, vector<16x64xbf16>, vector<64x64xf32> -> vector<64x64xf32>
    %c0_3 = arith.constant 0 : index
    %c0_4 = arith.constant 0 : index
    %4 = vector.load %arg5[%c0_3, %c0_4] : memref<1x64xf32, #tpu.memory_space<vmem>>, vector<1x64xf32>
    %5 = vector.broadcast %4 : vector<1x64xf32> to vector<64x64xf32>
    %6 = arith.addf %3, %5 : vector<64x64xf32>
    %c0_5 = arith.constant 0 : index
    %c0_6 = arith.constant 0 : index
    %7 = vector.load %arg35[%c0_5, %c0_6] : memref<64x64xf32, #tpu.memory_space<vmem>>, vector<64x64xf32>
    tpu.vector_store %arg35[%c0_5, %c0_6], %6 {strides = array<i32>} : memref<64x64xf32, #tpu.memory_space<vmem>>, vector<64x64xf32>,
    %c0_7 = arith.constant 0 : index
    %c0_8 = arith.constant 0 : index
    %8 = vector.load %arg2[%c0_7, %c0_8] : memref<16x32xbf16, #tpu.memory_space<vmem>>, vector<16x32xbf16>
    %cst_9 = arith.constant dense<0.000000e+00> : vector<64x32xf32>
    %9 = tpu.matmul %1, %8, %cst_9 {dimension_numbers = #tpu.dot_dimension_numbers<[1], [0], [0], [1], [0, 0, 1, 1], [], []>} : vector<64x16xbf16>, vector<16x32xbf16>, vector<64x32xf32> -> vector<64x32xf32>
    %c0_10 = arith.constant 0 : index
    %c0_11 = arith.constant 0 : index
    %10 = vector.load %arg6[%c0_10, %c0_11] : memref<1x32xf32, #tpu.memory_space<vmem>>, vector<1x32xf32>
    %11 = vector.broadcast %10 : vector<1x32xf32> to vector<64x32xf32>
    %12 = arith.addf %9, %11 : vector<64x32xf32>
    %c0_12 = arith.constant 0 : index
    %c0_13 = arith.constant 0 : index
    %13 = vector.load %arg36[%c0_12, %c0_13] : memref<64x32xf32, #tpu.memory_space<vmem>>, vector<64x32xf32>
    tpu.vector_store %arg36[%c0_12, %c0_13], %12 {strides = array<i32>} : memref<64x32xf32, #tpu.memory_space<vmem>>, vector<64x32xf32>,
    %c0_14 = arith.constant 0 : index
    %c0_15 = arith.constant 0 : index
    %14 = vector.load %arg3[%c0_14, %c0_15] : memref<32x64xbf16, #tpu.memory_space<vmem>>, vector<32x64xbf16>
    %c0_16 = arith.constant 0 : index
    %c0_17 = arith.constant 0 : index
    %15 = vector.load %arg4[%c0_16, %c0_17] : memref<32x32xbf16, #tpu.memory_space<vmem>>, vector<32x32xbf16>
    %c0_18 = arith.constant 0 : index
    %c0_19 = arith.constant 0 : index
    %16 = vector.load %arg7[%c0_18, %c0_19] : memref<1x32xf32, #tpu.memory_space<vmem>>, vector<1x32xf32>
    %17 = vector.shape_cast %16 : vector<1x32xf32> to vector<1x32xf32>
    %18 = vector.broadcast %17 : vector<1x32xf32> to vector<8x32xf32>
    %cst_20 = arith.constant 0.000000e+00 : f32
    %19 = vector.broadcast %cst_20 : f32 to vector<8x32xf32>
    %c0_i32 = arith.constant 0 : i32
    %c8_i32 = arith.constant 8 : i32
    %20 = arith.muli %c0_i32, %c8_i32 : i32
    %21 = tpu.assume_multiple %20, 8 : i32
    %22 = arith.index_cast %21 : i32 to index
    %c0_21 = arith.constant 0 : index
    %23 = vector.load %arg35[%22, %c0_21] : memref<64x64xf32, #tpu.memory_space<vmem>>, vector<8x64xf32>
    %24 = arith.index_cast %21 : i32 to index
    %c0_22 = arith.constant 0 : index
    %25 = vector.load %arg36[%24, %c0_22] : memref<64x32xf32, #tpu.memory_space<vmem>>, vector<8x32xf32>
    %26 = arith.truncf %19 : vector<8x32xf32> to vector<8x32xbf16>
    %cst_23 = arith.constant dense<0.000000e+00> : vector<8x64xf32>
    %27 = tpu.matmul %26, %14, %cst_23 {dimension_numbers = #tpu.dot_dimension_numbers<[1], [0], [0], [1], [0, 0, 1, 1], [], []>} : vector<8x32xbf16>, vector<32x64xbf16>, vector<8x64xf32> -> vector<8x64xf32>
    %cst_24 = arith.constant dense<0.000000e+00> : vector<8x32xf32>
    %28 = tpu.matmul %26, %15, %cst_24 {dimension_numbers = #tpu.dot_dimension_numbers<[1], [0], [0], [1], [0, 0, 1, 1], [], []>} : vector<8x32xbf16>, vector<32x32xbf16>, vector<8x32xf32> -> vector<8x32xf32>
    %29 = arith.addf %23, %27 : vector<8x64xf32>
    %30 = arith.negf %29 : vector<8x64xf32>
    %31 = math.exp %30 : vector<8x64xf32>
    %cst_25 = arith.constant 1.000000e+00 : f32
    %32 = vector.broadcast %cst_25 : f32 to vector<8x64xf32>
    %33 = arith.addf %32, %31 : vector<8x64xf32>
    %34 = arith.divf %32, %33 : vector<8x64xf32>
    %35 = vector.extract_strided_slice %34 {offsets = [0, 0], sizes = [8, 32], strides = [1, 1]} : vector<8x64xf32> to vector<8x32xf32>
    %36 = vector.extract_strided_slice %34 {offsets = [0, 32], sizes = [8, 32], strides = [1, 1]} : vector<8x64xf32> to vector<8x32xf32>
    %37 = arith.addf %28, %18 : vector<8x32xf32>
    %38 = arith.mulf %35, %37 : vector<8x32xf32>
    %39 = arith.addf %25, %38 : vector<8x32xf32>
    %40 = math.tanh %39 : vector<8x32xf32>
    %41 = arith.subf %19, %40 : vector<8x32xf32>
    %42 = arith.mulf %36, %41 : vector<8x32xf32>
    %43 = arith.addf %40, %42 : vector<8x32xf32>
    %44 = arith.index_cast %21 : i32 to index
    %c0_26 = arith.constant 0 : index
    %45 = vector.load %arg34[%44, %c0_26] : memref<64x32xf32, #tpu.memory_space<vmem>>, vector<8x32xf32>
    tpu.vector_store %arg34[%44, %c0_26], %43 {strides = array<i32>} : memref<64x32xf32, #tpu.memory_space<vmem>>, vector<8x32xf32>,
    %c1_i32 = arith.constant 1 : i32
    %c8_i32_27 = arith.constant 8 : i32
    %46 = arith.muli %c1_i32, %c8_i32_27 : i32
    %47 = tpu.assume_multiple %46, 8 : i32
    %48 = arith.index_cast %47 : i32 to index
    %c0_28 = arith.constant 0 : index
    %49 = vector.load %arg35[%48, %c0_28] : memref<64x64xf32, #tpu.memory_space<vmem>>, vector<8x64xf32>
    %50 = arith.index_cast %47 : i32 to index
    %c0_29 = arith.constant 0 : index
    %51 = vector.load %arg36[%50, %c0_29] : memref<64x32xf32, #tpu.memory_space<vmem>>, vector<8x32xf32>
    %52 = arith.truncf %43 : vector<8x32xf32> to vector<8x32xbf16>
    %cst_30 = arith.constant dense<0.000000e+00> : vector<8x64xf32>
    %53 = tpu.matmul %52, %14, %cst_30 {dimension_numbers = #tpu.dot_dimension_numbers<[1], [0], [0], [1], [0, 0, 1, 1], [], []>} : vector<8x32xbf16>, vector<32x64xbf16>, vector<8x64xf32> -> vector<8x64xf32>
    %cst_31 = arith.constant dense<0.000000e+00> : vector<8x32xf32>
    %54 = tpu.matmul %52, %15, %cst_31 {dimension_numbers = #tpu.dot_dimension_numbers<[1], [0], [0], [1], [0, 0, 1, 1], [], []>} : vector<8x32xbf16>, vector<32x32xbf16>, vector<8x32xf32> -> vector<8x32xf32>
    %55 = arith.addf %49, %53 : vector<8x64xf32>
    %56 = arith.negf %55 : vector<8x64xf32>
    %57 = math.exp %56 : vector<8x64xf32>
    %cst_32 = arith.constant 1.000000e+00 : f32
    %58 = vector.broadcast %cst_32 : f32 to vector<8x64xf32>
    %59 = arith.addf %58, %57 : vector<8x64xf32>
    %60 = arith.divf %58, %59 : vector<8x64xf32>
    %61 = vector.extract_strided_slice %60 {offsets = [0, 0], sizes = [8, 32], strides = [1, 1]} : vector<8x64xf32> to vector<8x32xf32>
    %62 = vector.extract_strided_slice %60 {offsets = [0, 32], sizes = [8, 32], strides = [1, 1]} : vector<8x64xf32> to vector<8x32xf32>
    %63 = arith.addf %54, %18 : vector<8x32xf32>
    %64 = arith.mulf %61, %63 : vector<8x32xf32>
    %65 = arith.addf %51, %64 : vector<8x32xf32>
    %66 = math.tanh %65 : vector<8x32xf32>
    %67 = arith.subf %43, %66 : vector<8x32xf32>
    %68 = arith.mulf %62, %67 : vector<8x32xf32>
    %69 = arith.addf %66, %68 : vector<8x32xf32>
    %70 = arith.index_cast %47 : i32 to index
    %c0_33 = arith.constant 0 : index
    %71 = vector.load %arg34[%70, %c0_33] : memref<64x32xf32, #tpu.memory_space<vmem>>, vector<8x32xf32>
    tpu.vector_store %arg34[%70, %c0_33], %69 {strides = array<i32>} : memref<64x32xf32, #tpu.memory_space<vmem>>, vector<8x32xf32>,
    %c2_i32 = arith.constant 2 : i32
    %c8_i32_34 = arith.constant 8 : i32
    %72 = arith.muli %c2_i32, %c8_i32_34 : i32
    %73 = tpu.assume_multiple %72, 8 : i32
    %74 = arith.index_cast %73 : i32 to index
    %c0_35 = arith.constant 0 : index
    %75 = vector.load %arg35[%74, %c0_35] : memref<64x64xf32, #tpu.memory_space<vmem>>, vector<8x64xf32>
    %76 = arith.index_cast %73 : i32 to index
    %c0_36 = arith.constant 0 : index
    %77 = vector.load %arg36[%76, %c0_36] : memref<64x32xf32, #tpu.memory_space<vmem>>, vector<8x32xf32>
    %78 = arith.truncf %69 : vector<8x32xf32> to vector<8x32xbf16>
    %cst_37 = arith.constant dense<0.000000e+00> : vector<8x64xf32>
    %79 = tpu.matmul %78, %14, %cst_37 {dimension_numbers = #tpu.dot_dimension_numbers<[1], [0], [0], [1], [0, 0, 1, 1], [], []>} : vector<8x32xbf16>, vector<32x64xbf16>, vector<8x64xf32> -> vector<8x64xf32>
    %cst_38 = arith.constant dense<0.000000e+00> : vector<8x32xf32>
    %80 = tpu.matmul %78, %15, %cst_38 {dimension_numbers = #tpu.dot_dimension_numbers<[1], [0], [0], [1], [0, 0, 1, 1], [], []>} : vector<8x32xbf16>, vector<32x32xbf16>, vector<8x32xf32> -> vector<8x32xf32>
    %81 = arith.addf %75, %79 : vector<8x64xf32>
    %82 = arith.negf %81 : vector<8x64xf32>
    %83 = math.exp %82 : vector<8x64xf32>
    %cst_39 = arith.constant 1.000000e+00 : f32
    %84 = vector.broadcast %cst_39 : f32 to vector<8x64xf32>
    %85 = arith.addf %84, %83 : vector<8x64xf32>
    %86 = arith.divf %84, %85 : vector<8x64xf32>
    %87 = vector.extract_strided_slice %86 {offsets = [0, 0], sizes = [8, 32], strides = [1, 1]} : vector<8x64xf32> to vector<8x32xf32>
    %88 = vector.extract_strided_slice %86 {offsets = [0, 32], sizes = [8, 32], strides = [1, 1]} : vector<8x64xf32> to vector<8x32xf32>
    %89 = arith.addf %80, %18 : vector<8x32xf32>
    %90 = arith.mulf %87, %89 : vector<8x32xf32>
    %91 = arith.addf %77, %90 : vector<8x32xf32>
    %92 = math.tanh %91 : vector<8x32xf32>
    %93 = arith.subf %69, %92 : vector<8x32xf32>
    %94 = arith.mulf %88, %93 : vector<8x32xf32>
    %95 = arith.addf %92, %94 : vector<8x32xf32>
    %96 = arith.index_cast %73 : i32 to index
    %c0_40 = arith.constant 0 : index
    %97 = vector.load %arg34[%96, %c0_40] : memref<64x32xf32, #tpu.memory_space<vmem>>, vector<8x32xf32>
    tpu.vector_store %arg34[%96, %c0_40], %95 {strides = array<i32>} : memref<64x32xf32, #tpu.memory_space<vmem>>, vector<8x32xf32>,
    %c3_i32 = arith.constant 3 : i32
    %c8_i32_41 = arith.constant 8 : i32
    %98 = arith.muli %c3_i32, %c8_i32_41 : i32
    %99 = tpu.assume_multiple %98, 8 : i32
    %100 = arith.index_cast %99 : i32 to index
    %c0_42 = arith.constant 0 : index
    %101 = vector.load %arg35[%100, %c0_42] : memref<64x64xf32, #tpu.memory_space<vmem>>, vector<8x64xf32>
    %102 = arith.index_cast %99 : i32 to index
    %c0_43 = arith.constant 0 : index
    %103 = vector.load %arg36[%102, %c0_43] : memref<64x32xf32, #tpu.memory_space<vmem>>, vector<8x32xf32>
    %104 = arith.truncf %95 : vector<8x32xf32> to vector<8x32xbf16>
    %cst_44 = arith.constant dense<0.000000e+00> : vector<8x64xf32>
    %105 = tpu.matmul %104, %14, %cst_44 {dimension_numbers = #tpu.dot_dimension_numbers<[1], [0], [0], [1], [0, 0, 1, 1], [], []>} : vector<8x32xbf16>, vector<32x64xbf16>, vector<8x64xf32> -> vector<8x64xf32>
    %cst_45 = arith.constant dense<0.000000e+00> : vector<8x32xf32>
    %106 = tpu.matmul %104, %15, %cst_45 {dimension_numbers = #tpu.dot_dimension_numbers<[1], [0], [0], [1], [0, 0, 1, 1], [], []>} : vector<8x32xbf16>, vector<32x32xbf16>, vector<8x32xf32> -> vector<8x32xf32>
    %107 = arith.addf %101, %105 : vector<8x64xf32>
    %108 = arith.negf %107 : vector<8x64xf32>
    %109 = math.exp %108 : vector<8x64xf32>
    %cst_46 = arith.constant 1.000000e+00 : f32
    %110 = vector.broadcast %cst_46 : f32 to vector<8x64xf32>
    %111 = arith.addf %110, %109 : vector<8x64xf32>
    %112 = arith.divf %110, %111 : vector<8x64xf32>
    %113 = vector.extract_strided_slice %112 {offsets = [0, 0], sizes = [8, 32], strides = [1, 1]} : vector<8x64xf32> to vector<8x32xf32>
    %114 = vector.extract_strided_slice %112 {offsets = [0, 32], sizes = [8, 32], strides = [1, 1]} : vector<8x64xf32> to vector<8x32xf32>
    %115 = arith.addf %106, %18 : vector<8x32xf32>
    %116 = arith.mulf %113, %115 : vector<8x32xf32>
    %117 = arith.addf %103, %116 : vector<8x32xf32>
    %118 = math.tanh %117 : vector<8x32xf32>
    %119 = arith.subf %95, %118 : vector<8x32xf32>
    %120 = arith.mulf %114, %119 : vector<8x32xf32>
    %121 = arith.addf %118, %120 : vector<8x32xf32>
    %122 = arith.index_cast %99 : i32 to index
    %c0_47 = arith.constant 0 : index
    %123 = vector.load %arg34[%122, %c0_47] : memref<64x32xf32, #tpu.memory_space<vmem>>, vector<8x32xf32>
    tpu.vector_store %arg34[%122, %c0_47], %121 {strides = array<i32>} : memref<64x32xf32, #tpu.memory_space<vmem>>, vector<8x32xf32>,
    %c4_i32 = arith.constant 4 : i32
    %c8_i32_48 = arith.constant 8 : i32
    %124 = arith.muli %c4_i32, %c8_i32_48 : i32
    %125 = tpu.assume_multiple %124, 8 : i32
    %126 = arith.index_cast %125 : i32 to index
    %c0_49 = arith.constant 0 : index
    %127 = vector.load %arg35[%126, %c0_49] : memref<64x64xf32, #tpu.memory_space<vmem>>, vector<8x64xf32>
    %128 = arith.index_cast %125 : i32 to index
    %c0_50 = arith.constant 0 : index
    %129 = vector.load %arg36[%128, %c0_50] : memref<64x32xf32, #tpu.memory_space<vmem>>, vector<8x32xf32>
    %130 = arith.truncf %121 : vector<8x32xf32> to vector<8x32xbf16>
    %cst_51 = arith.constant dense<0.000000e+00> : vector<8x64xf32>
    %131 = tpu.matmul %130, %14, %cst_51 {dimension_numbers = #tpu.dot_dimension_numbers<[1], [0], [0], [1], [0, 0, 1, 1], [], []>} : vector<8x32xbf16>, vector<32x64xbf16>, vector<8x64xf32> -> vector<8x64xf32>
    %cst_52 = arith.constant dense<0.000000e+00> : vector<8x32xf32>
    %132 = tpu.matmul %130, %15, %cst_52 {dimension_numbers = #tpu.dot_dimension_numbers<[1], [0], [0], [1], [0, 0, 1, 1], [], []>} : vector<8x32xbf16>, vector<32x32xbf16>, vector<8x32xf32> -> vector<8x32xf32>
    %133 = arith.addf %127, %131 : vector<8x64xf32>
    %134 = arith.negf %133 : vector<8x64xf32>
    %135 = math.exp %134 : vector<8x64xf32>
    %cst_53 = arith.constant 1.000000e+00 : f32
    %136 = vector.broadcast %cst_53 : f32 to vector<8x64xf32>
    %137 = arith.addf %136, %135 : vector<8x64xf32>
    %138 = arith.divf %136, %137 : vector<8x64xf32>
    %139 = vector.extract_strided_slice %138 {offsets = [0, 0], sizes = [8, 32], strides = [1, 1]} : vector<8x64xf32> to vector<8x32xf32>
    %140 = vector.extract_strided_slice %138 {offsets = [0, 32], sizes = [8, 32], strides = [1, 1]} : vector<8x64xf32> to vector<8x32xf32>
    %141 = arith.addf %132, %18 : vector<8x32xf32>
    %142 = arith.mulf %139, %141 : vector<8x32xf32>
    %143 = arith.addf %129, %142 : vector<8x32xf32>
    %144 = math.tanh %143 : vector<8x32xf32>
    %145 = arith.subf %121, %144 : vector<8x32xf32>
    %146 = arith.mulf %140, %145 : vector<8x32xf32>
    %147 = arith.addf %144, %146 : vector<8x32xf32>
    %148 = arith.index_cast %125 : i32 to index
    %c0_54 = arith.constant 0 : index
    %149 = vector.load %arg34[%148, %c0_54] : memref<64x32xf32, #tpu.memory_space<vmem>>, vector<8x32xf32>
    tpu.vector_store %arg34[%148, %c0_54], %147 {strides = array<i32>} : memref<64x32xf32, #tpu.memory_space<vmem>>, vector<8x32xf32>,
    %c5_i32 = arith.constant 5 : i32
    %c8_i32_55 = arith.constant 8 : i32
    %150 = arith.muli %c5_i32, %c8_i32_55 : i32
    %151 = tpu.assume_multiple %150, 8 : i32
    %152 = arith.index_cast %151 : i32 to index
    %c0_56 = arith.constant 0 : index
    %153 = vector.load %arg35[%152, %c0_56] : memref<64x64xf32, #tpu.memory_space<vmem>>, vector<8x64xf32>
    %154 = arith.index_cast %151 : i32 to index
    %c0_57 = arith.constant 0 : index
    %155 = vector.load %arg36[%154, %c0_57] : memref<64x32xf32, #tpu.memory_space<vmem>>, vector<8x32xf32>
    %156 = arith.truncf %147 : vector<8x32xf32> to vector<8x32xbf16>
    %cst_58 = arith.constant dense<0.000000e+00> : vector<8x64xf32>
    %157 = tpu.matmul %156, %14, %cst_58 {dimension_numbers = #tpu.dot_dimension_numbers<[1], [0], [0], [1], [0, 0, 1, 1], [], []>} : vector<8x32xbf16>, vector<32x64xbf16>, vector<8x64xf32> -> vector<8x64xf32>
    %cst_59 = arith.constant dense<0.000000e+00> : vector<8x32xf32>
    %158 = tpu.matmul %156, %15, %cst_59 {dimension_numbers = #tpu.dot_dimension_numbers<[1], [0], [0], [1], [0, 0, 1, 1], [], []>} : vector<8x32xbf16>, vector<32x32xbf16>, vector<8x32xf32> -> vector<8x32xf32>
    %159 = arith.addf %153, %157 : vector<8x64xf32>
    %160 = arith.negf %159 : vector<8x64xf32>
    %161 = math.exp %160 : vector<8x64xf32>
    %cst_60 = arith.constant 1.000000e+00 : f32
    %162 = vector.broadcast %cst_60 : f32 to vector<8x64xf32>
    %163 = arith.addf %162, %161 : vector<8x64xf32>
    %164 = arith.divf %162, %163 : vector<8x64xf32>
    %165 = vector.extract_strided_slice %164 {offsets = [0, 0], sizes = [8, 32], strides = [1, 1]} : vector<8x64xf32> to vector<8x32xf32>
    %166 = vector.extract_strided_slice %164 {offsets = [0, 32], sizes = [8, 32], strides = [1, 1]} : vector<8x64xf32> to vector<8x32xf32>
    %167 = arith.addf %158, %18 : vector<8x32xf32>
    %168 = arith.mulf %165, %167 : vector<8x32xf32>
    %169 = arith.addf %155, %168 : vector<8x32xf32>
    %170 = math.tanh %169 : vector<8x32xf32>
    %171 = arith.subf %147, %170 : vector<8x32xf32>
    %172 = arith.mulf %166, %171 : vector<8x32xf32>
    %173 = arith.addf %170, %172 : vector<8x32xf32>
    %174 = arith.index_cast %151 : i32 to index
    %c0_61 = arith.constant 0 : index
    %175 = vector.load %arg34[%174, %c0_61] : memref<64x32xf32, #tpu.memory_space<vmem>>, vector<8x32xf32>
    tpu.vector_store %arg34[%174, %c0_61], %173 {strides = array<i32>} : memref<64x32xf32, #tpu.memory_space<vmem>>, vector<8x32xf32>,
    %c6_i32 = arith.constant 6 : i32
    %c8_i32_62 = arith.constant 8 : i32
    %176 = arith.muli %c6_i32, %c8_i32_62 : i32
    %177 = tpu.assume_multiple %176, 8 : i32
    %178 = arith.index_cast %177 : i32 to index
    %c0_63 = arith.constant 0 : index
    %179 = vector.load %arg35[%178, %c0_63] : memref<64x64xf32, #tpu.memory_space<vmem>>, vector<8x64xf32>
    %180 = arith.index_cast %177 : i32 to index
    %c0_64 = arith.constant 0 : index
    %181 = vector.load %arg36[%180, %c0_64] : memref<64x32xf32, #tpu.memory_space<vmem>>, vector<8x32xf32>
    %182 = arith.truncf %173 : vector<8x32xf32> to vector<8x32xbf16>
    %cst_65 = arith.constant dense<0.000000e+00> : vector<8x64xf32>
    %183 = tpu.matmul %182, %14, %cst_65 {dimension_numbers = #tpu.dot_dimension_numbers<[1], [0], [0], [1], [0, 0, 1, 1], [], []>} : vector<8x32xbf16>, vector<32x64xbf16>, vector<8x64xf32> -> vector<8x64xf32>
    %cst_66 = arith.constant dense<0.000000e+00> : vector<8x32xf32>
    %184 = tpu.matmul %182, %15, %cst_66 {dimension_numbers = #tpu.dot_dimension_numbers<[1], [0], [0], [1], [0, 0, 1, 1], [], []>} : vector<8x32xbf16>, vector<32x32xbf16>, vector<8x32xf32> -> vector<8x32xf32>
    %185 = arith.addf %179, %183 : vector<8x64xf32>
    %186 = arith.negf %185 : vector<8x64xf32>
    %187 = math.exp %186 : vector<8x64xf32>
    %cst_67 = arith.constant 1.000000e+00 : f32
    %188 = vector.broadcast %cst_67 : f32 to vector<8x64xf32>
    %189 = arith.addf %188, %187 : vector<8x64xf32>
    %190 = arith.divf %188, %189 : vector<8x64xf32>
    %191 = vector.extract_strided_slice %190 {offsets = [0, 0], sizes = [8, 32], strides = [1, 1]} : vector<8x64xf32> to vector<8x32xf32>
    %192 = vector.extract_strided_slice %190 {offsets = [0, 32], sizes = [8, 32], strides = [1, 1]} : vector<8x64xf32> to vector<8x32xf32>
    %193 = arith.addf %184, %18 : vector<8x32xf32>
    %194 = arith.mulf %191, %193 : vector<8x32xf32>
    %195 = arith.addf %181, %194 : vector<8x32xf32>
    %196 = math.tanh %195 : vector<8x32xf32>
    %197 = arith.subf %173, %196 : vector<8x32xf32>
    %198 = arith.mulf %192, %197 : vector<8x32xf32>
    %199 = arith.addf %196, %198 : vector<8x32xf32>
    %200 = arith.index_cast %177 : i32 to index
    %c0_68 = arith.constant 0 : index
    %201 = vector.load %arg34[%200, %c0_68] : memref<64x32xf32, #tpu.memory_space<vmem>>, vector<8x32xf32>
    tpu.vector_store %arg34[%200, %c0_68], %199 {strides = array<i32>} : memref<64x32xf32, #tpu.memory_space<vmem>>, vector<8x32xf32>,
    %c7_i32 = arith.constant 7 : i32
    %c8_i32_69 = arith.constant 8 : i32
    %202 = arith.muli %c7_i32, %c8_i32_69 : i32
    %203 = tpu.assume_multiple %202, 8 : i32
    %204 = arith.index_cast %203 : i32 to index
    %c0_70 = arith.constant 0 : index
    %205 = vector.load %arg35[%204, %c0_70] : memref<64x64xf32, #tpu.memory_space<vmem>>, vector<8x64xf32>
    %206 = arith.index_cast %203 : i32 to index
    %c0_71 = arith.constant 0 : index
    %207 = vector.load %arg36[%206, %c0_71] : memref<64x32xf32, #tpu.memory_space<vmem>>, vector<8x32xf32>
    %208 = arith.truncf %199 : vector<8x32xf32> to vector<8x32xbf16>
    %cst_72 = arith.constant dense<0.000000e+00> : vector<8x64xf32>
    %209 = tpu.matmul %208, %14, %cst_72 {dimension_numbers = #tpu.dot_dimension_numbers<[1], [0], [0], [1], [0, 0, 1, 1], [], []>} : vector<8x32xbf16>, vector<32x64xbf16>, vector<8x64xf32> -> vector<8x64xf32>
    %cst_73 = arith.constant dense<0.000000e+00> : vector<8x32xf32>
    %210 = tpu.matmul %208, %15, %cst_73 {dimension_numbers = #tpu.dot_dimension_numbers<[1], [0], [0], [1], [0, 0, 1, 1], [], []>} : vector<8x32xbf16>, vector<32x32xbf16>, vector<8x32xf32> -> vector<8x32xf32>
    %211 = arith.addf %205, %209 : vector<8x64xf32>
    %212 = arith.negf %211 : vector<8x64xf32>
    %213 = math.exp %212 : vector<8x64xf32>
    %cst_74 = arith.constant 1.000000e+00 : f32
    %214 = vector.broadcast %cst_74 : f32 to vector<8x64xf32>
    %215 = arith.addf %214, %213 : vector<8x64xf32>
    %216 = arith.divf %214, %215 : vector<8x64xf32>
    %217 = vector.extract_strided_slice %216 {offsets = [0, 0], sizes = [8, 32], strides = [1, 1]} : vector<8x64xf32> to vector<8x32xf32>
    %218 = vector.extract_strided_slice %216 {offsets = [0, 32], sizes = [8, 32], strides = [1, 1]} : vector<8x64xf32> to vector<8x32xf32>
    %219 = arith.addf %210, %18 : vector<8x32xf32>
    %220 = arith.mulf %217, %219 : vector<8x32xf32>
    %221 = arith.addf %207, %220 : vector<8x32xf32>
    %222 = math.tanh %221 : vector<8x32xf32>
    %223 = arith.subf %199, %222 : vector<8x32xf32>
    %224 = arith.mulf %218, %223 : vector<8x32xf32>
    %225 = arith.addf %222, %224 : vector<8x32xf32>
    %226 = arith.index_cast %203 : i32 to index
    %c0_75 = arith.constant 0 : index
    %227 = vector.load %arg34[%226, %c0_75] : memref<64x32xf32, #tpu.memory_space<vmem>>, vector<8x32xf32>
    tpu.vector_store %arg34[%226, %c0_75], %225 {strides = array<i32>} : memref<64x32xf32, #tpu.memory_space<vmem>>, vector<8x32xf32>,
    %c8_i32_76 = arith.constant 8 : i32
    %c0_77 = arith.constant 0 : index
    %c0_78 = arith.constant 0 : index
    %228 = vector.load %arg34[%c0_77, %c0_78] : memref<64x32xf32, #tpu.memory_space<vmem>>, vector<64x32xf32>
    %229 = arith.truncf %228 : vector<64x32xf32> to vector<64x32xbf16>
    %c0_79 = arith.constant 0 : index
    %c0_80 = arith.constant 0 : index
    %230 = vector.load %arg8[%c0_79, %c0_80] : memref<32x64xbf16, #tpu.memory_space<vmem>>, vector<32x64xbf16>
    %cst_81 = arith.constant dense<0.000000e+00> : vector<64x64xf32>
    %231 = tpu.matmul %229, %230, %cst_81 {dimension_numbers = #tpu.dot_dimension_numbers<[1], [0], [0], [1], [0, 0, 1, 1], [], []>} : vector<64x32xbf16>, vector<32x64xbf16>, vector<64x64xf32> -> vector<64x64xf32>
    %c0_82 = arith.constant 0 : index
    %c0_83 = arith.constant 0 : index
    %232 = vector.load %arg12[%c0_82, %c0_83] : memref<1x64xf32, #tpu.memory_space<vmem>>, vector<1x64xf32>
    %233 = vector.broadcast %232 : vector<1x64xf32> to vector<64x64xf32>
    %234 = arith.addf %231, %233 : vector<64x64xf32>
    %c0_84 = arith.constant 0 : index
    %c0_85 = arith.constant 0 : index
    %235 = vector.load %arg35[%c0_84, %c0_85] : memref<64x64xf32, #tpu.memory_space<vmem>>, vector<64x64xf32>
    tpu.vector_store %arg35[%c0_84, %c0_85], %234 {strides = array<i32>} : memref<64x64xf32, #tpu.memory_space<vmem>>, vector<64x64xf32>,
    %c0_86 = arith.constant 0 : index
    %c0_87 = arith.constant 0 : index
    %236 = vector.load %arg9[%c0_86, %c0_87] : memref<32x32xbf16, #tpu.memory_space<vmem>>, vector<32x32xbf16>
    %cst_88 = arith.constant dense<0.000000e+00> : vector<64x32xf32>
    %237 = tpu.matmul %229, %236, %cst_88 {dimension_numbers = #tpu.dot_dimension_numbers<[1], [0], [0], [1], [0, 0, 1, 1], [], []>} : vector<64x32xbf16>, vector<32x32xbf16>, vector<64x32xf32> -> vector<64x32xf32>
    %c0_89 = arith.constant 0 : index
    %c0_90 = arith.constant 0 : index
    %238 = vector.load %arg13[%c0_89, %c0_90] : memref<1x32xf32, #tpu.memory_space<vmem>>, vector<1x32xf32>
    %239 = vector.broadcast %238 : vector<1x32xf32> to vector<64x32xf32>
    %240 = arith.addf %237, %239 : vector<64x32xf32>
    %c0_91 = arith.constant 0 : index
    %c0_92 = arith.constant 0 : index
    %241 = vector.load %arg36[%c0_91, %c0_92] : memref<64x32xf32, #tpu.memory_space<vmem>>, vector<64x32xf32>
    tpu.vector_store %arg36[%c0_91, %c0_92], %240 {strides = array<i32>} : memref<64x32xf32, #tpu.memory_space<vmem>>, vector<64x32xf32>,
    %c0_93 = arith.constant 0 : index
    %c0_94 = arith.constant 0 : index
    %242 = vector.load %arg10[%c0_93, %c0_94] : memref<32x64xbf16, #tpu.memory_space<vmem>>, vector<32x64xbf16>
    %c0_95 = arith.constant 0 : index
    %c0_96 = arith.constant 0 : index
    %243 = vector.load %arg11[%c0_95, %c0_96] : memref<32x32xbf16, #tpu.memory_space<vmem>>, vector<32x32xbf16>
    %c0_97 = arith.constant 0 : index
    %c0_98 = arith.constant 0 : index
    %244 = vector.load %arg14[%c0_97, %c0_98] : memref<1x32xf32, #tpu.memory_space<vmem>>, vector<1x32xf32>
    %245 = vector.shape_cast %244 : vector<1x32xf32> to vector<1x32xf32>
    %246 = vector.broadcast %245 : vector<1x32xf32> to vector<8x32xf32>
    %cst_99 = arith.constant 0.000000e+00 : f32
    %247 = vector.broadcast %cst_99 : f32 to vector<8x32xf32>
    %c0_i32_100 = arith.constant 0 : i32
    %c8_i32_101 = arith.constant 8 : i32
    %248 = arith.muli %c0_i32_100, %c8_i32_101 : i32
    %249 = tpu.assume_multiple %248, 8 : i32
    %250 = arith.index_cast %249 : i32 to index
    %c0_102 = arith.constant 0 : index
    %251 = vector.load %arg35[%250, %c0_102] : memref<64x64xf32, #tpu.memory_space<vmem>>, vector<8x64xf32>
    %252 = arith.index_cast %249 : i32 to index
    %c0_103 = arith.constant 0 : index
    %253 = vector.load %arg36[%252, %c0_103] : memref<64x32xf32, #tpu.memory_space<vmem>>, vector<8x32xf32>
    %254 = arith.truncf %247 : vector<8x32xf32> to vector<8x32xbf16>
    %cst_104 = arith.constant dense<0.000000e+00> : vector<8x64xf32>
    %255 = tpu.matmul %254, %242, %cst_104 {dimension_numbers = #tpu.dot_dimension_numbers<[1], [0], [0], [1], [0, 0, 1, 1], [], []>} : vector<8x32xbf16>, vector<32x64xbf16>, vector<8x64xf32> -> vector<8x64xf32>
    %cst_105 = arith.constant dense<0.000000e+00> : vector<8x32xf32>
    %256 = tpu.matmul %254, %243, %cst_105 {dimension_numbers = #tpu.dot_dimension_numbers<[1], [0], [0], [1], [0, 0, 1, 1], [], []>} : vector<8x32xbf16>, vector<32x32xbf16>, vector<8x32xf32> -> vector<8x32xf32>
    %257 = arith.addf %251, %255 : vector<8x64xf32>
    %258 = arith.negf %257 : vector<8x64xf32>
    %259 = math.exp %258 : vector<8x64xf32>
    %cst_106 = arith.constant 1.000000e+00 : f32
    %260 = vector.broadcast %cst_106 : f32 to vector<8x64xf32>
    %261 = arith.addf %260, %259 : vector<8x64xf32>
    %262 = arith.divf %260, %261 : vector<8x64xf32>
    %263 = vector.extract_strided_slice %262 {offsets = [0, 0], sizes = [8, 32], strides = [1, 1]} : vector<8x64xf32> to vector<8x32xf32>
    %264 = vector.extract_strided_slice %262 {offsets = [0, 32], sizes = [8, 32], strides = [1, 1]} : vector<8x64xf32> to vector<8x32xf32>
    %265 = arith.addf %256, %246 : vector<8x32xf32>
    %266 = arith.mulf %263, %265 : vector<8x32xf32>
    %267 = arith.addf %253, %266 : vector<8x32xf32>
    %268 = math.tanh %267 : vector<8x32xf32>
    %269 = arith.subf %247, %268 : vector<8x32xf32>
    %270 = arith.mulf %264, %269 : vector<8x32xf32>
    %271 = arith.addf %268, %270 : vector<8x32xf32>
    %272 = arith.index_cast %249 : i32 to index
    %c0_107 = arith.constant 0 : index
    %273 = vector.load %arg34[%272, %c0_107] : memref<64x32xf32, #tpu.memory_space<vmem>>, vector<8x32xf32>
    tpu.vector_store %arg34[%272, %c0_107], %271 {strides = array<i32>} : memref<64x32xf32, #tpu.memory_space<vmem>>, vector<8x32xf32>,
    %c1_i32_108 = arith.constant 1 : i32
    %c8_i32_109 = arith.constant 8 : i32
    %274 = arith.muli %c1_i32_108, %c8_i32_109 : i32
    %275 = tpu.assume_multiple %274, 8 : i32
    %276 = arith.index_cast %275 : i32 to index
    %c0_110 = arith.constant 0 : index
    %277 = vector.load %arg35[%276, %c0_110] : memref<64x64xf32, #tpu.memory_space<vmem>>, vector<8x64xf32>
    %278 = arith.index_cast %275 : i32 to index
    %c0_111 = arith.constant 0 : index
    %279 = vector.load %arg36[%278, %c0_111] : memref<64x32xf32, #tpu.memory_space<vmem>>, vector<8x32xf32>
    %280 = arith.truncf %271 : vector<8x32xf32> to vector<8x32xbf16>
    %cst_112 = arith.constant dense<0.000000e+00> : vector<8x64xf32>
    %281 = tpu.matmul %280, %242, %cst_112 {dimension_numbers = #tpu.dot_dimension_numbers<[1], [0], [0], [1], [0, 0, 1, 1], [], []>} : vector<8x32xbf16>, vector<32x64xbf16>, vector<8x64xf32> -> vector<8x64xf32>
    %cst_113 = arith.constant dense<0.000000e+00> : vector<8x32xf32>
    %282 = tpu.matmul %280, %243, %cst_113 {dimension_numbers = #tpu.dot_dimension_numbers<[1], [0], [0], [1], [0, 0, 1, 1], [], []>} : vector<8x32xbf16>, vector<32x32xbf16>, vector<8x32xf32> -> vector<8x32xf32>
    %283 = arith.addf %277, %281 : vector<8x64xf32>
    %284 = arith.negf %283 : vector<8x64xf32>
    %285 = math.exp %284 : vector<8x64xf32>
    %cst_114 = arith.constant 1.000000e+00 : f32
    %286 = vector.broadcast %cst_114 : f32 to vector<8x64xf32>
    %287 = arith.addf %286, %285 : vector<8x64xf32>
    %288 = arith.divf %286, %287 : vector<8x64xf32>
    %289 = vector.extract_strided_slice %288 {offsets = [0, 0], sizes = [8, 32], strides = [1, 1]} : vector<8x64xf32> to vector<8x32xf32>
    %290 = vector.extract_strided_slice %288 {offsets = [0, 32], sizes = [8, 32], strides = [1, 1]} : vector<8x64xf32> to vector<8x32xf32>
    %291 = arith.addf %282, %246 : vector<8x32xf32>
    %292 = arith.mulf %289, %291 : vector<8x32xf32>
    %293 = arith.addf %279, %292 : vector<8x32xf32>
    %294 = math.tanh %293 : vector<8x32xf32>
    %295 = arith.subf %271, %294 : vector<8x32xf32>
    %296 = arith.mulf %290, %295 : vector<8x32xf32>
    %297 = arith.addf %294, %296 : vector<8x32xf32>
    %298 = arith.index_cast %275 : i32 to index
    %c0_115 = arith.constant 0 : index
    %299 = vector.load %arg34[%298, %c0_115] : memref<64x32xf32, #tpu.memory_space<vmem>>, vector<8x32xf32>
    tpu.vector_store %arg34[%298, %c0_115], %297 {strides = array<i32>} : memref<64x32xf32, #tpu.memory_space<vmem>>, vector<8x32xf32>,
    %c2_i32_116 = arith.constant 2 : i32
    %c8_i32_117 = arith.constant 8 : i32
    %300 = arith.muli %c2_i32_116, %c8_i32_117 : i32
    %301 = tpu.assume_multiple %300, 8 : i32
    %302 = arith.index_cast %301 : i32 to index
    %c0_118 = arith.constant 0 : index
    %303 = vector.load %arg35[%302, %c0_118] : memref<64x64xf32, #tpu.memory_space<vmem>>, vector<8x64xf32>
    %304 = arith.index_cast %301 : i32 to index
    %c0_119 = arith.constant 0 : index
    %305 = vector.load %arg36[%304, %c0_119] : memref<64x32xf32, #tpu.memory_space<vmem>>, vector<8x32xf32>
    %306 = arith.truncf %297 : vector<8x32xf32> to vector<8x32xbf16>
    %cst_120 = arith.constant dense<0.000000e+00> : vector<8x64xf32>
    %307 = tpu.matmul %306, %242, %cst_120 {dimension_numbers = #tpu.dot_dimension_numbers<[1], [0], [0], [1], [0, 0, 1, 1], [], []>} : vector<8x32xbf16>, vector<32x64xbf16>, vector<8x64xf32> -> vector<8x64xf32>
    %cst_121 = arith.constant dense<0.000000e+00> : vector<8x32xf32>
    %308 = tpu.matmul %306, %243, %cst_121 {dimension_numbers = #tpu.dot_dimension_numbers<[1], [0], [0], [1], [0, 0, 1, 1], [], []>} : vector<8x32xbf16>, vector<32x32xbf16>, vector<8x32xf32> -> vector<8x32xf32>
    %309 = arith.addf %303, %307 : vector<8x64xf32>
    %310 = arith.negf %309 : vector<8x64xf32>
    %311 = math.exp %310 : vector<8x64xf32>
    %cst_122 = arith.constant 1.000000e+00 : f32
    %312 = vector.broadcast %cst_122 : f32 to vector<8x64xf32>
    %313 = arith.addf %312, %311 : vector<8x64xf32>
    %314 = arith.divf %312, %313 : vector<8x64xf32>
    %315 = vector.extract_strided_slice %314 {offsets = [0, 0], sizes = [8, 32], strides = [1, 1]} : vector<8x64xf32> to vector<8x32xf32>
    %316 = vector.extract_strided_slice %314 {offsets = [0, 32], sizes = [8, 32], strides = [1, 1]} : vector<8x64xf32> to vector<8x32xf32>
    %317 = arith.addf %308, %246 : vector<8x32xf32>
    %318 = arith.mulf %315, %317 : vector<8x32xf32>
    %319 = arith.addf %305, %318 : vector<8x32xf32>
    %320 = math.tanh %319 : vector<8x32xf32>
    %321 = arith.subf %297, %320 : vector<8x32xf32>
    %322 = arith.mulf %316, %321 : vector<8x32xf32>
    %323 = arith.addf %320, %322 : vector<8x32xf32>
    %324 = arith.index_cast %301 : i32 to index
    %c0_123 = arith.constant 0 : index
    %325 = vector.load %arg34[%324, %c0_123] : memref<64x32xf32, #tpu.memory_space<vmem>>, vector<8x32xf32>
    tpu.vector_store %arg34[%324, %c0_123], %323 {strides = array<i32>} : memref<64x32xf32, #tpu.memory_space<vmem>>, vector<8x32xf32>,
    %c3_i32_124 = arith.constant 3 : i32
    %c8_i32_125 = arith.constant 8 : i32
    %326 = arith.muli %c3_i32_124, %c8_i32_125 : i32
    %327 = tpu.assume_multiple %326, 8 : i32
    %328 = arith.index_cast %327 : i32 to index
    %c0_126 = arith.constant 0 : index
    %329 = vector.load %arg35[%328, %c0_126] : memref<64x64xf32, #tpu.memory_space<vmem>>, vector<8x64xf32>
    %330 = arith.index_cast %327 : i32 to index
    %c0_127 = arith.constant 0 : index
    %331 = vector.load %arg36[%330, %c0_127] : memref<64x32xf32, #tpu.memory_space<vmem>>, vector<8x32xf32>
    %332 = arith.truncf %323 : vector<8x32xf32> to vector<8x32xbf16>
    %cst_128 = arith.constant dense<0.000000e+00> : vector<8x64xf32>
    %333 = tpu.matmul %332, %242, %cst_128 {dimension_numbers = #tpu.dot_dimension_numbers<[1], [0], [0], [1], [0, 0, 1, 1], [], []>} : vector<8x32xbf16>, vector<32x64xbf16>, vector<8x64xf32> -> vector<8x64xf32>
    %cst_129 = arith.constant dense<0.000000e+00> : vector<8x32xf32>
    %334 = tpu.matmul %332, %243, %cst_129 {dimension_numbers = #tpu.dot_dimension_numbers<[1], [0], [0], [1], [0, 0, 1, 1], [], []>} : vector<8x32xbf16>, vector<32x32xbf16>, vector<8x32xf32> -> vector<8x32xf32>
    %335 = arith.addf %329, %333 : vector<8x64xf32>
    %336 = arith.negf %335 : vector<8x64xf32>
    %337 = math.exp %336 : vector<8x64xf32>
    %cst_130 = arith.constant 1.000000e+00 : f32
    %338 = vector.broadcast %cst_130 : f32 to vector<8x64xf32>
    %339 = arith.addf %338, %337 : vector<8x64xf32>
    %340 = arith.divf %338, %339 : vector<8x64xf32>
    %341 = vector.extract_strided_slice %340 {offsets = [0, 0], sizes = [8, 32], strides = [1, 1]} : vector<8x64xf32> to vector<8x32xf32>
    %342 = vector.extract_strided_slice %340 {offsets = [0, 32], sizes = [8, 32], strides = [1, 1]} : vector<8x64xf32> to vector<8x32xf32>
    %343 = arith.addf %334, %246 : vector<8x32xf32>
    %344 = arith.mulf %341, %343 : vector<8x32xf32>
    %345 = arith.addf %331, %344 : vector<8x32xf32>
    %346 = math.tanh %345 : vector<8x32xf32>
    %347 = arith.subf %323, %346 : vector<8x32xf32>
    %348 = arith.mulf %342, %347 : vector<8x32xf32>
    %349 = arith.addf %346, %348 : vector<8x32xf32>
    %350 = arith.index_cast %327 : i32 to index
    %c0_131 = arith.constant 0 : index
    %351 = vector.load %arg34[%350, %c0_131] : memref<64x32xf32, #tpu.memory_space<vmem>>, vector<8x32xf32>
    tpu.vector_store %arg34[%350, %c0_131], %349 {strides = array<i32>} : memref<64x32xf32, #tpu.memory_space<vmem>>, vector<8x32xf32>,
    %c4_i32_132 = arith.constant 4 : i32
    %c8_i32_133 = arith.constant 8 : i32
    %352 = arith.muli %c4_i32_132, %c8_i32_133 : i32
    %353 = tpu.assume_multiple %352, 8 : i32
    %354 = arith.index_cast %353 : i32 to index
    %c0_134 = arith.constant 0 : index
    %355 = vector.load %arg35[%354, %c0_134] : memref<64x64xf32, #tpu.memory_space<vmem>>, vector<8x64xf32>
    %356 = arith.index_cast %353 : i32 to index
    %c0_135 = arith.constant 0 : index
    %357 = vector.load %arg36[%356, %c0_135] : memref<64x32xf32, #tpu.memory_space<vmem>>, vector<8x32xf32>
    %358 = arith.truncf %349 : vector<8x32xf32> to vector<8x32xbf16>
    %cst_136 = arith.constant dense<0.000000e+00> : vector<8x64xf32>
    %359 = tpu.matmul %358, %242, %cst_136 {dimension_numbers = #tpu.dot_dimension_numbers<[1], [0], [0], [1], [0, 0, 1, 1], [], []>} : vector<8x32xbf16>, vector<32x64xbf16>, vector<8x64xf32> -> vector<8x64xf32>
    %cst_137 = arith.constant dense<0.000000e+00> : vector<8x32xf32>
    %360 = tpu.matmul %358, %243, %cst_137 {dimension_numbers = #tpu.dot_dimension_numbers<[1], [0], [0], [1], [0, 0, 1, 1], [], []>} : vector<8x32xbf16>, vector<32x32xbf16>, vector<8x32xf32> -> vector<8x32xf32>
    %361 = arith.addf %355, %359 : vector<8x64xf32>
    %362 = arith.negf %361 : vector<8x64xf32>
    %363 = math.exp %362 : vector<8x64xf32>
    %cst_138 = arith.constant 1.000000e+00 : f32
    %364 = vector.broadcast %cst_138 : f32 to vector<8x64xf32>
    %365 = arith.addf %364, %363 : vector<8x64xf32>
    %366 = arith.divf %364, %365 : vector<8x64xf32>
    %367 = vector.extract_strided_slice %366 {offsets = [0, 0], sizes = [8, 32], strides = [1, 1]} : vector<8x64xf32> to vector<8x32xf32>
    %368 = vector.extract_strided_slice %366 {offsets = [0, 32], sizes = [8, 32], strides = [1, 1]} : vector<8x64xf32> to vector<8x32xf32>
    %369 = arith.addf %360, %246 : vector<8x32xf32>
    %370 = arith.mulf %367, %369 : vector<8x32xf32>
    %371 = arith.addf %357, %370 : vector<8x32xf32>
    %372 = math.tanh %371 : vector<8x32xf32>
    %373 = arith.subf %349, %372 : vector<8x32xf32>
    %374 = arith.mulf %368, %373 : vector<8x32xf32>
    %375 = arith.addf %372, %374 : vector<8x32xf32>
    %376 = arith.index_cast %353 : i32 to index
    %c0_139 = arith.constant 0 : index
    %377 = vector.load %arg34[%376, %c0_139] : memref<64x32xf32, #tpu.memory_space<vmem>>, vector<8x32xf32>
    tpu.vector_store %arg34[%376, %c0_139], %375 {strides = array<i32>} : memref<64x32xf32, #tpu.memory_space<vmem>>, vector<8x32xf32>,
    %c5_i32_140 = arith.constant 5 : i32
    %c8_i32_141 = arith.constant 8 : i32
    %378 = arith.muli %c5_i32_140, %c8_i32_141 : i32
    %379 = tpu.assume_multiple %378, 8 : i32
    %380 = arith.index_cast %379 : i32 to index
    %c0_142 = arith.constant 0 : index
    %381 = vector.load %arg35[%380, %c0_142] : memref<64x64xf32, #tpu.memory_space<vmem>>, vector<8x64xf32>
    %382 = arith.index_cast %379 : i32 to index
    %c0_143 = arith.constant 0 : index
    %383 = vector.load %arg36[%382, %c0_143] : memref<64x32xf32, #tpu.memory_space<vmem>>, vector<8x32xf32>
    %384 = arith.truncf %375 : vector<8x32xf32> to vector<8x32xbf16>
    %cst_144 = arith.constant dense<0.000000e+00> : vector<8x64xf32>
    %385 = tpu.matmul %384, %242, %cst_144 {dimension_numbers = #tpu.dot_dimension_numbers<[1], [0], [0], [1], [0, 0, 1, 1], [], []>} : vector<8x32xbf16>, vector<32x64xbf16>, vector<8x64xf32> -> vector<8x64xf32>
    %cst_145 = arith.constant dense<0.000000e+00> : vector<8x32xf32>
    %386 = tpu.matmul %384, %243, %cst_145 {dimension_numbers = #tpu.dot_dimension_numbers<[1], [0], [0], [1], [0, 0, 1, 1], [], []>} : vector<8x32xbf16>, vector<32x32xbf16>, vector<8x32xf32> -> vector<8x32xf32>
    %387 = arith.addf %381, %385 : vector<8x64xf32>
    %388 = arith.negf %387 : vector<8x64xf32>
    %389 = math.exp %388 : vector<8x64xf32>
    %cst_146 = arith.constant 1.000000e+00 : f32
    %390 = vector.broadcast %cst_146 : f32 to vector<8x64xf32>
    %391 = arith.addf %390, %389 : vector<8x64xf32>
    %392 = arith.divf %390, %391 : vector<8x64xf32>
    %393 = vector.extract_strided_slice %392 {offsets = [0, 0], sizes = [8, 32], strides = [1, 1]} : vector<8x64xf32> to vector<8x32xf32>
    %394 = vector.extract_strided_slice %392 {offsets = [0, 32], sizes = [8, 32], strides = [1, 1]} : vector<8x64xf32> to vector<8x32xf32>
    %395 = arith.addf %386, %246 : vector<8x32xf32>
    %396 = arith.mulf %393, %395 : vector<8x32xf32>
    %397 = arith.addf %383, %396 : vector<8x32xf32>
    %398 = math.tanh %397 : vector<8x32xf32>
    %399 = arith.subf %375, %398 : vector<8x32xf32>
    %400 = arith.mulf %394, %399 : vector<8x32xf32>
    %401 = arith.addf %398, %400 : vector<8x32xf32>
    %402 = arith.index_cast %379 : i32 to index
    %c0_147 = arith.constant 0 : index
    %403 = vector.load %arg34[%402, %c0_147] : memref<64x32xf32, #tpu.memory_space<vmem>>, vector<8x32xf32>
    tpu.vector_store %arg34[%402, %c0_147], %401 {strides = array<i32>} : memref<64x32xf32, #tpu.memory_space<vmem>>, vector<8x32xf32>,
    %c6_i32_148 = arith.constant 6 : i32
    %c8_i32_149 = arith.constant 8 : i32
    %404 = arith.muli %c6_i32_148, %c8_i32_149 : i32
    %405 = tpu.assume_multiple %404, 8 : i32
    %406 = arith.index_cast %405 : i32 to index
    %c0_150 = arith.constant 0 : index
    %407 = vector.load %arg35[%406, %c0_150] : memref<64x64xf32, #tpu.memory_space<vmem>>, vector<8x64xf32>
    %408 = arith.index_cast %405 : i32 to index
    %c0_151 = arith.constant 0 : index
    %409 = vector.load %arg36[%408, %c0_151] : memref<64x32xf32, #tpu.memory_space<vmem>>, vector<8x32xf32>
    %410 = arith.truncf %401 : vector<8x32xf32> to vector<8x32xbf16>
    %cst_152 = arith.constant dense<0.000000e+00> : vector<8x64xf32>
    %411 = tpu.matmul %410, %242, %cst_152 {dimension_numbers = #tpu.dot_dimension_numbers<[1], [0], [0], [1], [0, 0, 1, 1], [], []>} : vector<8x32xbf16>, vector<32x64xbf16>, vector<8x64xf32> -> vector<8x64xf32>
    %cst_153 = arith.constant dense<0.000000e+00> : vector<8x32xf32>
    %412 = tpu.matmul %410, %243, %cst_153 {dimension_numbers = #tpu.dot_dimension_numbers<[1], [0], [0], [1], [0, 0, 1, 1], [], []>} : vector<8x32xbf16>, vector<32x32xbf16>, vector<8x32xf32> -> vector<8x32xf32>
    %413 = arith.addf %407, %411 : vector<8x64xf32>
    %414 = arith.negf %413 : vector<8x64xf32>
    %415 = math.exp %414 : vector<8x64xf32>
    %cst_154 = arith.constant 1.000000e+00 : f32
    %416 = vector.broadcast %cst_154 : f32 to vector<8x64xf32>
    %417 = arith.addf %416, %415 : vector<8x64xf32>
    %418 = arith.divf %416, %417 : vector<8x64xf32>
    %419 = vector.extract_strided_slice %418 {offsets = [0, 0], sizes = [8, 32], strides = [1, 1]} : vector<8x64xf32> to vector<8x32xf32>
    %420 = vector.extract_strided_slice %418 {offsets = [0, 32], sizes = [8, 32], strides = [1, 1]} : vector<8x64xf32> to vector<8x32xf32>
    %421 = arith.addf %412, %246 : vector<8x32xf32>
    %422 = arith.mulf %419, %421 : vector<8x32xf32>
    %423 = arith.addf %409, %422 : vector<8x32xf32>
    %424 = math.tanh %423 : vector<8x32xf32>
    %425 = arith.subf %401, %424 : vector<8x32xf32>
    %426 = arith.mulf %420, %425 : vector<8x32xf32>
    %427 = arith.addf %424, %426 : vector<8x32xf32>
    %428 = arith.index_cast %405 : i32 to index
    %c0_155 = arith.constant 0 : index
    %429 = vector.load %arg34[%428, %c0_155] : memref<64x32xf32, #tpu.memory_space<vmem>>, vector<8x32xf32>
    tpu.vector_store %arg34[%428, %c0_155], %427 {strides = array<i32>} : memref<64x32xf32, #tpu.memory_space<vmem>>, vector<8x32xf32>,
    %c7_i32_156 = arith.constant 7 : i32
    %c8_i32_157 = arith.constant 8 : i32
    %430 = arith.muli %c7_i32_156, %c8_i32_157 : i32
    %431 = tpu.assume_multiple %430, 8 : i32
    %432 = arith.index_cast %431 : i32 to index
    %c0_158 = arith.constant 0 : index
    %433 = vector.load %arg35[%432, %c0_158] : memref<64x64xf32, #tpu.memory_space<vmem>>, vector<8x64xf32>
    %434 = arith.index_cast %431 : i32 to index
    %c0_159 = arith.constant 0 : index
    %435 = vector.load %arg36[%434, %c0_159] : memref<64x32xf32, #tpu.memory_space<vmem>>, vector<8x32xf32>
    %436 = arith.truncf %427 : vector<8x32xf32> to vector<8x32xbf16>
    %cst_160 = arith.constant dense<0.000000e+00> : vector<8x64xf32>
    %437 = tpu.matmul %436, %242, %cst_160 {dimension_numbers = #tpu.dot_dimension_numbers<[1], [0], [0], [1], [0, 0, 1, 1], [], []>} : vector<8x32xbf16>, vector<32x64xbf16>, vector<8x64xf32> -> vector<8x64xf32>
    %cst_161 = arith.constant dense<0.000000e+00> : vector<8x32xf32>
    %438 = tpu.matmul %436, %243, %cst_161 {dimension_numbers = #tpu.dot_dimension_numbers<[1], [0], [0], [1], [0, 0, 1, 1], [], []>} : vector<8x32xbf16>, vector<32x32xbf16>, vector<8x32xf32> -> vector<8x32xf32>
    %439 = arith.addf %433, %437 : vector<8x64xf32>
    %440 = arith.negf %439 : vector<8x64xf32>
    %441 = math.exp %440 : vector<8x64xf32>
    %cst_162 = arith.constant 1.000000e+00 : f32
    %442 = vector.broadcast %cst_162 : f32 to vector<8x64xf32>
    %443 = arith.addf %442, %441 : vector<8x64xf32>
    %444 = arith.divf %442, %443 : vector<8x64xf32>
    %445 = vector.extract_strided_slice %444 {offsets = [0, 0], sizes = [8, 32], strides = [1, 1]} : vector<8x64xf32> to vector<8x32xf32>
    %446 = vector.extract_strided_slice %444 {offsets = [0, 32], sizes = [8, 32], strides = [1, 1]} : vector<8x64xf32> to vector<8x32xf32>
    %447 = arith.addf %438, %246 : vector<8x32xf32>
    %448 = arith.mulf %445, %447 : vector<8x32xf32>
    %449 = arith.addf %435, %448 : vector<8x32xf32>
    %450 = math.tanh %449 : vector<8x32xf32>
    %451 = arith.subf %427, %450 : vector<8x32xf32>
    %452 = arith.mulf %446, %451 : vector<8x32xf32>
    %453 = arith.addf %450, %452 : vector<8x32xf32>
    %454 = arith.index_cast %431 : i32 to index
    %c0_163 = arith.constant 0 : index
    %455 = vector.load %arg34[%454, %c0_163] : memref<64x32xf32, #tpu.memory_space<vmem>>, vector<8x32xf32>
    tpu.vector_store %arg34[%454, %c0_163], %453 {strides = array<i32>} : memref<64x32xf32, #tpu.memory_space<vmem>>, vector<8x32xf32>,
    %c8_i32_164 = arith.constant 8 : i32
    %456 = arith.truncf %453 : vector<8x32xf32> to vector<8x32xbf16>
    %c0_165 = arith.constant 0 : index
    %c0_166 = arith.constant 0 : index
    %457 = vector.load %arg15[%c0_165, %c0_166] : memref<32x8xbf16, #tpu.memory_space<vmem>>, vector<32x8xbf16>
    %cst_167 = arith.constant dense<0.000000e+00> : vector<8x8xf32>
    %458 = tpu.matmul %456, %457, %cst_167 {dimension_numbers = #tpu.dot_dimension_numbers<[1], [0], [0], [1], [0, 0, 1, 1], [], []>} : vector<8x32xbf16>, vector<32x8xbf16>, vector<8x8xf32> -> vector<8x8xf32>
    %c0_168 = arith.constant 0 : index
    %c0_169 = arith.constant 0 : index
    %459 = vector.load %arg16[%c0_168, %c0_169] : memref<1x8xf32, #tpu.memory_space<vmem>>, vector<1x8xf32>
    %460 = vector.broadcast %459 : vector<1x8xf32> to vector<8x8xf32>
    %461 = arith.addf %458, %460 : vector<8x8xf32>
    %462 = arith.truncf %461 : vector<8x8xf32> to vector<8x8xbf16>
    %c0_170 = arith.constant 0 : index
    %c0_171 = arith.constant 0 : index
    %463 = vector.load %arg17[%c0_170, %c0_171] : memref<8x64xbf16, #tpu.memory_space<vmem>>, vector<8x64xbf16>
    %cst_172 = arith.constant dense<0.000000e+00> : vector<8x64xf32>
    %464 = tpu.matmul %462, %463, %cst_172 {dimension_numbers = #tpu.dot_dimension_numbers<[1], [0], [0], [1], [0, 0, 1, 1], [], []>} : vector<8x8xbf16>, vector<8x64xbf16>, vector<8x64xf32> -> vector<8x64xf32>
    %c0_173 = arith.constant 0 : index
    %c0_174 = arith.constant 0 : index
    %465 = vector.load %arg21[%c0_173, %c0_174] : memref<1x64xf32, #tpu.memory_space<vmem>>, vector<1x64xf32>
    %466 = vector.broadcast %465 : vector<1x64xf32> to vector<8x64xf32>
    %467 = arith.addf %464, %466 : vector<8x64xf32>
    %c0_175 = arith.constant 0 : index
    %c0_176 = arith.constant 0 : index
    %468 = vector.load %arg18[%c0_175, %c0_176] : memref<8x32xbf16, #tpu.memory_space<vmem>>, vector<8x32xbf16>
    %cst_177 = arith.constant dense<0.000000e+00> : vector<8x32xf32>
    %469 = tpu.matmul %462, %468, %cst_177 {dimension_numbers = #tpu.dot_dimension_numbers<[1], [0], [0], [1], [0, 0, 1, 1], [], []>} : vector<8x8xbf16>, vector<8x32xbf16>, vector<8x32xf32> -> vector<8x32xf32>
    %c0_178 = arith.constant 0 : index
    %c0_179 = arith.constant 0 : index
    %470 = vector.load %arg22[%c0_178, %c0_179] : memref<1x32xf32, #tpu.memory_space<vmem>>, vector<1x32xf32>
    %471 = vector.broadcast %470 : vector<1x32xf32> to vector<8x32xf32>
    %472 = arith.addf %469, %471 : vector<8x32xf32>
    %c0_180 = arith.constant 0 : index
    %c0_181 = arith.constant 0 : index
    %473 = vector.load %arg19[%c0_180, %c0_181] : memref<32x64xbf16, #tpu.memory_space<vmem>>, vector<32x64xbf16>
    %c0_182 = arith.constant 0 : index
    %c0_183 = arith.constant 0 : index
    %474 = vector.load %arg20[%c0_182, %c0_183] : memref<32x32xbf16, #tpu.memory_space<vmem>>, vector<32x32xbf16>
    %c0_184 = arith.constant 0 : index
    %c0_185 = arith.constant 0 : index
    %475 = vector.load %arg23[%c0_184, %c0_185] : memref<1x32xf32, #tpu.memory_space<vmem>>, vector<1x32xf32>
    %476 = vector.shape_cast %475 : vector<1x32xf32> to vector<1x32xf32>
    %477 = vector.broadcast %476 : vector<1x32xf32> to vector<8x32xf32>
    %cst_186 = arith.constant 0.000000e+00 : f32
    %478 = vector.broadcast %cst_186 : f32 to vector<8x32xf32>
    %c0_i32_187 = arith.constant 0 : i32
    %c8_i32_188 = arith.constant 8 : i32
    %479 = arith.muli %c0_i32_187, %c8_i32_188 : i32
    %480 = tpu.assume_multiple %479, 8 : i32
    %481 = arith.truncf %478 : vector<8x32xf32> to vector<8x32xbf16>
    %cst_189 = arith.constant dense<0.000000e+00> : vector<8x64xf32>
    %482 = tpu.matmul %481, %473, %cst_189 {dimension_numbers = #tpu.dot_dimension_numbers<[1], [0], [0], [1], [0, 0, 1, 1], [], []>} : vector<8x32xbf16>, vector<32x64xbf16>, vector<8x64xf32> -> vector<8x64xf32>
    %cst_190 = arith.constant dense<0.000000e+00> : vector<8x32xf32>
    %483 = tpu.matmul %481, %474, %cst_190 {dimension_numbers = #tpu.dot_dimension_numbers<[1], [0], [0], [1], [0, 0, 1, 1], [], []>} : vector<8x32xbf16>, vector<32x32xbf16>, vector<8x32xf32> -> vector<8x32xf32>
    %484 = arith.addf %467, %482 : vector<8x64xf32>
    %485 = arith.negf %484 : vector<8x64xf32>
    %486 = math.exp %485 : vector<8x64xf32>
    %cst_191 = arith.constant 1.000000e+00 : f32
    %487 = vector.broadcast %cst_191 : f32 to vector<8x64xf32>
    %488 = arith.addf %487, %486 : vector<8x64xf32>
    %489 = arith.divf %487, %488 : vector<8x64xf32>
    %490 = vector.extract_strided_slice %489 {offsets = [0, 0], sizes = [8, 32], strides = [1, 1]} : vector<8x64xf32> to vector<8x32xf32>
    %491 = vector.extract_strided_slice %489 {offsets = [0, 32], sizes = [8, 32], strides = [1, 1]} : vector<8x64xf32> to vector<8x32xf32>
    %492 = arith.addf %483, %477 : vector<8x32xf32>
    %493 = arith.mulf %490, %492 : vector<8x32xf32>
    %494 = arith.addf %472, %493 : vector<8x32xf32>
    %495 = math.tanh %494 : vector<8x32xf32>
    %496 = arith.subf %478, %495 : vector<8x32xf32>
    %497 = arith.mulf %491, %496 : vector<8x32xf32>
    %498 = arith.addf %495, %497 : vector<8x32xf32>
    %499 = arith.index_cast %480 : i32 to index
    %c0_192 = arith.constant 0 : index
    %500 = vector.load %arg34[%499, %c0_192] : memref<64x32xf32, #tpu.memory_space<vmem>>, vector<8x32xf32>
    tpu.vector_store %arg34[%499, %c0_192], %498 {strides = array<i32>} : memref<64x32xf32, #tpu.memory_space<vmem>>, vector<8x32xf32>,
    %c1_i32_193 = arith.constant 1 : i32
    %c8_i32_194 = arith.constant 8 : i32
    %501 = arith.muli %c1_i32_193, %c8_i32_194 : i32
    %502 = tpu.assume_multiple %501, 8 : i32
    %503 = arith.truncf %498 : vector<8x32xf32> to vector<8x32xbf16>
    %cst_195 = arith.constant dense<0.000000e+00> : vector<8x64xf32>
    %504 = tpu.matmul %503, %473, %cst_195 {dimension_numbers = #tpu.dot_dimension_numbers<[1], [0], [0], [1], [0, 0, 1, 1], [], []>} : vector<8x32xbf16>, vector<32x64xbf16>, vector<8x64xf32> -> vector<8x64xf32>
    %cst_196 = arith.constant dense<0.000000e+00> : vector<8x32xf32>
    %505 = tpu.matmul %503, %474, %cst_196 {dimension_numbers = #tpu.dot_dimension_numbers<[1], [0], [0], [1], [0, 0, 1, 1], [], []>} : vector<8x32xbf16>, vector<32x32xbf16>, vector<8x32xf32> -> vector<8x32xf32>
    %506 = arith.addf %467, %504 : vector<8x64xf32>
    %507 = arith.negf %506 : vector<8x64xf32>
    %508 = math.exp %507 : vector<8x64xf32>
    %cst_197 = arith.constant 1.000000e+00 : f32
    %509 = vector.broadcast %cst_197 : f32 to vector<8x64xf32>
    %510 = arith.addf %509, %508 : vector<8x64xf32>
    %511 = arith.divf %509, %510 : vector<8x64xf32>
    %512 = vector.extract_strided_slice %511 {offsets = [0, 0], sizes = [8, 32], strides = [1, 1]} : vector<8x64xf32> to vector<8x32xf32>
    %513 = vector.extract_strided_slice %511 {offsets = [0, 32], sizes = [8, 32], strides = [1, 1]} : vector<8x64xf32> to vector<8x32xf32>
    %514 = arith.addf %505, %477 : vector<8x32xf32>
    %515 = arith.mulf %512, %514 : vector<8x32xf32>
    %516 = arith.addf %472, %515 : vector<8x32xf32>
    %517 = math.tanh %516 : vector<8x32xf32>
    %518 = arith.subf %498, %517 : vector<8x32xf32>
    %519 = arith.mulf %513, %518 : vector<8x32xf32>
    %520 = arith.addf %517, %519 : vector<8x32xf32>
    %521 = arith.index_cast %502 : i32 to index
    %c0_198 = arith.constant 0 : index
    %522 = vector.load %arg34[%521, %c0_198] : memref<64x32xf32, #tpu.memory_space<vmem>>, vector<8x32xf32>
    tpu.vector_store %arg34[%521, %c0_198], %520 {strides = array<i32>} : memref<64x32xf32, #tpu.memory_space<vmem>>, vector<8x32xf32>,
    %c2_i32_199 = arith.constant 2 : i32
    %c8_i32_200 = arith.constant 8 : i32
    %523 = arith.muli %c2_i32_199, %c8_i32_200 : i32
    %524 = tpu.assume_multiple %523, 8 : i32
    %525 = arith.truncf %520 : vector<8x32xf32> to vector<8x32xbf16>
    %cst_201 = arith.constant dense<0.000000e+00> : vector<8x64xf32>
    %526 = tpu.matmul %525, %473, %cst_201 {dimension_numbers = #tpu.dot_dimension_numbers<[1], [0], [0], [1], [0, 0, 1, 1], [], []>} : vector<8x32xbf16>, vector<32x64xbf16>, vector<8x64xf32> -> vector<8x64xf32>
    %cst_202 = arith.constant dense<0.000000e+00> : vector<8x32xf32>
    %527 = tpu.matmul %525, %474, %cst_202 {dimension_numbers = #tpu.dot_dimension_numbers<[1], [0], [0], [1], [0, 0, 1, 1], [], []>} : vector<8x32xbf16>, vector<32x32xbf16>, vector<8x32xf32> -> vector<8x32xf32>
    %528 = arith.addf %467, %526 : vector<8x64xf32>
    %529 = arith.negf %528 : vector<8x64xf32>
    %530 = math.exp %529 : vector<8x64xf32>
    %cst_203 = arith.constant 1.000000e+00 : f32
    %531 = vector.broadcast %cst_203 : f32 to vector<8x64xf32>
    %532 = arith.addf %531, %530 : vector<8x64xf32>
    %533 = arith.divf %531, %532 : vector<8x64xf32>
    %534 = vector.extract_strided_slice %533 {offsets = [0, 0], sizes = [8, 32], strides = [1, 1]} : vector<8x64xf32> to vector<8x32xf32>
    %535 = vector.extract_strided_slice %533 {offsets = [0, 32], sizes = [8, 32], strides = [1, 1]} : vector<8x64xf32> to vector<8x32xf32>
    %536 = arith.addf %527, %477 : vector<8x32xf32>
    %537 = arith.mulf %534, %536 : vector<8x32xf32>
    %538 = arith.addf %472, %537 : vector<8x32xf32>
    %539 = math.tanh %538 : vector<8x32xf32>
    %540 = arith.subf %520, %539 : vector<8x32xf32>
    %541 = arith.mulf %535, %540 : vector<8x32xf32>
    %542 = arith.addf %539, %541 : vector<8x32xf32>
    %543 = arith.index_cast %524 : i32 to index
    %c0_204 = arith.constant 0 : index
    %544 = vector.load %arg34[%543, %c0_204] : memref<64x32xf32, #tpu.memory_space<vmem>>, vector<8x32xf32>
    tpu.vector_store %arg34[%543, %c0_204], %542 {strides = array<i32>} : memref<64x32xf32, #tpu.memory_space<vmem>>, vector<8x32xf32>,
    %c3_i32_205 = arith.constant 3 : i32
    %c8_i32_206 = arith.constant 8 : i32
    %545 = arith.muli %c3_i32_205, %c8_i32_206 : i32
    %546 = tpu.assume_multiple %545, 8 : i32
    %547 = arith.truncf %542 : vector<8x32xf32> to vector<8x32xbf16>
    %cst_207 = arith.constant dense<0.000000e+00> : vector<8x64xf32>
    %548 = tpu.matmul %547, %473, %cst_207 {dimension_numbers = #tpu.dot_dimension_numbers<[1], [0], [0], [1], [0, 0, 1, 1], [], []>} : vector<8x32xbf16>, vector<32x64xbf16>, vector<8x64xf32> -> vector<8x64xf32>
    %cst_208 = arith.constant dense<0.000000e+00> : vector<8x32xf32>
    %549 = tpu.matmul %547, %474, %cst_208 {dimension_numbers = #tpu.dot_dimension_numbers<[1], [0], [0], [1], [0, 0, 1, 1], [], []>} : vector<8x32xbf16>, vector<32x32xbf16>, vector<8x32xf32> -> vector<8x32xf32>
    %550 = arith.addf %467, %548 : vector<8x64xf32>
    %551 = arith.negf %550 : vector<8x64xf32>
    %552 = math.exp %551 : vector<8x64xf32>
    %cst_209 = arith.constant 1.000000e+00 : f32
    %553 = vector.broadcast %cst_209 : f32 to vector<8x64xf32>
    %554 = arith.addf %553, %552 : vector<8x64xf32>
    %555 = arith.divf %553, %554 : vector<8x64xf32>
    %556 = vector.extract_strided_slice %555 {offsets = [0, 0], sizes = [8, 32], strides = [1, 1]} : vector<8x64xf32> to vector<8x32xf32>
    %557 = vector.extract_strided_slice %555 {offsets = [0, 32], sizes = [8, 32], strides = [1, 1]} : vector<8x64xf32> to vector<8x32xf32>
    %558 = arith.addf %549, %477 : vector<8x32xf32>
    %559 = arith.mulf %556, %558 : vector<8x32xf32>
    %560 = arith.addf %472, %559 : vector<8x32xf32>
    %561 = math.tanh %560 : vector<8x32xf32>
    %562 = arith.subf %542, %561 : vector<8x32xf32>
    %563 = arith.mulf %557, %562 : vector<8x32xf32>
    %564 = arith.addf %561, %563 : vector<8x32xf32>
    %565 = arith.index_cast %546 : i32 to index
    %c0_210 = arith.constant 0 : index
    %566 = vector.load %arg34[%565, %c0_210] : memref<64x32xf32, #tpu.memory_space<vmem>>, vector<8x32xf32>
    tpu.vector_store %arg34[%565, %c0_210], %564 {strides = array<i32>} : memref<64x32xf32, #tpu.memory_space<vmem>>, vector<8x32xf32>,
    %c4_i32_211 = arith.constant 4 : i32
    %c8_i32_212 = arith.constant 8 : i32
    %567 = arith.muli %c4_i32_211, %c8_i32_212 : i32
    %568 = tpu.assume_multiple %567, 8 : i32
    %569 = arith.truncf %564 : vector<8x32xf32> to vector<8x32xbf16>
    %cst_213 = arith.constant dense<0.000000e+00> : vector<8x64xf32>
    %570 = tpu.matmul %569, %473, %cst_213 {dimension_numbers = #tpu.dot_dimension_numbers<[1], [0], [0], [1], [0, 0, 1, 1], [], []>} : vector<8x32xbf16>, vector<32x64xbf16>, vector<8x64xf32> -> vector<8x64xf32>
    %cst_214 = arith.constant dense<0.000000e+00> : vector<8x32xf32>
    %571 = tpu.matmul %569, %474, %cst_214 {dimension_numbers = #tpu.dot_dimension_numbers<[1], [0], [0], [1], [0, 0, 1, 1], [], []>} : vector<8x32xbf16>, vector<32x32xbf16>, vector<8x32xf32> -> vector<8x32xf32>
    %572 = arith.addf %467, %570 : vector<8x64xf32>
    %573 = arith.negf %572 : vector<8x64xf32>
    %574 = math.exp %573 : vector<8x64xf32>
    %cst_215 = arith.constant 1.000000e+00 : f32
    %575 = vector.broadcast %cst_215 : f32 to vector<8x64xf32>
    %576 = arith.addf %575, %574 : vector<8x64xf32>
    %577 = arith.divf %575, %576 : vector<8x64xf32>
    %578 = vector.extract_strided_slice %577 {offsets = [0, 0], sizes = [8, 32], strides = [1, 1]} : vector<8x64xf32> to vector<8x32xf32>
    %579 = vector.extract_strided_slice %577 {offsets = [0, 32], sizes = [8, 32], strides = [1, 1]} : vector<8x64xf32> to vector<8x32xf32>
    %580 = arith.addf %571, %477 : vector<8x32xf32>
    %581 = arith.mulf %578, %580 : vector<8x32xf32>
    %582 = arith.addf %472, %581 : vector<8x32xf32>
    %583 = math.tanh %582 : vector<8x32xf32>
    %584 = arith.subf %564, %583 : vector<8x32xf32>
    %585 = arith.mulf %579, %584 : vector<8x32xf32>
    %586 = arith.addf %583, %585 : vector<8x32xf32>
    %587 = arith.index_cast %568 : i32 to index
    %c0_216 = arith.constant 0 : index
    %588 = vector.load %arg34[%587, %c0_216] : memref<64x32xf32, #tpu.memory_space<vmem>>, vector<8x32xf32>
    tpu.vector_store %arg34[%587, %c0_216], %586 {strides = array<i32>} : memref<64x32xf32, #tpu.memory_space<vmem>>, vector<8x32xf32>,
    %c5_i32_217 = arith.constant 5 : i32
    %c8_i32_218 = arith.constant 8 : i32
    %589 = arith.muli %c5_i32_217, %c8_i32_218 : i32
    %590 = tpu.assume_multiple %589, 8 : i32
    %591 = arith.truncf %586 : vector<8x32xf32> to vector<8x32xbf16>
    %cst_219 = arith.constant dense<0.000000e+00> : vector<8x64xf32>
    %592 = tpu.matmul %591, %473, %cst_219 {dimension_numbers = #tpu.dot_dimension_numbers<[1], [0], [0], [1], [0, 0, 1, 1], [], []>} : vector<8x32xbf16>, vector<32x64xbf16>, vector<8x64xf32> -> vector<8x64xf32>
    %cst_220 = arith.constant dense<0.000000e+00> : vector<8x32xf32>
    %593 = tpu.matmul %591, %474, %cst_220 {dimension_numbers = #tpu.dot_dimension_numbers<[1], [0], [0], [1], [0, 0, 1, 1], [], []>} : vector<8x32xbf16>, vector<32x32xbf16>, vector<8x32xf32> -> vector<8x32xf32>
    %594 = arith.addf %467, %592 : vector<8x64xf32>
    %595 = arith.negf %594 : vector<8x64xf32>
    %596 = math.exp %595 : vector<8x64xf32>
    %cst_221 = arith.constant 1.000000e+00 : f32
    %597 = vector.broadcast %cst_221 : f32 to vector<8x64xf32>
    %598 = arith.addf %597, %596 : vector<8x64xf32>
    %599 = arith.divf %597, %598 : vector<8x64xf32>
    %600 = vector.extract_strided_slice %599 {offsets = [0, 0], sizes = [8, 32], strides = [1, 1]} : vector<8x64xf32> to vector<8x32xf32>
    %601 = vector.extract_strided_slice %599 {offsets = [0, 32], sizes = [8, 32], strides = [1, 1]} : vector<8x64xf32> to vector<8x32xf32>
    %602 = arith.addf %593, %477 : vector<8x32xf32>
    %603 = arith.mulf %600, %602 : vector<8x32xf32>
    %604 = arith.addf %472, %603 : vector<8x32xf32>
    %605 = math.tanh %604 : vector<8x32xf32>
    %606 = arith.subf %586, %605 : vector<8x32xf32>
    %607 = arith.mulf %601, %606 : vector<8x32xf32>
    %608 = arith.addf %605, %607 : vector<8x32xf32>
    %609 = arith.index_cast %590 : i32 to index
    %c0_222 = arith.constant 0 : index
    %610 = vector.load %arg34[%609, %c0_222] : memref<64x32xf32, #tpu.memory_space<vmem>>, vector<8x32xf32>
    tpu.vector_store %arg34[%609, %c0_222], %608 {strides = array<i32>} : memref<64x32xf32, #tpu.memory_space<vmem>>, vector<8x32xf32>,
    %c6_i32_223 = arith.constant 6 : i32
    %c8_i32_224 = arith.constant 8 : i32
    %611 = arith.muli %c6_i32_223, %c8_i32_224 : i32
    %612 = tpu.assume_multiple %611, 8 : i32
    %613 = arith.truncf %608 : vector<8x32xf32> to vector<8x32xbf16>
    %cst_225 = arith.constant dense<0.000000e+00> : vector<8x64xf32>
    %614 = tpu.matmul %613, %473, %cst_225 {dimension_numbers = #tpu.dot_dimension_numbers<[1], [0], [0], [1], [0, 0, 1, 1], [], []>} : vector<8x32xbf16>, vector<32x64xbf16>, vector<8x64xf32> -> vector<8x64xf32>
    %cst_226 = arith.constant dense<0.000000e+00> : vector<8x32xf32>
    %615 = tpu.matmul %613, %474, %cst_226 {dimension_numbers = #tpu.dot_dimension_numbers<[1], [0], [0], [1], [0, 0, 1, 1], [], []>} : vector<8x32xbf16>, vector<32x32xbf16>, vector<8x32xf32> -> vector<8x32xf32>
    %616 = arith.addf %467, %614 : vector<8x64xf32>
    %617 = arith.negf %616 : vector<8x64xf32>
    %618 = math.exp %617 : vector<8x64xf32>
    %cst_227 = arith.constant 1.000000e+00 : f32
    %619 = vector.broadcast %cst_227 : f32 to vector<8x64xf32>
    %620 = arith.addf %619, %618 : vector<8x64xf32>
    %621 = arith.divf %619, %620 : vector<8x64xf32>
    %622 = vector.extract_strided_slice %621 {offsets = [0, 0], sizes = [8, 32], strides = [1, 1]} : vector<8x64xf32> to vector<8x32xf32>
    %623 = vector.extract_strided_slice %621 {offsets = [0, 32], sizes = [8, 32], strides = [1, 1]} : vector<8x64xf32> to vector<8x32xf32>
    %624 = arith.addf %615, %477 : vector<8x32xf32>
    %625 = arith.mulf %622, %624 : vector<8x32xf32>
    %626 = arith.addf %472, %625 : vector<8x32xf32>
    %627 = math.tanh %626 : vector<8x32xf32>
    %628 = arith.subf %608, %627 : vector<8x32xf32>
    %629 = arith.mulf %623, %628 : vector<8x32xf32>
    %630 = arith.addf %627, %629 : vector<8x32xf32>
    %631 = arith.index_cast %612 : i32 to index
    %c0_228 = arith.constant 0 : index
    %632 = vector.load %arg34[%631, %c0_228] : memref<64x32xf32, #tpu.memory_space<vmem>>, vector<8x32xf32>
    tpu.vector_store %arg34[%631, %c0_228], %630 {strides = array<i32>} : memref<64x32xf32, #tpu.memory_space<vmem>>, vector<8x32xf32>,
    %c7_i32_229 = arith.constant 7 : i32
    %c8_i32_230 = arith.constant 8 : i32
    %633 = arith.muli %c7_i32_229, %c8_i32_230 : i32
    %634 = tpu.assume_multiple %633, 8 : i32
    %635 = arith.truncf %630 : vector<8x32xf32> to vector<8x32xbf16>
    %cst_231 = arith.constant dense<0.000000e+00> : vector<8x64xf32>
    %636 = tpu.matmul %635, %473, %cst_231 {dimension_numbers = #tpu.dot_dimension_numbers<[1], [0], [0], [1], [0, 0, 1, 1], [], []>} : vector<8x32xbf16>, vector<32x64xbf16>, vector<8x64xf32> -> vector<8x64xf32>
    %cst_232 = arith.constant dense<0.000000e+00> : vector<8x32xf32>
    %637 = tpu.matmul %635, %474, %cst_232 {dimension_numbers = #tpu.dot_dimension_numbers<[1], [0], [0], [1], [0, 0, 1, 1], [], []>} : vector<8x32xbf16>, vector<32x32xbf16>, vector<8x32xf32> -> vector<8x32xf32>
    %638 = arith.addf %467, %636 : vector<8x64xf32>
    %639 = arith.negf %638 : vector<8x64xf32>
    %640 = math.exp %639 : vector<8x64xf32>
    %cst_233 = arith.constant 1.000000e+00 : f32
    %641 = vector.broadcast %cst_233 : f32 to vector<8x64xf32>
    %642 = arith.addf %641, %640 : vector<8x64xf32>
    %643 = arith.divf %641, %642 : vector<8x64xf32>
    %644 = vector.extract_strided_slice %643 {offsets = [0, 0], sizes = [8, 32], strides = [1, 1]} : vector<8x64xf32> to vector<8x32xf32>
    %645 = vector.extract_strided_slice %643 {offsets = [0, 32], sizes = [8, 32], strides = [1, 1]} : vector<8x64xf32> to vector<8x32xf32>
    %646 = arith.addf %637, %477 : vector<8x32xf32>
    %647 = arith.mulf %644, %646 : vector<8x32xf32>
    %648 = arith.addf %472, %647 : vector<8x32xf32>
    %649 = math.tanh %648 : vector<8x32xf32>
    %650 = arith.subf %630, %649 : vector<8x32xf32>
    %651 = arith.mulf %645, %650 : vector<8x32xf32>
    %652 = arith.addf %649, %651 : vector<8x32xf32>
    %653 = arith.index_cast %634 : i32 to index
    %c0_234 = arith.constant 0 : index
    %654 = vector.load %arg34[%653, %c0_234] : memref<64x32xf32, #tpu.memory_space<vmem>>, vector<8x32xf32>
    tpu.vector_store %arg34[%653, %c0_234], %652 {strides = array<i32>} : memref<64x32xf32, #tpu.memory_space<vmem>>, vector<8x32xf32>,
    %c8_i32_235 = arith.constant 8 : i32
    %c0_236 = arith.constant 0 : index
    %c0_237 = arith.constant 0 : index
    %655 = vector.load %arg34[%c0_236, %c0_237] : memref<64x32xf32, #tpu.memory_space<vmem>>, vector<64x32xf32>
    %656 = arith.truncf %655 : vector<64x32xf32> to vector<64x32xbf16>
    %c0_238 = arith.constant 0 : index
    %c0_239 = arith.constant 0 : index
    %657 = vector.load %arg24[%c0_238, %c0_239] : memref<32x64xbf16, #tpu.memory_space<vmem>>, vector<32x64xbf16>
    %cst_240 = arith.constant dense<0.000000e+00> : vector<64x64xf32>
    %658 = tpu.matmul %656, %657, %cst_240 {dimension_numbers = #tpu.dot_dimension_numbers<[1], [0], [0], [1], [0, 0, 1, 1], [], []>} : vector<64x32xbf16>, vector<32x64xbf16>, vector<64x64xf32> -> vector<64x64xf32>
    %c0_241 = arith.constant 0 : index
    %c0_242 = arith.constant 0 : index
    %659 = vector.load %arg28[%c0_241, %c0_242] : memref<1x64xf32, #tpu.memory_space<vmem>>, vector<1x64xf32>
    %660 = vector.broadcast %659 : vector<1x64xf32> to vector<64x64xf32>
    %661 = arith.addf %658, %660 : vector<64x64xf32>
    %c0_243 = arith.constant 0 : index
    %c0_244 = arith.constant 0 : index
    %662 = vector.load %arg35[%c0_243, %c0_244] : memref<64x64xf32, #tpu.memory_space<vmem>>, vector<64x64xf32>
    tpu.vector_store %arg35[%c0_243, %c0_244], %661 {strides = array<i32>} : memref<64x64xf32, #tpu.memory_space<vmem>>, vector<64x64xf32>,
    %c0_245 = arith.constant 0 : index
    %c0_246 = arith.constant 0 : index
    %663 = vector.load %arg25[%c0_245, %c0_246] : memref<32x32xbf16, #tpu.memory_space<vmem>>, vector<32x32xbf16>
    %cst_247 = arith.constant dense<0.000000e+00> : vector<64x32xf32>
    %664 = tpu.matmul %656, %663, %cst_247 {dimension_numbers = #tpu.dot_dimension_numbers<[1], [0], [0], [1], [0, 0, 1, 1], [], []>} : vector<64x32xbf16>, vector<32x32xbf16>, vector<64x32xf32> -> vector<64x32xf32>
    %c0_248 = arith.constant 0 : index
    %c0_249 = arith.constant 0 : index
    %665 = vector.load %arg29[%c0_248, %c0_249] : memref<1x32xf32, #tpu.memory_space<vmem>>, vector<1x32xf32>
    %666 = vector.broadcast %665 : vector<1x32xf32> to vector<64x32xf32>
    %667 = arith.addf %664, %666 : vector<64x32xf32>
    %c0_250 = arith.constant 0 : index
    %c0_251 = arith.constant 0 : index
    %668 = vector.load %arg36[%c0_250, %c0_251] : memref<64x32xf32, #tpu.memory_space<vmem>>, vector<64x32xf32>
    tpu.vector_store %arg36[%c0_250, %c0_251], %667 {strides = array<i32>} : memref<64x32xf32, #tpu.memory_space<vmem>>, vector<64x32xf32>,
    %c0_252 = arith.constant 0 : index
    %c0_253 = arith.constant 0 : index
    %669 = vector.load %arg26[%c0_252, %c0_253] : memref<32x64xbf16, #tpu.memory_space<vmem>>, vector<32x64xbf16>
    %c0_254 = arith.constant 0 : index
    %c0_255 = arith.constant 0 : index
    %670 = vector.load %arg27[%c0_254, %c0_255] : memref<32x32xbf16, #tpu.memory_space<vmem>>, vector<32x32xbf16>
    %c0_256 = arith.constant 0 : index
    %c0_257 = arith.constant 0 : index
    %671 = vector.load %arg30[%c0_256, %c0_257] : memref<1x32xf32, #tpu.memory_space<vmem>>, vector<1x32xf32>
    %672 = vector.shape_cast %671 : vector<1x32xf32> to vector<1x32xf32>
    %673 = vector.broadcast %672 : vector<1x32xf32> to vector<8x32xf32>
    %cst_258 = arith.constant 0.000000e+00 : f32
    %674 = vector.broadcast %cst_258 : f32 to vector<8x32xf32>
    %c0_i32_259 = arith.constant 0 : i32
    %c8_i32_260 = arith.constant 8 : i32
    %675 = arith.muli %c0_i32_259, %c8_i32_260 : i32
    %676 = tpu.assume_multiple %675, 8 : i32
    %677 = arith.index_cast %676 : i32 to index
    %c0_261 = arith.constant 0 : index
    %678 = vector.load %arg35[%677, %c0_261] : memref<64x64xf32, #tpu.memory_space<vmem>>, vector<8x64xf32>
    %679 = arith.index_cast %676 : i32 to index
    %c0_262 = arith.constant 0 : index
    %680 = vector.load %arg36[%679, %c0_262] : memref<64x32xf32, #tpu.memory_space<vmem>>, vector<8x32xf32>
    %681 = arith.truncf %674 : vector<8x32xf32> to vector<8x32xbf16>
    %cst_263 = arith.constant dense<0.000000e+00> : vector<8x64xf32>
    %682 = tpu.matmul %681, %669, %cst_263 {dimension_numbers = #tpu.dot_dimension_numbers<[1], [0], [0], [1], [0, 0, 1, 1], [], []>} : vector<8x32xbf16>, vector<32x64xbf16>, vector<8x64xf32> -> vector<8x64xf32>
    %cst_264 = arith.constant dense<0.000000e+00> : vector<8x32xf32>
    %683 = tpu.matmul %681, %670, %cst_264 {dimension_numbers = #tpu.dot_dimension_numbers<[1], [0], [0], [1], [0, 0, 1, 1], [], []>} : vector<8x32xbf16>, vector<32x32xbf16>, vector<8x32xf32> -> vector<8x32xf32>
    %684 = arith.addf %678, %682 : vector<8x64xf32>
    %685 = arith.negf %684 : vector<8x64xf32>
    %686 = math.exp %685 : vector<8x64xf32>
    %cst_265 = arith.constant 1.000000e+00 : f32
    %687 = vector.broadcast %cst_265 : f32 to vector<8x64xf32>
    %688 = arith.addf %687, %686 : vector<8x64xf32>
    %689 = arith.divf %687, %688 : vector<8x64xf32>
    %690 = vector.extract_strided_slice %689 {offsets = [0, 0], sizes = [8, 32], strides = [1, 1]} : vector<8x64xf32> to vector<8x32xf32>
    %691 = vector.extract_strided_slice %689 {offsets = [0, 32], sizes = [8, 32], strides = [1, 1]} : vector<8x64xf32> to vector<8x32xf32>
    %692 = arith.addf %683, %673 : vector<8x32xf32>
    %693 = arith.mulf %690, %692 : vector<8x32xf32>
    %694 = arith.addf %680, %693 : vector<8x32xf32>
    %695 = math.tanh %694 : vector<8x32xf32>
    %696 = arith.subf %674, %695 : vector<8x32xf32>
    %697 = arith.mulf %691, %696 : vector<8x32xf32>
    %698 = arith.addf %695, %697 : vector<8x32xf32>
    %699 = arith.index_cast %676 : i32 to index
    %c0_266 = arith.constant 0 : index
    %700 = vector.load %arg34[%699, %c0_266] : memref<64x32xf32, #tpu.memory_space<vmem>>, vector<8x32xf32>
    tpu.vector_store %arg34[%699, %c0_266], %698 {strides = array<i32>} : memref<64x32xf32, #tpu.memory_space<vmem>>, vector<8x32xf32>,
    %c1_i32_267 = arith.constant 1 : i32
    %c8_i32_268 = arith.constant 8 : i32
    %701 = arith.muli %c1_i32_267, %c8_i32_268 : i32
    %702 = tpu.assume_multiple %701, 8 : i32
    %703 = arith.index_cast %702 : i32 to index
    %c0_269 = arith.constant 0 : index
    %704 = vector.load %arg35[%703, %c0_269] : memref<64x64xf32, #tpu.memory_space<vmem>>, vector<8x64xf32>
    %705 = arith.index_cast %702 : i32 to index
    %c0_270 = arith.constant 0 : index
    %706 = vector.load %arg36[%705, %c0_270] : memref<64x32xf32, #tpu.memory_space<vmem>>, vector<8x32xf32>
    %707 = arith.truncf %698 : vector<8x32xf32> to vector<8x32xbf16>
    %cst_271 = arith.constant dense<0.000000e+00> : vector<8x64xf32>
    %708 = tpu.matmul %707, %669, %cst_271 {dimension_numbers = #tpu.dot_dimension_numbers<[1], [0], [0], [1], [0, 0, 1, 1], [], []>} : vector<8x32xbf16>, vector<32x64xbf16>, vector<8x64xf32> -> vector<8x64xf32>
    %cst_272 = arith.constant dense<0.000000e+00> : vector<8x32xf32>
    %709 = tpu.matmul %707, %670, %cst_272 {dimension_numbers = #tpu.dot_dimension_numbers<[1], [0], [0], [1], [0, 0, 1, 1], [], []>} : vector<8x32xbf16>, vector<32x32xbf16>, vector<8x32xf32> -> vector<8x32xf32>
    %710 = arith.addf %704, %708 : vector<8x64xf32>
    %711 = arith.negf %710 : vector<8x64xf32>
    %712 = math.exp %711 : vector<8x64xf32>
    %cst_273 = arith.constant 1.000000e+00 : f32
    %713 = vector.broadcast %cst_273 : f32 to vector<8x64xf32>
    %714 = arith.addf %713, %712 : vector<8x64xf32>
    %715 = arith.divf %713, %714 : vector<8x64xf32>
    %716 = vector.extract_strided_slice %715 {offsets = [0, 0], sizes = [8, 32], strides = [1, 1]} : vector<8x64xf32> to vector<8x32xf32>
    %717 = vector.extract_strided_slice %715 {offsets = [0, 32], sizes = [8, 32], strides = [1, 1]} : vector<8x64xf32> to vector<8x32xf32>
    %718 = arith.addf %709, %673 : vector<8x32xf32>
    %719 = arith.mulf %716, %718 : vector<8x32xf32>
    %720 = arith.addf %706, %719 : vector<8x32xf32>
    %721 = math.tanh %720 : vector<8x32xf32>
    %722 = arith.subf %698, %721 : vector<8x32xf32>
    %723 = arith.mulf %717, %722 : vector<8x32xf32>
    %724 = arith.addf %721, %723 : vector<8x32xf32>
    %725 = arith.index_cast %702 : i32 to index
    %c0_274 = arith.constant 0 : index
    %726 = vector.load %arg34[%725, %c0_274] : memref<64x32xf32, #tpu.memory_space<vmem>>, vector<8x32xf32>
    tpu.vector_store %arg34[%725, %c0_274], %724 {strides = array<i32>} : memref<64x32xf32, #tpu.memory_space<vmem>>, vector<8x32xf32>,
    %c2_i32_275 = arith.constant 2 : i32
    %c8_i32_276 = arith.constant 8 : i32
    %727 = arith.muli %c2_i32_275, %c8_i32_276 : i32
    %728 = tpu.assume_multiple %727, 8 : i32
    %729 = arith.index_cast %728 : i32 to index
    %c0_277 = arith.constant 0 : index
    %730 = vector.load %arg35[%729, %c0_277] : memref<64x64xf32, #tpu.memory_space<vmem>>, vector<8x64xf32>
    %731 = arith.index_cast %728 : i32 to index
    %c0_278 = arith.constant 0 : index
    %732 = vector.load %arg36[%731, %c0_278] : memref<64x32xf32, #tpu.memory_space<vmem>>, vector<8x32xf32>
    %733 = arith.truncf %724 : vector<8x32xf32> to vector<8x32xbf16>
    %cst_279 = arith.constant dense<0.000000e+00> : vector<8x64xf32>
    %734 = tpu.matmul %733, %669, %cst_279 {dimension_numbers = #tpu.dot_dimension_numbers<[1], [0], [0], [1], [0, 0, 1, 1], [], []>} : vector<8x32xbf16>, vector<32x64xbf16>, vector<8x64xf32> -> vector<8x64xf32>
    %cst_280 = arith.constant dense<0.000000e+00> : vector<8x32xf32>
    %735 = tpu.matmul %733, %670, %cst_280 {dimension_numbers = #tpu.dot_dimension_numbers<[1], [0], [0], [1], [0, 0, 1, 1], [], []>} : vector<8x32xbf16>, vector<32x32xbf16>, vector<8x32xf32> -> vector<8x32xf32>
    %736 = arith.addf %730, %734 : vector<8x64xf32>
    %737 = arith.negf %736 : vector<8x64xf32>
    %738 = math.exp %737 : vector<8x64xf32>
    %cst_281 = arith.constant 1.000000e+00 : f32
    %739 = vector.broadcast %cst_281 : f32 to vector<8x64xf32>
    %740 = arith.addf %739, %738 : vector<8x64xf32>
    %741 = arith.divf %739, %740 : vector<8x64xf32>
    %742 = vector.extract_strided_slice %741 {offsets = [0, 0], sizes = [8, 32], strides = [1, 1]} : vector<8x64xf32> to vector<8x32xf32>
    %743 = vector.extract_strided_slice %741 {offsets = [0, 32], sizes = [8, 32], strides = [1, 1]} : vector<8x64xf32> to vector<8x32xf32>
    %744 = arith.addf %735, %673 : vector<8x32xf32>
    %745 = arith.mulf %742, %744 : vector<8x32xf32>
    %746 = arith.addf %732, %745 : vector<8x32xf32>
    %747 = math.tanh %746 : vector<8x32xf32>
    %748 = arith.subf %724, %747 : vector<8x32xf32>
    %749 = arith.mulf %743, %748 : vector<8x32xf32>
    %750 = arith.addf %747, %749 : vector<8x32xf32>
    %751 = arith.index_cast %728 : i32 to index
    %c0_282 = arith.constant 0 : index
    %752 = vector.load %arg34[%751, %c0_282] : memref<64x32xf32, #tpu.memory_space<vmem>>, vector<8x32xf32>
    tpu.vector_store %arg34[%751, %c0_282], %750 {strides = array<i32>} : memref<64x32xf32, #tpu.memory_space<vmem>>, vector<8x32xf32>,
    %c3_i32_283 = arith.constant 3 : i32
    %c8_i32_284 = arith.constant 8 : i32
    %753 = arith.muli %c3_i32_283, %c8_i32_284 : i32
    %754 = tpu.assume_multiple %753, 8 : i32
    %755 = arith.index_cast %754 : i32 to index
    %c0_285 = arith.constant 0 : index
    %756 = vector.load %arg35[%755, %c0_285] : memref<64x64xf32, #tpu.memory_space<vmem>>, vector<8x64xf32>
    %757 = arith.index_cast %754 : i32 to index
    %c0_286 = arith.constant 0 : index
    %758 = vector.load %arg36[%757, %c0_286] : memref<64x32xf32, #tpu.memory_space<vmem>>, vector<8x32xf32>
    %759 = arith.truncf %750 : vector<8x32xf32> to vector<8x32xbf16>
    %cst_287 = arith.constant dense<0.000000e+00> : vector<8x64xf32>
    %760 = tpu.matmul %759, %669, %cst_287 {dimension_numbers = #tpu.dot_dimension_numbers<[1], [0], [0], [1], [0, 0, 1, 1], [], []>} : vector<8x32xbf16>, vector<32x64xbf16>, vector<8x64xf32> -> vector<8x64xf32>
    %cst_288 = arith.constant dense<0.000000e+00> : vector<8x32xf32>
    %761 = tpu.matmul %759, %670, %cst_288 {dimension_numbers = #tpu.dot_dimension_numbers<[1], [0], [0], [1], [0, 0, 1, 1], [], []>} : vector<8x32xbf16>, vector<32x32xbf16>, vector<8x32xf32> -> vector<8x32xf32>
    %762 = arith.addf %756, %760 : vector<8x64xf32>
    %763 = arith.negf %762 : vector<8x64xf32>
    %764 = math.exp %763 : vector<8x64xf32>
    %cst_289 = arith.constant 1.000000e+00 : f32
    %765 = vector.broadcast %cst_289 : f32 to vector<8x64xf32>
    %766 = arith.addf %765, %764 : vector<8x64xf32>
    %767 = arith.divf %765, %766 : vector<8x64xf32>
    %768 = vector.extract_strided_slice %767 {offsets = [0, 0], sizes = [8, 32], strides = [1, 1]} : vector<8x64xf32> to vector<8x32xf32>
    %769 = vector.extract_strided_slice %767 {offsets = [0, 32], sizes = [8, 32], strides = [1, 1]} : vector<8x64xf32> to vector<8x32xf32>
    %770 = arith.addf %761, %673 : vector<8x32xf32>
    %771 = arith.mulf %768, %770 : vector<8x32xf32>
    %772 = arith.addf %758, %771 : vector<8x32xf32>
    %773 = math.tanh %772 : vector<8x32xf32>
    %774 = arith.subf %750, %773 : vector<8x32xf32>
    %775 = arith.mulf %769, %774 : vector<8x32xf32>
    %776 = arith.addf %773, %775 : vector<8x32xf32>
    %777 = arith.index_cast %754 : i32 to index
    %c0_290 = arith.constant 0 : index
    %778 = vector.load %arg34[%777, %c0_290] : memref<64x32xf32, #tpu.memory_space<vmem>>, vector<8x32xf32>
    tpu.vector_store %arg34[%777, %c0_290], %776 {strides = array<i32>} : memref<64x32xf32, #tpu.memory_space<vmem>>, vector<8x32xf32>,
    %c4_i32_291 = arith.constant 4 : i32
    %c8_i32_292 = arith.constant 8 : i32
    %779 = arith.muli %c4_i32_291, %c8_i32_292 : i32
    %780 = tpu.assume_multiple %779, 8 : i32
    %781 = arith.index_cast %780 : i32 to index
    %c0_293 = arith.constant 0 : index
    %782 = vector.load %arg35[%781, %c0_293] : memref<64x64xf32, #tpu.memory_space<vmem>>, vector<8x64xf32>
    %783 = arith.index_cast %780 : i32 to index
    %c0_294 = arith.constant 0 : index
    %784 = vector.load %arg36[%783, %c0_294] : memref<64x32xf32, #tpu.memory_space<vmem>>, vector<8x32xf32>
    %785 = arith.truncf %776 : vector<8x32xf32> to vector<8x32xbf16>
    %cst_295 = arith.constant dense<0.000000e+00> : vector<8x64xf32>
    %786 = tpu.matmul %785, %669, %cst_295 {dimension_numbers = #tpu.dot_dimension_numbers<[1], [0], [0], [1], [0, 0, 1, 1], [], []>} : vector<8x32xbf16>, vector<32x64xbf16>, vector<8x64xf32> -> vector<8x64xf32>
    %cst_296 = arith.constant dense<0.000000e+00> : vector<8x32xf32>
    %787 = tpu.matmul %785, %670, %cst_296 {dimension_numbers = #tpu.dot_dimension_numbers<[1], [0], [0], [1], [0, 0, 1, 1], [], []>} : vector<8x32xbf16>, vector<32x32xbf16>, vector<8x32xf32> -> vector<8x32xf32>
    %788 = arith.addf %782, %786 : vector<8x64xf32>
    %789 = arith.negf %788 : vector<8x64xf32>
    %790 = math.exp %789 : vector<8x64xf32>
    %cst_297 = arith.constant 1.000000e+00 : f32
    %791 = vector.broadcast %cst_297 : f32 to vector<8x64xf32>
    %792 = arith.addf %791, %790 : vector<8x64xf32>
    %793 = arith.divf %791, %792 : vector<8x64xf32>
    %794 = vector.extract_strided_slice %793 {offsets = [0, 0], sizes = [8, 32], strides = [1, 1]} : vector<8x64xf32> to vector<8x32xf32>
    %795 = vector.extract_strided_slice %793 {offsets = [0, 32], sizes = [8, 32], strides = [1, 1]} : vector<8x64xf32> to vector<8x32xf32>
    %796 = arith.addf %787, %673 : vector<8x32xf32>
    %797 = arith.mulf %794, %796 : vector<8x32xf32>
    %798 = arith.addf %784, %797 : vector<8x32xf32>
    %799 = math.tanh %798 : vector<8x32xf32>
    %800 = arith.subf %776, %799 : vector<8x32xf32>
    %801 = arith.mulf %795, %800 : vector<8x32xf32>
    %802 = arith.addf %799, %801 : vector<8x32xf32>
    %803 = arith.index_cast %780 : i32 to index
    %c0_298 = arith.constant 0 : index
    %804 = vector.load %arg34[%803, %c0_298] : memref<64x32xf32, #tpu.memory_space<vmem>>, vector<8x32xf32>
    tpu.vector_store %arg34[%803, %c0_298], %802 {strides = array<i32>} : memref<64x32xf32, #tpu.memory_space<vmem>>, vector<8x32xf32>,
    %c5_i32_299 = arith.constant 5 : i32
    %c8_i32_300 = arith.constant 8 : i32
    %805 = arith.muli %c5_i32_299, %c8_i32_300 : i32
    %806 = tpu.assume_multiple %805, 8 : i32
    %807 = arith.index_cast %806 : i32 to index
    %c0_301 = arith.constant 0 : index
    %808 = vector.load %arg35[%807, %c0_301] : memref<64x64xf32, #tpu.memory_space<vmem>>, vector<8x64xf32>
    %809 = arith.index_cast %806 : i32 to index
    %c0_302 = arith.constant 0 : index
    %810 = vector.load %arg36[%809, %c0_302] : memref<64x32xf32, #tpu.memory_space<vmem>>, vector<8x32xf32>
    %811 = arith.truncf %802 : vector<8x32xf32> to vector<8x32xbf16>
    %cst_303 = arith.constant dense<0.000000e+00> : vector<8x64xf32>
    %812 = tpu.matmul %811, %669, %cst_303 {dimension_numbers = #tpu.dot_dimension_numbers<[1], [0], [0], [1], [0, 0, 1, 1], [], []>} : vector<8x32xbf16>, vector<32x64xbf16>, vector<8x64xf32> -> vector<8x64xf32>
    %cst_304 = arith.constant dense<0.000000e+00> : vector<8x32xf32>
    %813 = tpu.matmul %811, %670, %cst_304 {dimension_numbers = #tpu.dot_dimension_numbers<[1], [0], [0], [1], [0, 0, 1, 1], [], []>} : vector<8x32xbf16>, vector<32x32xbf16>, vector<8x32xf32> -> vector<8x32xf32>
    %814 = arith.addf %808, %812 : vector<8x64xf32>
    %815 = arith.negf %814 : vector<8x64xf32>
    %816 = math.exp %815 : vector<8x64xf32>
    %cst_305 = arith.constant 1.000000e+00 : f32
    %817 = vector.broadcast %cst_305 : f32 to vector<8x64xf32>
    %818 = arith.addf %817, %816 : vector<8x64xf32>
    %819 = arith.divf %817, %818 : vector<8x64xf32>
    %820 = vector.extract_strided_slice %819 {offsets = [0, 0], sizes = [8, 32], strides = [1, 1]} : vector<8x64xf32> to vector<8x32xf32>
    %821 = vector.extract_strided_slice %819 {offsets = [0, 32], sizes = [8, 32], strides = [1, 1]} : vector<8x64xf32> to vector<8x32xf32>
    %822 = arith.addf %813, %673 : vector<8x32xf32>
    %823 = arith.mulf %820, %822 : vector<8x32xf32>
    %824 = arith.addf %810, %823 : vector<8x32xf32>
    %825 = math.tanh %824 : vector<8x32xf32>
    %826 = arith.subf %802, %825 : vector<8x32xf32>
    %827 = arith.mulf %821, %826 : vector<8x32xf32>
    %828 = arith.addf %825, %827 : vector<8x32xf32>
    %829 = arith.index_cast %806 : i32 to index
    %c0_306 = arith.constant 0 : index
    %830 = vector.load %arg34[%829, %c0_306] : memref<64x32xf32, #tpu.memory_space<vmem>>, vector<8x32xf32>
    tpu.vector_store %arg34[%829, %c0_306], %828 {strides = array<i32>} : memref<64x32xf32, #tpu.memory_space<vmem>>, vector<8x32xf32>,
    %c6_i32_307 = arith.constant 6 : i32
    %c8_i32_308 = arith.constant 8 : i32
    %831 = arith.muli %c6_i32_307, %c8_i32_308 : i32
    %832 = tpu.assume_multiple %831, 8 : i32
    %833 = arith.index_cast %832 : i32 to index
    %c0_309 = arith.constant 0 : index
    %834 = vector.load %arg35[%833, %c0_309] : memref<64x64xf32, #tpu.memory_space<vmem>>, vector<8x64xf32>
    %835 = arith.index_cast %832 : i32 to index
    %c0_310 = arith.constant 0 : index
    %836 = vector.load %arg36[%835, %c0_310] : memref<64x32xf32, #tpu.memory_space<vmem>>, vector<8x32xf32>
    %837 = arith.truncf %828 : vector<8x32xf32> to vector<8x32xbf16>
    %cst_311 = arith.constant dense<0.000000e+00> : vector<8x64xf32>
    %838 = tpu.matmul %837, %669, %cst_311 {dimension_numbers = #tpu.dot_dimension_numbers<[1], [0], [0], [1], [0, 0, 1, 1], [], []>} : vector<8x32xbf16>, vector<32x64xbf16>, vector<8x64xf32> -> vector<8x64xf32>
    %cst_312 = arith.constant dense<0.000000e+00> : vector<8x32xf32>
    %839 = tpu.matmul %837, %670, %cst_312 {dimension_numbers = #tpu.dot_dimension_numbers<[1], [0], [0], [1], [0, 0, 1, 1], [], []>} : vector<8x32xbf16>, vector<32x32xbf16>, vector<8x32xf32> -> vector<8x32xf32>
    %840 = arith.addf %834, %838 : vector<8x64xf32>
    %841 = arith.negf %840 : vector<8x64xf32>
    %842 = math.exp %841 : vector<8x64xf32>
    %cst_313 = arith.constant 1.000000e+00 : f32
    %843 = vector.broadcast %cst_313 : f32 to vector<8x64xf32>
    %844 = arith.addf %843, %842 : vector<8x64xf32>
    %845 = arith.divf %843, %844 : vector<8x64xf32>
    %846 = vector.extract_strided_slice %845 {offsets = [0, 0], sizes = [8, 32], strides = [1, 1]} : vector<8x64xf32> to vector<8x32xf32>
    %847 = vector.extract_strided_slice %845 {offsets = [0, 32], sizes = [8, 32], strides = [1, 1]} : vector<8x64xf32> to vector<8x32xf32>
    %848 = arith.addf %839, %673 : vector<8x32xf32>
    %849 = arith.mulf %846, %848 : vector<8x32xf32>
    %850 = arith.addf %836, %849 : vector<8x32xf32>
    %851 = math.tanh %850 : vector<8x32xf32>
    %852 = arith.subf %828, %851 : vector<8x32xf32>
    %853 = arith.mulf %847, %852 : vector<8x32xf32>
    %854 = arith.addf %851, %853 : vector<8x32xf32>
    %855 = arith.index_cast %832 : i32 to index
    %c0_314 = arith.constant 0 : index
    %856 = vector.load %arg34[%855, %c0_314] : memref<64x32xf32, #tpu.memory_space<vmem>>, vector<8x32xf32>
    tpu.vector_store %arg34[%855, %c0_314], %854 {strides = array<i32>} : memref<64x32xf32, #tpu.memory_space<vmem>>, vector<8x32xf32>,
    %c7_i32_315 = arith.constant 7 : i32
    %c8_i32_316 = arith.constant 8 : i32
    %857 = arith.muli %c7_i32_315, %c8_i32_316 : i32
    %858 = tpu.assume_multiple %857, 8 : i32
    %859 = arith.index_cast %858 : i32 to index
    %c0_317 = arith.constant 0 : index
    %860 = vector.load %arg35[%859, %c0_317] : memref<64x64xf32, #tpu.memory_space<vmem>>, vector<8x64xf32>
    %861 = arith.index_cast %858 : i32 to index
    %c0_318 = arith.constant 0 : index
    %862 = vector.load %arg36[%861, %c0_318] : memref<64x32xf32, #tpu.memory_space<vmem>>, vector<8x32xf32>
    %863 = arith.truncf %854 : vector<8x32xf32> to vector<8x32xbf16>
    %cst_319 = arith.constant dense<0.000000e+00> : vector<8x64xf32>
    %864 = tpu.matmul %863, %669, %cst_319 {dimension_numbers = #tpu.dot_dimension_numbers<[1], [0], [0], [1], [0, 0, 1, 1], [], []>} : vector<8x32xbf16>, vector<32x64xbf16>, vector<8x64xf32> -> vector<8x64xf32>
    %cst_320 = arith.constant dense<0.000000e+00> : vector<8x32xf32>
    %865 = tpu.matmul %863, %670, %cst_320 {dimension_numbers = #tpu.dot_dimension_numbers<[1], [0], [0], [1], [0, 0, 1, 1], [], []>} : vector<8x32xbf16>, vector<32x32xbf16>, vector<8x32xf32> -> vector<8x32xf32>
    %866 = arith.addf %860, %864 : vector<8x64xf32>
    %867 = arith.negf %866 : vector<8x64xf32>
    %868 = math.exp %867 : vector<8x64xf32>
    %cst_321 = arith.constant 1.000000e+00 : f32
    %869 = vector.broadcast %cst_321 : f32 to vector<8x64xf32>
    %870 = arith.addf %869, %868 : vector<8x64xf32>
    %871 = arith.divf %869, %870 : vector<8x64xf32>
    %872 = vector.extract_strided_slice %871 {offsets = [0, 0], sizes = [8, 32], strides = [1, 1]} : vector<8x64xf32> to vector<8x32xf32>
    %873 = vector.extract_strided_slice %871 {offsets = [0, 32], sizes = [8, 32], strides = [1, 1]} : vector<8x64xf32> to vector<8x32xf32>
    %874 = arith.addf %865, %673 : vector<8x32xf32>
    %875 = arith.mulf %872, %874 : vector<8x32xf32>
    %876 = arith.addf %862, %875 : vector<8x32xf32>
    %877 = math.tanh %876 : vector<8x32xf32>
    %878 = arith.subf %854, %877 : vector<8x32xf32>
    %879 = arith.mulf %873, %878 : vector<8x32xf32>
    %880 = arith.addf %877, %879 : vector<8x32xf32>
    %881 = arith.index_cast %858 : i32 to index
    %c0_322 = arith.constant 0 : index
    %882 = vector.load %arg34[%881, %c0_322] : memref<64x32xf32, #tpu.memory_space<vmem>>, vector<8x32xf32>
    tpu.vector_store %arg34[%881, %c0_322], %880 {strides = array<i32>} : memref<64x32xf32, #tpu.memory_space<vmem>>, vector<8x32xf32>,
    %c8_i32_323 = arith.constant 8 : i32
    %c0_324 = arith.constant 0 : index
    %c0_325 = arith.constant 0 : index
    %883 = vector.load %arg34[%c0_324, %c0_325] : memref<64x32xf32, #tpu.memory_space<vmem>>, vector<64x32xf32>
    %884 = arith.truncf %883 : vector<64x32xf32> to vector<64x32xbf16>
    %c0_326 = arith.constant 0 : index
    %c0_327 = arith.constant 0 : index
    %885 = vector.load %arg31[%c0_326, %c0_327] : memref<32x128xbf16, #tpu.memory_space<vmem>>, vector<32x128xbf16>
    %cst_328 = arith.constant dense<0.000000e+00> : vector<64x128xf32>
    %886 = tpu.matmul %884, %885, %cst_328 {dimension_numbers = #tpu.dot_dimension_numbers<[1], [0], [0], [1], [0, 0, 1, 1], [], []>} : vector<64x32xbf16>, vector<32x128xbf16>, vector<64x128xf32> -> vector<64x128xf32>
    %c0_329 = arith.constant 0 : index
    %c0_330 = arith.constant 0 : index
    %887 = vector.load %arg32[%c0_329, %c0_330] : memref<1x128xf32, #tpu.memory_space<vmem>>, vector<1x128xf32>
    %888 = vector.broadcast %887 : vector<1x128xf32> to vector<64x128xf32>
    %889 = arith.addf %886, %888 : vector<64x128xf32>
    %c0_331 = arith.constant 0 : index
    %c0_332 = arith.constant 0 : index
    %890 = vector.load %arg33[%c0_331, %c0_332] : memref<64x128xf32, #tpu.memory_space<vmem>>, vector<64x128xf32>
    tpu.vector_store %arg33[%c0_331, %c0_332], %889 {strides = array<i32>} : memref<64x128xf32, #tpu.memory_space<vmem>>, vector<64x128xf32>,
    return
  }
}

</mosaic_0001>

<llo_original>
// kernel: gru_autoencoder_forward.1
$region0: #{gru_autoencoder_forward.1}
  #allocation0 [shape = 'u32[]', space=smem, size = 0x4, offset = 0x4, fixed_abs, tag = 'smem constant byte address 0x4 - core index']
  #allocation1 [shape = 'u32[72,128]{1,0:T(1,128)}', space=vmem, size = 0x9000, scoped, tag = 'internal scratch']
  #allocation2 [shape = 'f32[64,32]{1,0:T(8,128)}', space=vmem, size = 0x8000, scoped, tag = 'scratch operand']
  #allocation3 [shape = 'f32[64,64]{1,0:T(8,128)}', space=vmem, size = 0x8000, scoped, tag = 'scratch operand']
  #allocation4 [shape = 'f32[64,32]{1,0:T(8,128)}', space=vmem, size = 0x8000, scoped, tag = 'scratch operand']
  %s0 = inlined_call_operand.smem [shape: u32[34], index: -1, kind: input, shape index: {}]
  %s1 = sld [smem:[%s0]]
  %s2 = scalar_lea.smem %s0, 1
  %s3 = sld [smem:[%s2]]
  %s4 = scalar_lea.smem %s0, 2
  %s5 = sld [smem:[%s4]]
  %s6 = scalar_lea.smem %s0, 3
  %s7 = sld [smem:[%s6]]
  %s8 = scalar_lea.smem %s0, 4
  %s9 = sld [smem:[%s8]]
  %s10 = scalar_lea.smem %s0, 5
  %s11 = sld [smem:[%s10]]
  %s12 = scalar_lea.smem %s0, 6
  %s13 = sld [smem:[%s12]]
  %s14 = scalar_lea.smem %s0, 7
  %s15 = sld [smem:[%s14]]
  %s16 = scalar_lea.smem %s0, 8
  %s17 = sld [smem:[%s16]]
  %s18 = scalar_lea.smem %s0, 9
  %s19 = sld [smem:[%s18]]
  %s20 = scalar_lea.smem %s0, 10
  %s21 = sld [smem:[%s20]]
  %s22 = scalar_lea.smem %s0, 11
  %s23 = sld [smem:[%s22]]
  %s24 = scalar_lea.smem %s0, 12
  %s25 = sld [smem:[%s24]]
  %s26 = scalar_lea.smem %s0, 13
  %s27 = sld [smem:[%s26]]
  %s28 = scalar_lea.smem %s0, 14
  %s29 = sld [smem:[%s28]]
  %s30 = scalar_lea.smem %s0, 15
  %s31 = sld [smem:[%s30]]
  %s32 = scalar_lea.smem %s0, 16
  %s33 = sld [smem:[%s32]]
  %s34 = scalar_lea.smem %s0, 17
  %s35 = sld [smem:[%s34]]
  %s36 = scalar_lea.smem %s0, 18
  %s37 = sld [smem:[%s36]]
  %s38 = scalar_lea.smem %s0, 19
  %s39 = sld [smem:[%s38]]
  %s40 = scalar_lea.smem %s0, 20
  %s41 = sld [smem:[%s40]]
  %s42 = scalar_lea.smem %s0, 21
  %s43 = sld [smem:[%s42]]
  %s44 = scalar_lea.smem %s0, 22
  %s45 = sld [smem:[%s44]]
  %s46 = scalar_lea.smem %s0, 23
  %s47 = sld [smem:[%s46]]
  %s48 = scalar_lea.smem %s0, 24
  %s49 = sld [smem:[%s48]]
  %s50 = scalar_lea.smem %s0, 25
  %s51 = sld [smem:[%s50]]
  %s52 = scalar_lea.smem %s0, 26
  %s53 = sld [smem:[%s52]]
  %s54 = scalar_lea.smem %s0, 27
  %s55 = sld [smem:[%s54]]
  %s56 = scalar_lea.smem %s0, 28
  %s57 = sld [smem:[%s56]]
  %s58 = scalar_lea.smem %s0, 29
  %s59 = sld [smem:[%s58]]
  %s60 = scalar_lea.smem %s0, 30
  %s61 = sld [smem:[%s60]]
  %s62 = scalar_lea.smem %s0, 31
  %s63 = sld [smem:[%s62]]
  %s64 = scalar_lea.smem %s0, 32
  %s65 = sld [smem:[%s64]]
  %s66 = scalar_lea.smem %s0, 33
  %s67 = sld [smem:[%s66]]
  %s68 = sld [smem:[#allocation0]]
  $region142: #{gru_autoencoder_forward.1} parent=0
    _
  %s70 = ssub.s32 1, %s68
  %s71 = scalar_select 0, %s70, %s68
  // Predicated region
  $region2: #{gru_autoencoder_forward.1} parent=0 // pred_check
    _
  $region3: #{gru_autoencoder_forward.1} parent=0 // pred_check_branch
    %73 = sbr.rel (0) target = $region5
  $region4: #{gru_autoencoder_forward.1} parent=0 // pred_region
    _
  $region5: #{gru_autoencoder_forward.1} parent=0 // pred_fallthru
    _
  // Predicated region
  $region6: #{gru_autoencoder_forward.1} parent=0 // pred_check
    _
  $region7: #{gru_autoencoder_forward.1} parent=0 // pred_check_branch
    %75 = sbr.rel (0) target = $region9
  $region8: #{gru_autoencoder_forward.1} parent=0 // pred_region
    _
  $region9: #{gru_autoencoder_forward.1} parent=0 // pred_fallthru
    _
  // Predicated region
  $region10: #{gru_autoencoder_forward.1} parent=0 // pred_check
    _
  $region11: #{gru_autoencoder_forward.1} parent=0 // pred_check_branch
    %77 = sbr.rel (0) target = $region13
  $region12: #{gru_autoencoder_forward.1} parent=0 // pred_region
    _
  $region13: #{gru_autoencoder_forward.1} parent=0 // pred_fallthru
    _
  // Predicated region
  $region14: #{gru_autoencoder_forward.1} parent=0 // pred_check
    _
  $region15: #{gru_autoencoder_forward.1} parent=0 // pred_check_branch
    %79 = sbr.rel (0) target = $region17
  $region16: #{gru_autoencoder_forward.1} parent=0 // pred_region
    _
  $region17: #{gru_autoencoder_forward.1} parent=0 // pred_fallthru
    _
  // Predicated region
  $region18: #{gru_autoencoder_forward.1} parent=0 // pred_check
    _
  $region19: #{gru_autoencoder_forward.1} parent=0 // pred_check_branch
    %81 = sbr.rel (0) target = $region21
  $region20: #{gru_autoencoder_forward.1} parent=0 // pred_region
    _
  $region21: #{gru_autoencoder_forward.1} parent=0 // pred_fallthru
    _
  // Predicated region
  $region22: #{gru_autoencoder_forward.1} parent=0 // pred_check
    _
  $region23: #{gru_autoencoder_forward.1} parent=0 // pred_check_branch
    %83 = sbr.rel (0) target = $region25
  $region24: #{gru_autoencoder_forward.1} parent=0 // pred_region
    _
  $region25: #{gru_autoencoder_forward.1} parent=0 // pred_fallthru
    _
  // Predicated region
  $region26: #{gru_autoencoder_forward.1} parent=0 // pred_check
    _
  $region27: #{gru_autoencoder_forward.1} parent=0 // pred_check_branch
    %85 = sbr.rel (0) target = $region29
  $region28: #{gru_autoencoder_forward.1} parent=0 // pred_region
    _
  $region29: #{gru_autoencoder_forward.1} parent=0 // pred_fallthru
    _
  // Predicated region
  $region30: #{gru_autoencoder_forward.1} parent=0 // pred_check
    _
  $region31: #{gru_autoencoder_forward.1} parent=0 // pred_check_branch
    %87 = sbr.rel (0) target = $region33
  $region32: #{gru_autoencoder_forward.1} parent=0 // pred_region
    _
  $region33: #{gru_autoencoder_forward.1} parent=0 // pred_fallthru
    _
  // Predicated region
  $region34: #{gru_autoencoder_forward.1} parent=0 // pred_check
    _
  $region35: #{gru_autoencoder_forward.1} parent=0 // pred_check_branch
    %89 = sbr.rel (0) target = $region37
  $region36: #{gru_autoencoder_forward.1} parent=0 // pred_region
    _
  $region37: #{gru_autoencoder_forward.1} parent=0 // pred_fallthru
    _
  // Predicated region
  $region38: #{gru_autoencoder_forward.1} parent=0 // pred_check
    _
  $region39: #{gru_autoencoder_forward.1} parent=0 // pred_check_branch
    %91 = sbr.rel (0) target = $region41
  $region40: #{gru_autoencoder_forward.1} parent=0 // pred_region
    _
  $region41: #{gru_autoencoder_forward.1} parent=0 // pred_fallthru
    _
  // Predicated region
  $region42: #{gru_autoencoder_forward.1} parent=0 // pred_check
    _
  $region43: #{gru_autoencoder_forward.1} parent=0 // pred_check_branch
    %93 = sbr.rel (0) target = $region45
  $region44: #{gru_autoencoder_forward.1} parent=0 // pred_region
    _
  $region45: #{gru_autoencoder_forward.1} parent=0 // pred_fallthru
    _
  // Predicated region
  $region46: #{gru_autoencoder_forward.1} parent=0 // pred_check
    _
  $region47: #{gru_autoencoder_forward.1} parent=0 // pred_check_branch
    %95 = sbr.rel (0) target = $region49
  $region48: #{gru_autoencoder_forward.1} parent=0 // pred_region
    _
  $region49: #{gru_autoencoder_forward.1} parent=0 // pred_fallthru
    _
  // Predicated region
  $region50: #{gru_autoencoder_forward.1} parent=0 // pred_check
    _
  $region51: #{gru_autoencoder_forward.1} parent=0 // pred_check_branch
    %97 = sbr.rel (0) target = $region53
  $region52: #{gru_autoencoder_forward.1} parent=0 // pred_region
    _
  $region53: #{gru_autoencoder_forward.1} parent=0 // pred_fallthru
    _
  // Predicated region
  $region54: #{gru_autoencoder_forward.1} parent=0 // pred_check
    _
  $region55: #{gru_autoencoder_forward.1} parent=0 // pred_check_branch
    %99 = sbr.rel (0) target = $region57
  $region56: #{gru_autoencoder_forward.1} parent=0 // pred_region
    _
  $region57: #{gru_autoencoder_forward.1} parent=0 // pred_fallthru
    _
  // Predicated region
  $region58: #{gru_autoencoder_forward.1} parent=0 // pred_check
    _
  $region59: #{gru_autoencoder_forward.1} parent=0 // pred_check_branch
    %101 = sbr.rel (0) target = $region61
  $region60: #{gru_autoencoder_forward.1} parent=0 // pred_region
    _
  $region61: #{gru_autoencoder_forward.1} parent=0 // pred_fallthru
    _
  // Predicated region
  $region62: #{gru_autoencoder_forward.1} parent=0 // pred_check
    _
  $region63: #{gru_autoencoder_forward.1} parent=0 // pred_check_branch
    %103 = sbr.rel (0) target = $region65
  $region64: #{gru_autoencoder_forward.1} parent=0 // pred_region
    _
  $region65: #{gru_autoencoder_forward.1} parent=0 // pred_fallthru
    _
  // Predicated region
  $region66: #{gru_autoencoder_forward.1} parent=0 // pred_check
    _
  $region67: #{gru_autoencoder_forward.1} parent=0 // pred_check_branch
    %105 = sbr.rel (0) target = $region69
  $region68: #{gru_autoencoder_forward.1} parent=0 // pred_region
    _
  $region69: #{gru_autoencoder_forward.1} parent=0 // pred_fallthru
    _
  // Predicated region
  $region70: #{gru_autoencoder_forward.1} parent=0 // pred_check
    _
  $region71: #{gru_autoencoder_forward.1} parent=0 // pred_check_branch
    %107 = sbr.rel (0) target = $region73
  $region72: #{gru_autoencoder_forward.1} parent=0 // pred_region
    _
  $region73: #{gru_autoencoder_forward.1} parent=0 // pred_fallthru
    _
  // Predicated region
  $region74: #{gru_autoencoder_forward.1} parent=0 // pred_check
    _
  $region75: #{gru_autoencoder_forward.1} parent=0 // pred_check_branch
    %109 = sbr.rel (0) target = $region77
  $region76: #{gru_autoencoder_forward.1} parent=0 // pred_region
    _
  $region77: #{gru_autoencoder_forward.1} parent=0 // pred_fallthru
    _
  // Predicated region
  $region78: #{gru_autoencoder_forward.1} parent=0 // pred_check
    _
  $region79: #{gru_autoencoder_forward.1} parent=0 // pred_check_branch
    %111 = sbr.rel (0) target = $region81
  $region80: #{gru_autoencoder_forward.1} parent=0 // pred_region
    _
  $region81: #{gru_autoencoder_forward.1} parent=0 // pred_fallthru
    _
  // Predicated region
  $region82: #{gru_autoencoder_forward.1} parent=0 // pred_check
    _
  $region83: #{gru_autoencoder_forward.1} parent=0 // pred_check_branch
    %113 = sbr.rel (0) target = $region85
  $region84: #{gru_autoencoder_forward.1} parent=0 // pred_region
    _
  $region85: #{gru_autoencoder_forward.1} parent=0 // pred_fallthru
    _
  // Predicated region
  $region86: #{gru_autoencoder_forward.1} parent=0 // pred_check
    _
  $region87: #{gru_autoencoder_forward.1} parent=0 // pred_check_branch
    %115 = sbr.rel (0) target = $region89
  $region88: #{gru_autoencoder_forward.1} parent=0 // pred_region
    _
  $region89: #{gru_autoencoder_forward.1} parent=0 // pred_fallthru
    _
  // Predicated region
  $region90: #{gru_autoencoder_forward.1} parent=0 // pred_check
    _
  $region91: #{gru_autoencoder_forward.1} parent=0 // pred_check_branch
    %117 = sbr.rel (0) target = $region93
  $region92: #{gru_autoencoder_forward.1} parent=0 // pred_region
    _
  $region93: #{gru_autoencoder_forward.1} parent=0 // pred_fallthru
    _
  // Predicated region
  $region94: #{gru_autoencoder_forward.1} parent=0 // pred_check
    _
  $region95: #{gru_autoencoder_forward.1} parent=0 // pred_check_branch
    %119 = sbr.rel (0) target = $region97
  $region96: #{gru_autoencoder_forward.1} parent=0 // pred_region
    _
  $region97: #{gru_autoencoder_forward.1} parent=0 // pred_fallthru
    _
  // Predicated region
  $region98: #{gru_autoencoder_forward.1} parent=0 // pred_check
    _
  $region99: #{gru_autoencoder_forward.1} parent=0 // pred_check_branch
    %121 = sbr.rel (0) target = $region101
  $region100: #{gru_autoencoder_forward.1} parent=0 // pred_region
    _
  $region101: #{gru_autoencoder_forward.1} parent=0 // pred_fallthru
    _
  // Predicated region
  $region102: #{gru_autoencoder_forward.1} parent=0 // pred_check
    _
  $region103: #{gru_autoencoder_forward.1} parent=0 // pred_check_branch
    %123 = sbr.rel (0) target = $region105
  $region104: #{gru_autoencoder_forward.1} parent=0 // pred_region
    _
  $region105: #{gru_autoencoder_forward.1} parent=0 // pred_fallthru
    _
  // Predicated region
  $region106: #{gru_autoencoder_forward.1} parent=0 // pred_check
    _
  $region107: #{gru_autoencoder_forward.1} parent=0 // pred_check_branch
    %125 = sbr.rel (0) target = $region109
  $region108: #{gru_autoencoder_forward.1} parent=0 // pred_region
    _
  $region109: #{gru_autoencoder_forward.1} parent=0 // pred_fallthru
    _
  // Predicated region
  $region110: #{gru_autoencoder_forward.1} parent=0 // pred_check
    _
  $region111: #{gru_autoencoder_forward.1} parent=0 // pred_check_branch
    %127 = sbr.rel (0) target = $region113
  $region112: #{gru_autoencoder_forward.1} parent=0 // pred_region
    _
  $region113: #{gru_autoencoder_forward.1} parent=0 // pred_fallthru
    _
  // Predicated region
  $region114: #{gru_autoencoder_forward.1} parent=0 // pred_check
    _
  $region115: #{gru_autoencoder_forward.1} parent=0 // pred_check_branch
    %129 = sbr.rel (0) target = $region117
  $region116: #{gru_autoencoder_forward.1} parent=0 // pred_region
    _
  $region117: #{gru_autoencoder_forward.1} parent=0 // pred_fallthru
    _
  // Predicated region
  $region118: #{gru_autoencoder_forward.1} parent=0 // pred_check
    _
  $region119: #{gru_autoencoder_forward.1} parent=0 // pred_check_branch
    %131 = sbr.rel (0) target = $region121
  $region120: #{gru_autoencoder_forward.1} parent=0 // pred_region
    _
  $region121: #{gru_autoencoder_forward.1} parent=0 // pred_fallthru
    _
  // Predicated region
  $region122: #{gru_autoencoder_forward.1} parent=0 // pred_check
    _
  $region123: #{gru_autoencoder_forward.1} parent=0 // pred_check_branch
    %133 = sbr.rel (0) target = $region125
  $region124: #{gru_autoencoder_forward.1} parent=0 // pred_region
    _
  $region125: #{gru_autoencoder_forward.1} parent=0 // pred_fallthru
    _
  // Predicated region
  $region126: #{gru_autoencoder_forward.1} parent=0 // pred_check
    _
  $region127: #{gru_autoencoder_forward.1} parent=0 // pred_check_branch
    %135 = sbr.rel (0) target = $region129
  $region128: #{gru_autoencoder_forward.1} parent=0 // pred_region
    _
  $region129: #{gru_autoencoder_forward.1} parent=0 // pred_fallthru
    _
  // Predicated region
  $region130: #{gru_autoencoder_forward.1} parent=0 // pred_check
    _
  $region131: #{gru_autoencoder_forward.1} parent=0 // pred_check_branch
    %137 = sbr.rel (0) target = $region133
  $region132: #{gru_autoencoder_forward.1} parent=0 // pred_region
    _
  $region133: #{gru_autoencoder_forward.1} parent=0 // pred_fallthru
    _
  %v139 = vld [vmem:[%s1] sm:$0xff]
  %v140 = vld [vmem:[%s1 + $0x8] sm:$0xff]
  %v141 = vld [vmem:[%s1 + $0x10] sm:$0xff]
  %v142 = vld [vmem:[%s1 + $0x18] sm:$0xff]
  %v143 = vld [vmem:[%s1 + $0x20] sm:$0xff]
  %v144 = vld [vmem:[%s1 + $0x28] sm:$0xff]
  %v145 = vld [vmem:[%s1 + $0x30] sm:$0xff]
  %v146 = vld [vmem:[%s1 + $0x38] sm:$0xff]
  %v147 = vpack.c.bf16 %v140, %v139
  %v148 = vpack.c.bf16 %v142, %v141
  %v149 = vpack.c.bf16 %v144, %v143
  %v150 = vpack.c.bf16 %v146, %v145
  %v151 = vld [vmem:[%s3] sm:$0xf]
  %v152 = vld [vmem:[%s3 + $0x4] sm:$0xf]
  %v153 = vld [vmem:[%s11] sm:$0x1]
  %v155 = vperm.slane %v153, 0
  %v159 = vunpack.c.l.b16 %v151
  %v160 = vunpack.c.l.b16 %v152
  %v161 = vpack.c.b16 %v160, %v159
  %vm163 = vcmask 130048
  %v165 = vsel %vm163, %v147, 0
  %v168 = vsel %vm163, %v148, 0
  %v171 = vsel %vm163, %v149, 0
  %v174 = vsel %vm163, %v150, 0
  %176 = vmatpush.bf16.msra.mxu0 0
  %177 = vmatpush.bf16.msra.mxu0 0
  %178 = vmatpush.bf16.msra.mxu0 0
  %179 = vmatpush.bf16.msra.mxu0 0
  %180 = vmatpush.bf16.msra.mxu0 0
  %181 = vmatpush.bf16.msra.mxu0 0
  %182 = vmatpush.bf16.msra.mxu0 0
  %183 = vmatpush.bf16.msra.mxu0 %v161
  %184 = vmatmul.bf16.gmra.mxu0 %v165
  %v185 = vpop.f32.mrf.mxu0
  %v186 = vadd.f32 %v155, %v185
  %v187 = vpop.f32.mrf.mxu0
  %v188 = vadd.f32 %v155, %v187
  %189 = vmatmul.bf16.gmra.mxu0 %v168
  %v190 = vpop.f32.mrf.mxu0
  %v191 = vadd.f32 %v155, %v190
  %v192 = vpop.f32.mrf.mxu0
  %v193 = vadd.f32 %v155, %v192
  %194 = vmatmul.bf16.gmra.mxu0 %v171
  %v195 = vpop.f32.mrf.mxu0
  %v196 = vadd.f32 %v155, %v195
  %v197 = vpop.f32.mrf.mxu0
  %v198 = vadd.f32 %v155, %v197
  %199 = vmatmul.bf16.gmra.mxu0 %v174
  %v200 = vpop.f32.mrf.mxu0
  %v201 = vadd.f32 %v155, %v200
  %v202 = vpop.f32.mrf.mxu0
  %v203 = vadd.f32 %v155, %v202
  %204 = vdwg.mxu0
  %vm205 = vcmask 523264
  %206 = vst.msk [vmem:[#allocation3] sm:$0xff] %vm205, %v186
  %207 = vst.msk [vmem:[#allocation3 + $0x8] sm:$0xff] %vm205, %v188
  %208 = vst.msk [vmem:[#allocation3 + $0x10] sm:$0xff] %vm205, %v191
  %209 = vst.msk [vmem:[#allocation3 + $0x18] sm:$0xff] %vm205, %v193
  %210 = vst.msk [vmem:[#allocation3 + $0x20] sm:$0xff] %vm205, %v196
  %211 = vst.msk [vmem:[#allocation3 + $0x28] sm:$0xff] %vm205, %v198
  %212 = vst.msk [vmem:[#allocation3 + $0x30] sm:$0xff] %vm205, %v201
  %213 = vst.msk [vmem:[#allocation3 + $0x38] sm:$0xff] %vm205, %v203
  %v214 = vld [vmem:[%s5] sm:$0xf]
  %v215 = vld [vmem:[%s5 + $0x4] sm:$0xf]
  %v216 = vld [vmem:[%s13] sm:$0x1]
  %v218 = vperm.slane %v216, 0
  %v222 = vunpack.c.l.b16 %v214
  %v223 = vunpack.c.l.b16 %v215
  %v224 = vpack.c.b16 %v223, %v222
  %226 = vmatpush.bf16.msra.mxu0 0
  %227 = vmatpush.bf16.msra.mxu0 0
  %228 = vmatpush.bf16.msra.mxu0 0
  %229 = vmatpush.bf16.msra.mxu0 0
  %230 = vmatpush.bf16.msra.mxu0 0
  %231 = vmatpush.bf16.msra.mxu0 0
  %232 = vmatpush.bf16.msra.mxu0 0
  %233 = vmatpush.bf16.msra.mxu0 %v224
  %234 = vmatmul.bf16.gmra.mxu0 %v165
  %v235 = vpop.f32.mrf.mxu0
  %v236 = vadd.f32 %v218, %v235
  %v237 = vpop.f32.mrf.mxu0
  %v238 = vadd.f32 %v218, %v237
  %239 = vmatmul.bf16.gmra.mxu0 %v168
  %v240 = vpop.f32.mrf.mxu0
  %v241 = vadd.f32 %v218, %v240
  %v242 = vpop.f32.mrf.mxu0
  %v243 = vadd.f32 %v218, %v242
  %244 = vmatmul.bf16.gmra.mxu0 %v171
  %v245 = vpop.f32.mrf.mxu0
  %v246 = vadd.f32 %v218, %v245
  %v247 = vpop.f32.mrf.mxu0
  %v248 = vadd.f32 %v218, %v247
  %249 = vmatmul.bf16.gmra.mxu0 %v174
  %v250 = vpop.f32.mrf.mxu0
  %v251 = vadd.f32 %v218, %v250
  %v252 = vpop.f32.mrf.mxu0
  %v253 = vadd.f32 %v218, %v252
  %254 = vdwg.mxu0
  %vm255 = vcmask 261120
  %256 = vst.msk [vmem:[#allocation4] sm:$0xff] %vm255, %v236
  %257 = vst.msk [vmem:[#allocation4 + $0x8] sm:$0xff] %vm255, %v238
  %258 = vst.msk [vmem:[#allocation4 + $0x10] sm:$0xff] %vm255, %v241
  %259 = vst.msk [vmem:[#allocation4 + $0x18] sm:$0xff] %vm255, %v243
  %260 = vst.msk [vmem:[#allocation4 + $0x20] sm:$0xff] %vm255, %v246
  %261 = vst.msk [vmem:[#allocation4 + $0x28] sm:$0xff] %vm255, %v248
  %262 = vst.msk [vmem:[#allocation4 + $0x30] sm:$0xff] %vm255, %v251
  %263 = vst.msk [vmem:[#allocation4 + $0x38] sm:$0xff] %vm255, %v253
  %v264 = vld [vmem:[%s7] sm:$0xf]
  %v265 = vld [vmem:[%s7 + $0x4] sm:$0xf]
  %v266 = vld [vmem:[%s7 + $0x8] sm:$0xf]
  %v267 = vld [vmem:[%s7 + $0xc] sm:$0xf]
  %v268 = vld [vmem:[%s9] sm:$0xf]
  %v269 = vld [vmem:[%s9 + $0x4] sm:$0xf]
  %v270 = vld [vmem:[%s9 + $0x8] sm:$0xf]
  %v271 = vld [vmem:[%s9 + $0xc] sm:$0xf]
  %v272 = vld [vmem:[%s15] sm:$0x1]
  %v274 = vperm.slane %v272, 0
  %v276 = vld [vmem:[#allocation3] sm:$0xff]
  %v277 = vld [vmem:[#allocation4] sm:$0xff]
  %v282 = vunpack.c.l.b16 %v264
  %v283 = vunpack.c.l.b16 %v265
  %v284 = vunpack.c.l.b16 %v266
  %v285 = vunpack.c.l.b16 %v267
  %v286 = vpack.c.b16 %v283, %v282
  %v287 = vpack.c.b16 %v285, %v284
  %v291 = vsel %vm255, 0, 0
  %293 = vmatpush.bf16.msra.mxu0 0
  %294 = vmatpush.bf16.msra.mxu0 0
  %295 = vmatpush.bf16.msra.mxu0 0
  %296 = vmatpush.bf16.msra.mxu0 0
  %297 = vmatpush.bf16.msra.mxu0 0
  %298 = vmatpush.bf16.msra.mxu0 0
  %299 = vmatpush.bf16.msra.mxu0 %v287
  %300 = vmatpush.bf16.msra.mxu0 %v286
  %301 = vmatmul.bf16.gmra.mxu0 %v291
  %v302 = vpop.f32.mrf.mxu0
  %v303 = vadd.f32 0.0, %v302
  %v304 = vpop.f32.mrf.mxu0
  %305 = vdwg.mxu0
  %v306 = vadd.f32 %v276, %v303
  %v307 = vxor.u32 %v306, 2147483648
  %v308 = vmul.f32 %v307, 1.442695
  %v309 = vpow.pop %v308
  %v310 = vadd.f32 %v309, 1.0
  %v311 = vrcp.pop %v310
  %v312 = vmul.f32 %v310, %v311
  %v313 = vsub.f32 1.0, %v312
  %v314 = vmul.f32 %v311, %v313
  %v315 = vadd.f32 %v311, %v314
  %vm316 = vweird.f32 %v310
  %vm317 = vweird.f32 %v311
  %vm318 = vmor %vm316, %vm317
  %v319 = vsel %vm318, %v311, %v315
  %v320 = vand.u32 2147483647, %v310
  %vm321 = vcmp.eq.f32.partialorder %v320, 8.507059e+37
  %v322 = vand.u32 %v310, 2147483648
  %v323 = vor.u32 1.1754944e-38, %v322
  %v324 = vsel %vm321, %v323, %v319
  %v325 = vmul.f32 1.0, %v324
  %v330 = vunpack.c.l.b16 %v268
  %v331 = vunpack.c.l.b16 %v269
  %v332 = vunpack.c.l.b16 %v270
  %v333 = vunpack.c.l.b16 %v271
  %v334 = vpack.c.b16 %v331, %v330
  %v335 = vpack.c.b16 %v333, %v332
  %338 = vmatpush.bf16.msra.mxu0 0
  %339 = vmatpush.bf16.msra.mxu0 0
  %340 = vmatpush.bf16.msra.mxu0 0
  %341 = vmatpush.bf16.msra.mxu0 0
  %342 = vmatpush.bf16.msra.mxu0 0
  %343 = vmatpush.bf16.msra.mxu0 0
  %344 = vmatpush.bf16.msra.mxu0 %v335
  %345 = vmatpush.bf16.msra.mxu0 %v334
  %346 = vmatmul.bf16.gmra.mxu0 %v291
  %v347 = vpop.f32.mrf.mxu0
  %v348 = vadd.f32 %v274, %v347
  %v349 = vpop.f32.mrf.mxu0
  %350 = vdwg.mxu0
  %v351 = vmul.f32 %v325, %v348
  %v352 = vadd.f32 %v277, %v351
  %v353 = vtanh.pop %v352
  %v354 = vsub.f32 0.0, %v353
  %356 = vrot.lane.b32.xlu0 %v354, 32
  %v357 = vpop.permute.xlu0 %356
  %v359 = vmul.f32 %v325, %v357
  %361 = vrot.lane.b32.xlu0 %v359, 96
  %v362 = vpop.permute.xlu0 %361
  %v364 = vadd.f32 %v353, %v362
  %365 = vst.msk [vmem:[#allocation2] sm:$0xff] %vm255, %v364
  %s366 = scalar_lea.vmem [#allocation3], 8
  %v367 = vld [vmem:[%s366] sm:$0xff]
  %s368 = scalar_lea.vmem [#allocation4], 8
  %v369 = vld [vmem:[%s368] sm:$0xff]
  %v370 = vpack.c.bf16 %v364, %v364
  %v372 = vsel %vm255, %v370, 0
  %374 = vmatpush.bf16.msra.mxu0 0
  %375 = vmatpush.bf16.msra.mxu0 0
  %376 = vmatpush.bf16.msra.mxu0 0
  %377 = vmatpush.bf16.msra.mxu0 0
  %378 = vmatpush.bf16.msra.mxu0 0
  %379 = vmatpush.bf16.msra.mxu0 0
  %380 = vmatpush.bf16.msra.mxu0 %v287
  %381 = vmatpush.bf16.msra.mxu0 %v286
  %382 = vmatmul.bf16.gmra.mxu0 %v372
  %v383 = vpop.f32.mrf.mxu0
  %v384 = vadd.f32 0.0, %v383
  %v385 = vpop.f32.mrf.mxu0
  %386 = vdwg.mxu0
  %v387 = vadd.f32 %v367, %v384
  %v388 = vxor.u32 %v387, 2147483648
  %v389 = vmul.f32 %v388, 1.442695
  %v390 = vpow.pop %v389
  %v391 = vadd.f32 %v390, 1.0
  %v392 = vrcp.pop %v391
  %v393 = vmul.f32 %v391, %v392
  %v394 = vsub.f32 1.0, %v393
  %v395 = vmul.f32 %v392, %v394
  %v396 = vadd.f32 %v392, %v395
  %vm397 = vweird.f32 %v391
  %vm398 = vweird.f32 %v392
  %vm399 = vmor %vm397, %vm398
  %v400 = vsel %vm399, %v392, %v396
  %v401 = vand.u32 2147483647, %v391
  %vm402 = vcmp.eq.f32.partialorder %v401, 8.507059e+37
  %v403 = vand.u32 %v391, 2147483648
  %v404 = vor.u32 1.1754944e-38, %v403
  %v405 = vsel %vm402, %v404, %v400
  %v406 = vmul.f32 1.0, %v405
  %407 = vmatpush.bf16.msra.mxu0 0
  %408 = vmatpush.bf16.msra.mxu0 0
  %409 = vmatpush.bf16.msra.mxu0 0
  %410 = vmatpush.bf16.msra.mxu0 0
  %411 = vmatpush.bf16.msra.mxu0 0
  %412 = vmatpush.bf16.msra.mxu0 0
  %413 = vmatpush.bf16.msra.mxu0 %v335
  %414 = vmatpush.bf16.msra.mxu0 %v334
  %415 = vmatmul.bf16.gmra.mxu0 %v372
  %v416 = vpop.f32.mrf.mxu0
  %v417 = vadd.f32 %v274, %v416
  %v418 = vpop.f32.mrf.mxu0
  %419 = vdwg.mxu0
  %v420 = vmul.f32 %v406, %v417
  %v421 = vadd.f32 %v369, %v420
  %v422 = vtanh.pop %v421
  %v423 = vsub.f32 %v364, %v422
  %425 = vrot.lane.b32.xlu0 %v423, 32
  %v426 = vpop.permute.xlu0 %425
  %v428 = vmul.f32 %v406, %v426
  %430 = vrot.lane.b32.xlu0 %v428, 96
  %v431 = vpop.permute.xlu0 %430
  %v433 = vadd.f32 %v422, %v431
  %s434 = scalar_lea.vmem [#allocation2], 8
  %435 = vst.msk [vmem:[%s434] sm:$0xff] %vm255, %v433
  %s436 = scalar_lea.vmem [#allocation3], 16
  %v437 = vld [vmem:[%s436] sm:$0xff]
  %s438 = scalar_lea.vmem [#allocation4], 16
  %v439 = vld [vmem:[%s438] sm:$0xff]
  %v440 = vpack.c.bf16 %v433, %v433
  %v442 = vsel %vm255, %v440, 0
  %444 = vmatpush.bf16.msra.mxu0 0
  %445 = vmatpush.bf16.msra.mxu0 0
  %446 = vmatpush.bf16.msra.mxu0 0
  %447 = vmatpush.bf16.msra.mxu0 0
  %448 = vmatpush.bf16.msra.mxu0 0
  %449 = vmatpush.bf16.msra.mxu0 0
  %450 = vmatpush.bf16.msra.mxu0 %v287
  %451 = vmatpush.bf16.msra.mxu0 %v286
  %452 = vmatmul.bf16.gmra.mxu0 %v442
  %v453 = vpop.f32.mrf.mxu0
  %v454 = vadd.f32 0.0, %v453
  %v455 = vpop.f32.mrf.mxu0
  %456 = vdwg.mxu0
  %v457 = vadd.f32 %v437, %v454
  %v458 = vxor.u32 %v457, 2147483648
  %v459 = vmul.f32 %v458, 1.442695
  %v460 = vpow.pop %v459
  %v461 = vadd.f32 %v460, 1.0
  %v462 = vrcp.pop %v461
  %v463 = vmul.f32 %v461, %v462
  %v464 = vsub.f32 1.0, %v463
  %v465 = vmul.f32 %v462, %v464
  %v466 = vadd.f32 %v462, %v465
  %vm467 = vweird.f32 %v461
  %vm468 = vweird.f32 %v462
  %vm469 = vmor %vm467, %vm468
  %v470 = vsel %vm469, %v462, %v466
  %v471 = vand.u32 2147483647, %v461
  %vm472 = vcmp.eq.f32.partialorder %v471, 8.507059e+37
  %v473 = vand.u32 %v461, 2147483648
  %v474 = vor.u32 1.1754944e-38, %v473
  %v475 = vsel %vm472, %v474, %v470
  %v476 = vmul.f32 1.0, %v475
  %477 = vmatpush.bf16.msra.mxu0 0
  %478 = vmatpush.bf16.msra.mxu0 0
  %479 = vmatpush.bf16.msra.mxu0 0
  %480 = vmatpush.bf16.msra.mxu0 0
  %481 = vmatpush.bf16.msra.mxu0 0
  %482 = vmatpush.bf16.msra.mxu0 0
  %483 = vmatpush.bf16.msra.mxu0 %v335
  %484 = vmatpush.bf16.msra.mxu0 %v334
  %485 = vmatmul.bf16.gmra.mxu0 %v442
  %v486 = vpop.f32.mrf.mxu0
  %v487 = vadd.f32 %v274, %v486
  %v488 = vpop.f32.mrf.mxu0
  %489 = vdwg.mxu0
  %v490 = vmul.f32 %v476, %v487
  %v491 = vadd.f32 %v439, %v490
  %v492 = vtanh.pop %v491
  %v493 = vsub.f32 %v433, %v492
  %495 = vrot.lane.b32.xlu0 %v493, 32
  %v496 = vpop.permute.xlu0 %495
  %v498 = vmul.f32 %v476, %v496
  %500 = vrot.lane.b32.xlu0 %v498, 96
  %v501 = vpop.permute.xlu0 %500
  %v503 = vadd.f32 %v492, %v501
  %s504 = scalar_lea.vmem [#allocation2], 16
  %505 = vst.msk [vmem:[%s504] sm:$0xff] %vm255, %v503
  %s506 = scalar_lea.vmem [#allocation3], 24
  %v507 = vld [vmem:[%s506] sm:$0xff]
  %s508 = scalar_lea.vmem [#allocation4], 24
  %v509 = vld [vmem:[%s508] sm:$0xff]
  %v510 = vpack.c.bf16 %v503, %v503
  %v512 = vsel %vm255, %v510, 0
  %514 = vmatpush.bf16.msra.mxu0 0
  %515 = vmatpush.bf16.msra.mxu0 0
  %516 = vmatpush.bf16.msra.mxu0 0
  %517 = vmatpush.bf16.msra.mxu0 0
  %518 = vmatpush.bf16.msra.mxu0 0
  %519 = vmatpush.bf16.msra.mxu0 0
  %520 = vmatpush.bf16.msra.mxu0 %v287
  %521 = vmatpush.bf16.msra.mxu0 %v286
  %522 = vmatmul.bf16.gmra.mxu0 %v512
  %v523 = vpop.f32.mrf.mxu0
  %v524 = vadd.f32 0.0, %v523
  %v525 = vpop.f32.mrf.mxu0
  %526 = vdwg.mxu0
  %v527 = vadd.f32 %v507, %v524
  %v528 = vxor.u32 %v527, 2147483648
  %v529 = vmul.f32 %v528, 1.442695
  %v530 = vpow.pop %v529
  %v531 = vadd.f32 %v530, 1.0
  %v532 = vrcp.pop %v531
  %v533 = vmul.f32 %v531, %v532
  %v534 = vsub.f32 1.0, %v533
  %v535 = vmul.f32 %v532, %v534
  %v536 = vadd.f32 %v532, %v535
  %vm537 = vweird.f32 %v531
  %vm538 = vweird.f32 %v532
  %vm539 = vmor %vm537, %vm538
  %v540 = vsel %vm539, %v532, %v536
  %v541 = vand.u32 2147483647, %v531
  %vm542 = vcmp.eq.f32.partialorder %v541, 8.507059e+37
  %v543 = vand.u32 %v531, 2147483648
  %v544 = vor.u32 1.1754944e-38, %v543
  %v545 = vsel %vm542, %v544, %v540
  %v546 = vmul.f32 1.0, %v545
  %547 = vmatpush.bf16.msra.mxu0 0
  %548 = vmatpush.bf16.msra.mxu0 0
  %549 = vmatpush.bf16.msra.mxu0 0
  %550 = vmatpush.bf16.msra.mxu0 0
  %551 = vmatpush.bf16.msra.mxu0 0
  %552 = vmatpush.bf16.msra.mxu0 0
  %553 = vmatpush.bf16.msra.mxu0 %v335
  %554 = vmatpush.bf16.msra.mxu0 %v334
  %555 = vmatmul.bf16.gmra.mxu0 %v512
  %v556 = vpop.f32.mrf.mxu0
  %v557 = vadd.f32 %v274, %v556
  %v558 = vpop.f32.mrf.mxu0
  %559 = vdwg.mxu0
  %v560 = vmul.f32 %v546, %v557
  %v561 = vadd.f32 %v509, %v560
  %v562 = vtanh.pop %v561
  %v563 = vsub.f32 %v503, %v562
  %565 = vrot.lane.b32.xlu0 %v563, 32
  %v566 = vpop.permute.xlu0 %565
  %v568 = vmul.f32 %v546, %v566
  %570 = vrot.lane.b32.xlu0 %v568, 96
  %v571 = vpop.permute.xlu0 %570
  %v573 = vadd.f32 %v562, %v571
  %s574 = scalar_lea.vmem [#allocation2], 24
  %575 = vst.msk [vmem:[%s574] sm:$0xff] %vm255, %v573
  %s576 = scalar_lea.vmem [#allocation3], 32
  %v577 = vld [vmem:[%s576] sm:$0xff]
  %s578 = scalar_lea.vmem [#allocation4], 32
  %v579 = vld [vmem:[%s578] sm:$0xff]
  %v580 = vpack.c.bf16 %v573, %v573
  %v582 = vsel %vm255, %v580, 0
  %584 = vmatpush.bf16.msra.mxu0 0
  %585 = vmatpush.bf16.msra.mxu0 0
  %586 = vmatpush.bf16.msra.mxu0 0
  %587 = vmatpush.bf16.msra.mxu0 0
  %588 = vmatpush.bf16.msra.mxu0 0
  %589 = vmatpush.bf16.msra.mxu0 0
  %590 = vmatpush.bf16.msra.mxu0 %v287
  %591 = vmatpush.bf16.msra.mxu0 %v286
  %592 = vmatmul.bf16.gmra.mxu0 %v582
  %v593 = vpop.f32.mrf.mxu0
  %v594 = vadd.f32 0.0, %v593
  %v595 = vpop.f32.mrf.mxu0
  %596 = vdwg.mxu0
  %v597 = vadd.f32 %v577, %v594
  %v598 = vxor.u32 %v597, 2147483648
  %v599 = vmul.f32 %v598, 1.442695
  %v600 = vpow.pop %v599
  %v601 = vadd.f32 %v600, 1.0
  %v602 = vrcp.pop %v601
  %v603 = vmul.f32 %v601, %v602
  %v604 = vsub.f32 1.0, %v603
  %v605 = vmul.f32 %v602, %v604
  %v606 = vadd.f32 %v602, %v605
  %vm607 = vweird.f32 %v601
  %vm608 = vweird.f32 %v602
  %vm609 = vmor %vm607, %vm608
  %v610 = vsel %vm609, %v602, %v606
  %v611 = vand.u32 2147483647, %v601
  %vm612 = vcmp.eq.f32.partialorder %v611, 8.507059e+37
  %v613 = vand.u32 %v601, 2147483648
  %v614 = vor.u32 1.1754944e-38, %v613
  %v615 = vsel %vm612, %v614, %v610
  %v616 = vmul.f32 1.0, %v615
  %617 = vmatpush.bf16.msra.mxu0 0
  %618 = vmatpush.bf16.msra.mxu0 0
  %619 = vmatpush.bf16.msra.mxu0 0
  %620 = vmatpush.bf16.msra.mxu0 0
  %621 = vmatpush.bf16.msra.mxu0 0
  %622 = vmatpush.bf16.msra.mxu0 0
  %623 = vmatpush.bf16.msra.mxu0 %v335
  %624 = vmatpush.bf16.msra.mxu0 %v334
  %625 = vmatmul.bf16.gmra.mxu0 %v582
  %v626 = vpop.f32.mrf.mxu0
  %v627 = vadd.f32 %v274, %v626
  %v628 = vpop.f32.mrf.mxu0
  %629 = vdwg.mxu0
  %v630 = vmul.f32 %v616, %v627
  %v631 = vadd.f32 %v579, %v630
  %v632 = vtanh.pop %v631
  %v633 = vsub.f32 %v573, %v632
  %635 = vrot.lane.b32.xlu0 %v633, 32
  %v636 = vpop.permute.xlu0 %635
  %v638 = vmul.f32 %v616, %v636
  %640 = vrot.lane.b32.xlu0 %v638, 96
  %v641 = vpop.permute.xlu0 %640
  %v643 = vadd.f32 %v632, %v641
  %s644 = scalar_lea.vmem [#allocation2], 32
  %645 = vst.msk [vmem:[%s644] sm:$0xff] %vm255, %v643
  %s646 = scalar_lea.vmem [#allocation3], 40
  %v647 = vld [vmem:[%s646] sm:$0xff]
  %s648 = scalar_lea.vmem [#allocation4], 40
  %v649 = vld [vmem:[%s648] sm:$0xff]
  %v650 = vpack.c.bf16 %v643, %v643
  %v652 = vsel %vm255, %v650, 0
  %654 = vmatpush.bf16.msra.mxu0 0
  %655 = vmatpush.bf16.msra.mxu0 0
  %656 = vmatpush.bf16.msra.mxu0 0
  %657 = vmatpush.bf16.msra.mxu0 0
  %658 = vmatpush.bf16.msra.mxu0 0
  %659 = vmatpush.bf16.msra.mxu0 0
  %660 = vmatpush.bf16.msra.mxu0 %v287
  %661 = vmatpush.bf16.msra.mxu0 %v286
  %662 = vmatmul.bf16.gmra.mxu0 %v652
  %v663 = vpop.f32.mrf.mxu0
  %v664 = vadd.f32 0.0, %v663
  %v665 = vpop.f32.mrf.mxu0
  %666 = vdwg.mxu0
  %v667 = vadd.f32 %v647, %v664
  %v668 = vxor.u32 %v667, 2147483648
  %v669 = vmul.f32 %v668, 1.442695
  %v670 = vpow.pop %v669
  %v671 = vadd.f32 %v670, 1.0
  %v672 = vrcp.pop %v671
  %v673 = vmul.f32 %v671, %v672
  %v674 = vsub.f32 1.0, %v673
  %v675 = vmul.f32 %v672, %v674
  %v676 = vadd.f32 %v672, %v675
  %vm677 = vweird.f32 %v671
  %vm678 = vweird.f32 %v672
  %vm679 = vmor %vm677, %vm678
  %v680 = vsel %vm679, %v672, %v676
  %v681 = vand.u32 2147483647, %v671
  %vm682 = vcmp.eq.f32.partialorder %v681, 8.507059e+37
  %v683 = vand.u32 %v671, 2147483648
  %v684 = vor.u32 1.1754944e-38, %v683
  %v685 = vsel %vm682, %v684, %v680
  %v686 = vmul.f32 1.0, %v685
  %687 = vmatpush.bf16.msra.mxu0 0
  %688 = vmatpush.bf16.msra.mxu0 0
  %689 = vmatpush.bf16.msra.mxu0 0
  %690 = vmatpush.bf16.msra.mxu0 0
  %691 = vmatpush.bf16.msra.mxu0 0
  %692 = vmatpush.bf16.msra.mxu0 0
  %693 = vmatpush.bf16.msra.mxu0 %v335
  %694 = vmatpush.bf16.msra.mxu0 %v334
  %695 = vmatmul.bf16.gmra.mxu0 %v652
  %v696 = vpop.f32.mrf.mxu0
  %v697 = vadd.f32 %v274, %v696
  %v698 = vpop.f32.mrf.mxu0
  %699 = vdwg.mxu0
  %v700 = vmul.f32 %v686, %v697
  %v701 = vadd.f32 %v649, %v700
  %v702 = vtanh.pop %v701
  %v703 = vsub.f32 %v643, %v702
  %705 = vrot.lane.b32.xlu0 %v703, 32
  %v706 = vpop.permute.xlu0 %705
  %v708 = vmul.f32 %v686, %v706
  %710 = vrot.lane.b32.xlu0 %v708, 96
  %v711 = vpop.permute.xlu0 %710
  %v713 = vadd.f32 %v702, %v711
  %s714 = scalar_lea.vmem [#allocation2], 40
  %715 = vst.msk [vmem:[%s714] sm:$0xff] %vm255, %v713
  %s716 = scalar_lea.vmem [#allocation3], 48
  %v717 = vld [vmem:[%s716] sm:$0xff]
  %s718 = scalar_lea.vmem [#allocation4], 48
  %v719 = vld [vmem:[%s718] sm:$0xff]
  %v720 = vpack.c.bf16 %v713, %v713
  %v722 = vsel %vm255, %v720, 0
  %724 = vmatpush.bf16.msra.mxu0 0
  %725 = vmatpush.bf16.msra.mxu0 0
  %726 = vmatpush.bf16.msra.mxu0 0
  %727 = vmatpush.bf16.msra.mxu0 0
  %728 = vmatpush.bf16.msra.mxu0 0
  %729 = vmatpush.bf16.msra.mxu0 0
  %730 = vmatpush.bf16.msra.mxu0 %v287
  %731 = vmatpush.bf16.msra.mxu0 %v286
  %732 = vmatmul.bf16.gmra.mxu0 %v722
  %v733 = vpop.f32.mrf.mxu0
  %v734 = vadd.f32 0.0, %v733
  %v735 = vpop.f32.mrf.mxu0
  %736 = vdwg.mxu0
  %v737 = vadd.f32 %v717, %v734
  %v738 = vxor.u32 %v737, 2147483648
  %v739 = vmul.f32 %v738, 1.442695
  %v740 = vpow.pop %v739
  %v741 = vadd.f32 %v740, 1.0
  %v742 = vrcp.pop %v741
  %v743 = vmul.f32 %v741, %v742
  %v744 = vsub.f32 1.0, %v743
  %v745 = vmul.f32 %v742, %v744
  %v746 = vadd.f32 %v742, %v745
  %vm747 = vweird.f32 %v741
  %vm748 = vweird.f32 %v742
  %vm749 = vmor %vm747, %vm748
  %v750 = vsel %vm749, %v742, %v746
  %v751 = vand.u32 2147483647, %v741
  %vm752 = vcmp.eq.f32.partialorder %v751, 8.507059e+37
  %v753 = vand.u32 %v741, 2147483648
  %v754 = vor.u32 1.1754944e-38, %v753
  %v755 = vsel %vm752, %v754, %v750
  %v756 = vmul.f32 1.0, %v755
  %757 = vmatpush.bf16.msra.mxu0 0
  %758 = vmatpush.bf16.msra.mxu0 0
  %759 = vmatpush.bf16.msra.mxu0 0
  %760 = vmatpush.bf16.msra.mxu0 0
  %761 = vmatpush.bf16.msra.mxu0 0
  %762 = vmatpush.bf16.msra.mxu0 0
  %763 = vmatpush.bf16.msra.mxu0 %v335
  %764 = vmatpush.bf16.msra.mxu0 %v334
  %765 = vmatmul.bf16.gmra.mxu0 %v722
  %v766 = vpop.f32.mrf.mxu0
  %v767 = vadd.f32 %v274, %v766
  %v768 = vpop.f32.mrf.mxu0
  %769 = vdwg.mxu0
  %v770 = vmul.f32 %v756, %v767
  %v771 = vadd.f32 %v719, %v770
  %v772 = vtanh.pop %v771
  %v773 = vsub.f32 %v713, %v772
  %775 = vrot.lane.b32.xlu0 %v773, 32
  %v776 = vpop.permute.xlu0 %775
  %v778 = vmul.f32 %v756, %v776
  %780 = vrot.lane.b32.xlu0 %v778, 96
  %v781 = vpop.permute.xlu0 %780
  %v783 = vadd.f32 %v772, %v781
  %s784 = scalar_lea.vmem [#allocation2], 48
  %785 = vst.msk [vmem:[%s784] sm:$0xff] %vm255, %v783
  %s786 = scalar_lea.vmem [#allocation3], 56
  %v787 = vld [vmem:[%s786] sm:$0xff]
  %s788 = scalar_lea.vmem [#allocation4], 56
  %v789 = vld [vmem:[%s788] sm:$0xff]
  %v790 = vpack.c.bf16 %v783, %v783
  %v792 = vsel %vm255, %v790, 0
  %794 = vmatpush.bf16.msra.mxu0 0
  %795 = vmatpush.bf16.msra.mxu0 0
  %796 = vmatpush.bf16.msra.mxu0 0
  %797 = vmatpush.bf16.msra.mxu0 0
  %798 = vmatpush.bf16.msra.mxu0 0
  %799 = vmatpush.bf16.msra.mxu0 0
  %800 = vmatpush.bf16.msra.mxu0 %v287
  %801 = vmatpush.bf16.msra.mxu0 %v286
  %802 = vmatmul.bf16.gmra.mxu0 %v792
  %v803 = vpop.f32.mrf.mxu0
  %v804 = vadd.f32 0.0, %v803
  %v805 = vpop.f32.mrf.mxu0
  %806 = vdwg.mxu0
  %v807 = vadd.f32 %v787, %v804
  %v808 = vxor.u32 %v807, 2147483648
  %v809 = vmul.f32 %v808, 1.442695
  %v810 = vpow.pop %v809
  %v811 = vadd.f32 %v810, 1.0
  %v812 = vrcp.pop %v811
  %v813 = vmul.f32 %v811, %v812
  %v814 = vsub.f32 1.0, %v813
  %v815 = vmul.f32 %v812, %v814
  %v816 = vadd.f32 %v812, %v815
  %vm817 = vweird.f32 %v811
  %vm818 = vweird.f32 %v812
  %vm819 = vmor %vm817, %vm818
  %v820 = vsel %vm819, %v812, %v816
  %v821 = vand.u32 2147483647, %v811
  %vm822 = vcmp.eq.f32.partialorder %v821, 8.507059e+37
  %v823 = vand.u32 %v811, 2147483648
  %v824 = vor.u32 1.1754944e-38, %v823
  %v825 = vsel %vm822, %v824, %v820
  %v826 = vmul.f32 1.0, %v825
  %827 = vmatpush.bf16.msra.mxu0 0
  %828 = vmatpush.bf16.msra.mxu0 0
  %829 = vmatpush.bf16.msra.mxu0 0
  %830 = vmatpush.bf16.msra.mxu0 0
  %831 = vmatpush.bf16.msra.mxu0 0
  %832 = vmatpush.bf16.msra.mxu0 0
  %833 = vmatpush.bf16.msra.mxu0 %v335
  %834 = vmatpush.bf16.msra.mxu0 %v334
  %835 = vmatmul.bf16.gmra.mxu0 %v792
  %v836 = vpop.f32.mrf.mxu0
  %v837 = vadd.f32 %v274, %v836
  %v838 = vpop.f32.mrf.mxu0
  %839 = vdwg.mxu0
  %v840 = vmul.f32 %v826, %v837
  %v841 = vadd.f32 %v789, %v840
  %v842 = vtanh.pop %v841
  %v843 = vsub.f32 %v783, %v842
  %845 = vrot.lane.b32.xlu0 %v843, 32
  %v846 = vpop.permute.xlu0 %845
  %v848 = vmul.f32 %v826, %v846
  %850 = vrot.lane.b32.xlu0 %v848, 96
  %v851 = vpop.permute.xlu0 %850
  %v853 = vadd.f32 %v842, %v851
  %s854 = scalar_lea.vmem [#allocation2], 56
  %855 = vst.msk [vmem:[%s854] sm:$0xff] %vm255, %v853
  %v856 = vld [vmem:[#allocation2] sm:$0xff]
  %v857 = vld [vmem:[#allocation2 + $0x8] sm:$0xff]
  %v858 = vld [vmem:[#allocation2 + $0x10] sm:$0xff]
  %v859 = vld [vmem:[#allocation2 + $0x18] sm:$0xff]
  %v860 = vld [vmem:[#allocation2 + $0x20] sm:$0xff]
  %v861 = vld [vmem:[#allocation2 + $0x28] sm:$0xff]
  %v862 = vld [vmem:[#allocation2 + $0x30] sm:$0xff]
  %v863 = vld [vmem:[#allocation2 + $0x38] sm:$0xff]
  %v864 = vpack.c.bf16 %v857, %v856
  %v865 = vpack.c.bf16 %v859, %v858
  %v866 = vpack.c.bf16 %v861, %v860
  %v867 = vpack.c.bf16 %v863, %v862
  %v868 = vld [vmem:[%s17] sm:$0xf]
  %v869 = vld [vmem:[%s17 + $0x4] sm:$0xf]
  %v870 = vld [vmem:[%s17 + $0x8] sm:$0xf]
  %v871 = vld [vmem:[%s17 + $0xc] sm:$0xf]
  %v872 = vld [vmem:[%s25] sm:$0x1]
  %v874 = vperm.slane %v872, 0
  %v880 = vunpack.c.l.b16 %v868
  %v881 = vunpack.c.l.b16 %v869
  %v882 = vunpack.c.l.b16 %v870
  %v883 = vunpack.c.l.b16 %v871
  %v884 = vpack.c.b16 %v881, %v880
  %v885 = vpack.c.b16 %v883, %v882
  %v889 = vsel %vm255, %v864, 0
  %v892 = vsel %vm255, %v865, 0
  %v895 = vsel %vm255, %v866, 0
  %v898 = vsel %vm255, %v867, 0
  %900 = vmatpush.bf16.msra.mxu0 0
  %901 = vmatpush.bf16.msra.mxu0 0
  %902 = vmatpush.bf16.msra.mxu0 0
  %903 = vmatpush.bf16.msra.mxu0 0
  %904 = vmatpush.bf16.msra.mxu0 0
  %905 = vmatpush.bf16.msra.mxu0 0
  %906 = vmatpush.bf16.msra.mxu0 %v885
  %907 = vmatpush.bf16.msra.mxu0 %v884
  %908 = vmatmul.bf16.gmra.mxu0 %v889
  %v909 = vpop.f32.mrf.mxu0
  %v910 = vadd.f32 %v874, %v909
  %v911 = vpop.f32.mrf.mxu0
  %v912 = vadd.f32 %v874, %v911
  %913 = vmatmul.bf16.gmra.mxu0 %v892
  %v914 = vpop.f32.mrf.mxu0
  %v915 = vadd.f32 %v874, %v914
  %v916 = vpop.f32.mrf.mxu0
  %v917 = vadd.f32 %v874, %v916
  %918 = vmatmul.bf16.gmra.mxu0 %v895
  %v919 = vpop.f32.mrf.mxu0
  %v920 = vadd.f32 %v874, %v919
  %v921 = vpop.f32.mrf.mxu0
  %v922 = vadd.f32 %v874, %v921
  %923 = vmatmul.bf16.gmra.mxu0 %v898
  %v924 = vpop.f32.mrf.mxu0
  %v925 = vadd.f32 %v874, %v924
  %v926 = vpop.f32.mrf.mxu0
  %v927 = vadd.f32 %v874, %v926
  %928 = vdwg.mxu0
  %929 = vst.msk [vmem:[#allocation3] sm:$0xff] %vm205, %v910
  %930 = vst.msk [vmem:[#allocation3 + $0x8] sm:$0xff] %vm205, %v912
  %931 = vst.msk [vmem:[#allocation3 + $0x10] sm:$0xff] %vm205, %v915
  %932 = vst.msk [vmem:[#allocation3 + $0x18] sm:$0xff] %vm205, %v917
  %933 = vst.msk [vmem:[#allocation3 + $0x20] sm:$0xff] %vm205, %v920
  %934 = vst.msk [vmem:[#allocation3 + $0x28] sm:$0xff] %vm205, %v922
  %935 = vst.msk [vmem:[#allocation3 + $0x30] sm:$0xff] %vm205, %v925
  %936 = vst.msk [vmem:[#allocation3 + $0x38] sm:$0xff] %vm205, %v927
  %v937 = vld [vmem:[%s19] sm:$0xf]
  %v938 = vld [vmem:[%s19 + $0x4] sm:$0xf]
  %v939 = vld [vmem:[%s19 + $0x8] sm:$0xf]
  %v940 = vld [vmem:[%s19 + $0xc] sm:$0xf]
  %v941 = vld [vmem:[%s27] sm:$0x1]
  %v943 = vperm.slane %v941, 0
  %v949 = vunpack.c.l.b16 %v937
  %v950 = vunpack.c.l.b16 %v938
  %v951 = vunpack.c.l.b16 %v939
  %v952 = vunpack.c.l.b16 %v940
  %v953 = vpack.c.b16 %v950, %v949
  %v954 = vpack.c.b16 %v952, %v951
  %957 = vmatpush.bf16.msra.mxu0 0
  %958 = vmatpush.bf16.msra.mxu0 0
  %959 = vmatpush.bf16.msra.mxu0 0
  %960 = vmatpush.bf16.msra.mxu0 0
  %961 = vmatpush.bf16.msra.mxu0 0
  %962 = vmatpush.bf16.msra.mxu0 0
  %963 = vmatpush.bf16.msra.mxu0 %v954
  %964 = vmatpush.bf16.msra.mxu0 %v953
  %965 = vmatmul.bf16.gmra.mxu0 %v889
  %v966 = vpop.f32.mrf.mxu0
  %v967 = vadd.f32 %v943, %v966
  %v968 = vpop.f32.mrf.mxu0
  %v969 = vadd.f32 %v943, %v968
  %970 = vmatmul.bf16.gmra.mxu0 %v892
  %v971 = vpop.f32.mrf.mxu0
  %v972 = vadd.f32 %v943, %v971
  %v973 = vpop.f32.mrf.mxu0
  %v974 = vadd.f32 %v943, %v973
  %975 = vmatmul.bf16.gmra.mxu0 %v895
  %v976 = vpop.f32.mrf.mxu0
  %v977 = vadd.f32 %v943, %v976
  %v978 = vpop.f32.mrf.mxu0
  %v979 = vadd.f32 %v943, %v978
  %980 = vmatmul.bf16.gmra.mxu0 %v898
  %v981 = vpop.f32.mrf.mxu0
  %v982 = vadd.f32 %v943, %v981
  %v983 = vpop.f32.mrf.mxu0
  %v984 = vadd.f32 %v943, %v983
  %985 = vdwg.mxu0
  %986 = vst.msk [vmem:[#allocation4] sm:$0xff] %vm255, %v967
  %987 = vst.msk [vmem:[#allocation4 + $0x8] sm:$0xff] %vm255, %v969
  %988 = vst.msk [vmem:[#allocation4 + $0x10] sm:$0xff] %vm255, %v972
  %989 = vst.msk [vmem:[#allocation4 + $0x18] sm:$0xff] %vm255, %v974
  %990 = vst.msk [vmem:[#allocation4 + $0x20] sm:$0xff] %vm255, %v977
  %991 = vst.msk [vmem:[#allocation4 + $0x28] sm:$0xff] %vm255, %v979
  %992 = vst.msk [vmem:[#allocation4 + $0x30] sm:$0xff] %vm255, %v982
  %993 = vst.msk [vmem:[#allocation4 + $0x38] sm:$0xff] %vm255, %v984
  %v994 = vld [vmem:[%s21] sm:$0xf]
  %v995 = vld [vmem:[%s21 + $0x4] sm:$0xf]
  %v996 = vld [vmem:[%s21 + $0x8] sm:$0xf]
  %v997 = vld [vmem:[%s21 + $0xc] sm:$0xf]
  %v998 = vld [vmem:[%s23] sm:$0xf]
  %v999 = vld [vmem:[%s23 + $0x4] sm:$0xf]
  %v1000 = vld [vmem:[%s23 + $0x8] sm:$0xf]
  %v1001 = vld [vmem:[%s23 + $0xc] sm:$0xf]
  %v1002 = vld [vmem:[%s29] sm:$0x1]
  %v1004 = vperm.slane %v1002, 0
  %v1006 = vld [vmem:[#allocation3] sm:$0xff]
  %v1007 = vld [vmem:[#allocation4] sm:$0xff]
  %v1012 = vunpack.c.l.b16 %v994
  %v1013 = vunpack.c.l.b16 %v995
  %v1014 = vunpack.c.l.b16 %v996
  %v1015 = vunpack.c.l.b16 %v997
  %v1016 = vpack.c.b16 %v1013, %v1012
  %v1017 = vpack.c.b16 %v1015, %v1014
  %1020 = vmatpush.bf16.msra.mxu0 0
  %1021 = vmatpush.bf16.msra.mxu0 0
  %1022 = vmatpush.bf16.msra.mxu0 0
  %1023 = vmatpush.bf16.msra.mxu0 0
  %1024 = vmatpush.bf16.msra.mxu0 0
  %1025 = vmatpush.bf16.msra.mxu0 0
  %1026 = vmatpush.bf16.msra.mxu0 %v1017
  %1027 = vmatpush.bf16.msra.mxu0 %v1016
  %1028 = vmatmul.bf16.gmra.mxu0 %v291
  %v1029 = vpop.f32.mrf.mxu0
  %v1030 = vadd.f32 0.0, %v1029
  %v1031 = vpop.f32.mrf.mxu0
  %1032 = vdwg.mxu0
  %v1033 = vadd.f32 %v1006, %v1030
  %v1034 = vxor.u32 %v1033, 2147483648
  %v1035 = vmul.f32 %v1034, 1.442695
  %v1036 = vpow.pop %v1035
  %v1037 = vadd.f32 %v1036, 1.0
  %v1038 = vrcp.pop %v1037
  %v1039 = vmul.f32 %v1037, %v1038
  %v1040 = vsub.f32 1.0, %v1039
  %v1041 = vmul.f32 %v1038, %v1040
  %v1042 = vadd.f32 %v1038, %v1041
  %vm1043 = vweird.f32 %v1037
  %vm1044 = vweird.f32 %v1038
  %vm1045 = vmor %vm1043, %vm1044
  %v1046 = vsel %vm1045, %v1038, %v1042
  %v1047 = vand.u32 2147483647, %v1037
  %vm1048 = vcmp.eq.f32.partialorder %v1047, 8.507059e+37
  %v1049 = vand.u32 %v1037, 2147483648
  %v1050 = vor.u32 1.1754944e-38, %v1049
  %v1051 = vsel %vm1048, %v1050, %v1046
  %v1052 = vmul.f32 1.0, %v1051
  %v1057 = vunpack.c.l.b16 %v998
  %v1058 = vunpack.c.l.b16 %v999
  %v1059 = vunpack.c.l.b16 %v1000
  %v1060 = vunpack.c.l.b16 %v1001
  %v1061 = vpack.c.b16 %v1058, %v1057
  %v1062 = vpack.c.b16 %v1060, %v1059
  %1065 = vmatpush.bf16.msra.mxu0 0
  %1066 = vmatpush.bf16.msra.mxu0 0
  %1067 = vmatpush.bf16.msra.mxu0 0
  %1068 = vmatpush.bf16.msra.mxu0 0
  %1069 = vmatpush.bf16.msra.mxu0 0
  %1070 = vmatpush.bf16.msra.mxu0 0
  %1071 = vmatpush.bf16.msra.mxu0 %v1062
  %1072 = vmatpush.bf16.msra.mxu0 %v1061
  %1073 = vmatmul.bf16.gmra.mxu0 %v291
  %v1074 = vpop.f32.mrf.mxu0
  %v1075 = vadd.f32 %v1004, %v1074
  %v1076 = vpop.f32.mrf.mxu0
  %1077 = vdwg.mxu0
  %v1078 = vmul.f32 %v1052, %v1075
  %v1079 = vadd.f32 %v1007, %v1078
  %v1080 = vtanh.pop %v1079
  %v1081 = vsub.f32 0.0, %v1080
  %1083 = vrot.lane.b32.xlu0 %v1081, 32
  %v1084 = vpop.permute.xlu0 %1083
  %v1086 = vmul.f32 %v1052, %v1084
  %1088 = vrot.lane.b32.xlu0 %v1086, 96
  %v1089 = vpop.permute.xlu0 %1088
  %v1091 = vadd.f32 %v1080, %v1089
  %1092 = vst.msk [vmem:[#allocation2] sm:$0xff] %vm255, %v1091
  %v1093 = vld [vmem:[%s366] sm:$0xff]
  %v1094 = vld [vmem:[%s368] sm:$0xff]
  %v1095 = vpack.c.bf16 %v1091, %v1091
  %v1097 = vsel %vm255, %v1095, 0
  %1099 = vmatpush.bf16.msra.mxu0 0
  %1100 = vmatpush.bf16.msra.mxu0 0
  %1101 = vmatpush.bf16.msra.mxu0 0
  %1102 = vmatpush.bf16.msra.mxu0 0
  %1103 = vmatpush.bf16.msra.mxu0 0
  %1104 = vmatpush.bf16.msra.mxu0 0
  %1105 = vmatpush.bf16.msra.mxu0 %v1017
  %1106 = vmatpush.bf16.msra.mxu0 %v1016
  %1107 = vmatmul.bf16.gmra.mxu0 %v1097
  %v1108 = vpop.f32.mrf.mxu0
  %v1109 = vadd.f32 0.0, %v1108
  %v1110 = vpop.f32.mrf.mxu0
  %1111 = vdwg.mxu0
  %v1112 = vadd.f32 %v1093, %v1109
  %v1113 = vxor.u32 %v1112, 2147483648
  %v1114 = vmul.f32 %v1113, 1.442695
  %v1115 = vpow.pop %v1114
  %v1116 = vadd.f32 %v1115, 1.0
  %v1117 = vrcp.pop %v1116
  %v1118 = vmul.f32 %v1116, %v1117
  %v1119 = vsub.f32 1.0, %v1118
  %v1120 = vmul.f32 %v1117, %v1119
  %v1121 = vadd.f32 %v1117, %v1120
  %vm1122 = vweird.f32 %v1116
  %vm1123 = vweird.f32 %v1117
  %vm1124 = vmor %vm1122, %vm1123
  %v1125 = vsel %vm1124, %v1117, %v1121
  %v1126 = vand.u32 2147483647, %v1116
  %vm1127 = vcmp.eq.f32.partialorder %v1126, 8.507059e+37
  %v1128 = vand.u32 %v1116, 2147483648
  %v1129 = vor.u32 1.1754944e-38, %v1128
  %v1130 = vsel %vm1127, %v1129, %v1125
  %v1131 = vmul.f32 1.0, %v1130
  %1132 = vmatpush.bf16.msra.mxu0 0
  %1133 = vmatpush.bf16.msra.mxu0 0
  %1134 = vmatpush.bf16.msra.mxu0 0
  %1135 = vmatpush.bf16.msra.mxu0 0
  %1136 = vmatpush.bf16.msra.mxu0 0
  %1137 = vmatpush.bf16.msra.mxu0 0
  %1138 = vmatpush.bf16.msra.mxu0 %v1062
  %1139 = vmatpush.bf16.msra.mxu0 %v1061
  %1140 = vmatmul.bf16.gmra.mxu0 %v1097
  %v1141 = vpop.f32.mrf.mxu0
  %v1142 = vadd.f32 %v1004, %v1141
  %v1143 = vpop.f32.mrf.mxu0
  %1144 = vdwg.mxu0
  %v1145 = vmul.f32 %v1131, %v1142
  %v1146 = vadd.f32 %v1094, %v1145
  %v1147 = vtanh.pop %v1146
  %v1148 = vsub.f32 %v1091, %v1147
  %1150 = vrot.lane.b32.xlu0 %v1148, 32
  %v1151 = vpop.permute.xlu0 %1150
  %v1153 = vmul.f32 %v1131, %v1151
  %1155 = vrot.lane.b32.xlu0 %v1153, 96
  %v1156 = vpop.permute.xlu0 %1155
  %v1158 = vadd.f32 %v1147, %v1156
  %1159 = vst.msk [vmem:[%s434] sm:$0xff] %vm255, %v1158
  %v1160 = vld [vmem:[%s436] sm:$0xff]
  %v1161 = vld [vmem:[%s438] sm:$0xff]
  %v1162 = vpack.c.bf16 %v1158, %v1158
  %v1164 = vsel %vm255, %v1162, 0
  %1166 = vmatpush.bf16.msra.mxu0 0
  %1167 = vmatpush.bf16.msra.mxu0 0
  %1168 = vmatpush.bf16.msra.mxu0 0
  %1169 = vmatpush.bf16.msra.mxu0 0
  %1170 = vmatpush.bf16.msra.mxu0 0
  %1171 = vmatpush.bf16.msra.mxu0 0
  %1172 = vmatpush.bf16.msra.mxu0 %v1017
  %1173 = vmatpush.bf16.msra.mxu0 %v1016
  %1174 = vmatmul.bf16.gmra.mxu0 %v1164
  %v1175 = vpop.f32.mrf.mxu0
  %v1176 = vadd.f32 0.0, %v1175
  %v1177 = vpop.f32.mrf.mxu0
  %1178 = vdwg.mxu0
  %v1179 = vadd.f32 %v1160, %v1176
  %v1180 = vxor.u32 %v1179, 2147483648
  %v1181 = vmul.f32 %v1180, 1.442695
  %v1182 = vpow.pop %v1181
  %v1183 = vadd.f32 %v1182, 1.0
  %v1184 = vrcp.pop %v1183
  %v1185 = vmul.f32 %v1183, %v1184
  %v1186 = vsub.f32 1.0, %v1185
  %v1187 = vmul.f32 %v1184, %v1186
  %v1188 = vadd.f32 %v1184, %v1187
  %vm1189 = vweird.f32 %v1183
  %vm1190 = vweird.f32 %v1184
  %vm1191 = vmor %vm1189, %vm1190
  %v1192 = vsel %vm1191, %v1184, %v1188
  %v1193 = vand.u32 2147483647, %v1183
  %vm1194 = vcmp.eq.f32.partialorder %v1193, 8.507059e+37
  %v1195 = vand.u32 %v1183, 2147483648
  %v1196 = vor.u32 1.1754944e-38, %v1195
  %v1197 = vsel %vm1194, %v1196, %v1192
  %v1198 = vmul.f32 1.0, %v1197
  %1199 = vmatpush.bf16.msra.mxu0 0
  %1200 = vmatpush.bf16.msra.mxu0 0
  %1201 = vmatpush.bf16.msra.mxu0 0
  %1202 = vmatpush.bf16.msra.mxu0 0
  %1203 = vmatpush.bf16.msra.mxu0 0
  %1204 = vmatpush.bf16.msra.mxu0 0
  %1205 = vmatpush.bf16.msra.mxu0 %v1062
  %1206 = vmatpush.bf16.msra.mxu0 %v1061
  %1207 = vmatmul.bf16.gmra.mxu0 %v1164
  %v1208 = vpop.f32.mrf.mxu0
  %v1209 = vadd.f32 %v1004, %v1208
  %v1210 = vpop.f32.mrf.mxu0
  %1211 = vdwg.mxu0
  %v1212 = vmul.f32 %v1198, %v1209
  %v1213 = vadd.f32 %v1161, %v1212
  %v1214 = vtanh.pop %v1213
  %v1215 = vsub.f32 %v1158, %v1214
  %1217 = vrot.lane.b32.xlu0 %v1215, 32
  %v1218 = vpop.permute.xlu0 %1217
  %v1220 = vmul.f32 %v1198, %v1218
  %1222 = vrot.lane.b32.xlu0 %v1220, 96
  %v1223 = vpop.permute.xlu0 %1222
  %v1225 = vadd.f32 %v1214, %v1223
  %1226 = vst.msk [vmem:[%s504] sm:$0xff] %vm255, %v1225
  %v1227 = vld [vmem:[%s506] sm:$0xff]
  %v1228 = vld [vmem:[%s508] sm:$0xff]
  %v1229 = vpack.c.bf16 %v1225, %v1225
  %v1231 = vsel %vm255, %v1229, 0
  %1233 = vmatpush.bf16.msra.mxu0 0
  %1234 = vmatpush.bf16.msra.mxu0 0
  %1235 = vmatpush.bf16.msra.mxu0 0
  %1236 = vmatpush.bf16.msra.mxu0 0
  %1237 = vmatpush.bf16.msra.mxu0 0
  %1238 = vmatpush.bf16.msra.mxu0 0
  %1239 = vmatpush.bf16.msra.mxu0 %v1017
  %1240 = vmatpush.bf16.msra.mxu0 %v1016
  %1241 = vmatmul.bf16.gmra.mxu0 %v1231
  %v1242 = vpop.f32.mrf.mxu0
  %v1243 = vadd.f32 0.0, %v1242
  %v1244 = vpop.f32.mrf.mxu0
  %1245 = vdwg.mxu0
  %v1246 = vadd.f32 %v1227, %v1243
  %v1247 = vxor.u32 %v1246, 2147483648
  %v1248 = vmul.f32 %v1247, 1.442695
  %v1249 = vpow.pop %v1248
  %v1250 = vadd.f32 %v1249, 1.0
  %v1251 = vrcp.pop %v1250
  %v1252 = vmul.f32 %v1250, %v1251
  %v1253 = vsub.f32 1.0, %v1252
  %v1254 = vmul.f32 %v1251, %v1253
  %v1255 = vadd.f32 %v1251, %v1254
  %vm1256 = vweird.f32 %v1250
  %vm1257 = vweird.f32 %v1251
  %vm1258 = vmor %vm1256, %vm1257
  %v1259 = vsel %vm1258, %v1251, %v1255
  %v1260 = vand.u32 2147483647, %v1250
  %vm1261 = vcmp.eq.f32.partialorder %v1260, 8.507059e+37
  %v1262 = vand.u32 %v1250, 2147483648
  %v1263 = vor.u32 1.1754944e-38, %v1262
  %v1264 = vsel %vm1261, %v1263, %v1259
  %v1265 = vmul.f32 1.0, %v1264
  %1266 = vmatpush.bf16.msra.mxu0 0
  %1267 = vmatpush.bf16.msra.mxu0 0
  %1268 = vmatpush.bf16.msra.mxu0 0
  %1269 = vmatpush.bf16.msra.mxu0 0
  %1270 = vmatpush.bf16.msra.mxu0 0
  %1271 = vmatpush.bf16.msra.mxu0 0
  %1272 = vmatpush.bf16.msra.mxu0 %v1062
  %1273 = vmatpush.bf16.msra.mxu0 %v1061
  %1274 = vmatmul.bf16.gmra.mxu0 %v1231
  %v1275 = vpop.f32.mrf.mxu0
  %v1276 = vadd.f32 %v1004, %v1275
  %v1277 = vpop.f32.mrf.mxu0
  %1278 = vdwg.mxu0
  %v1279 = vmul.f32 %v1265, %v1276
  %v1280 = vadd.f32 %v1228, %v1279
  %v1281 = vtanh.pop %v1280
  %v1282 = vsub.f32 %v1225, %v1281
  %1284 = vrot.lane.b32.xlu0 %v1282, 32
  %v1285 = vpop.permute.xlu0 %1284
  %v1287 = vmul.f32 %v1265, %v1285
  %1289 = vrot.lane.b32.xlu0 %v1287, 96
  %v1290 = vpop.permute.xlu0 %1289
  %v1292 = vadd.f32 %v1281, %v1290
  %1293 = vst.msk [vmem:[%s574] sm:$0xff] %vm255, %v1292
  %v1294 = vld [vmem:[%s576] sm:$0xff]
  %v1295 = vld [vmem:[%s578] sm:$0xff]
  %v1296 = vpack.c.bf16 %v1292, %v1292
  %v1298 = vsel %vm255, %v1296, 0
  %1300 = vmatpush.bf16.msra.mxu0 0
  %1301 = vmatpush.bf16.msra.mxu0 0
  %1302 = vmatpush.bf16.msra.mxu0 0
  %1303 = vmatpush.bf16.msra.mxu0 0
  %1304 = vmatpush.bf16.msra.mxu0 0
  %1305 = vmatpush.bf16.msra.mxu0 0
  %1306 = vmatpush.bf16.msra.mxu0 %v1017
  %1307 = vmatpush.bf16.msra.mxu0 %v1016
  %1308 = vmatmul.bf16.gmra.mxu0 %v1298
  %v1309 = vpop.f32.mrf.mxu0
  %v1310 = vadd.f32 0.0, %v1309
  %v1311 = vpop.f32.mrf.mxu0
  %1312 = vdwg.mxu0
  %v1313 = vadd.f32 %v1294, %v1310
  %v1314 = vxor.u32 %v1313, 2147483648
  %v1315 = vmul.f32 %v1314, 1.442695
  %v1316 = vpow.pop %v1315
  %v1317 = vadd.f32 %v1316, 1.0
  %v1318 = vrcp.pop %v1317
  %v1319 = vmul.f32 %v1317, %v1318
  %v1320 = vsub.f32 1.0, %v1319
  %v1321 = vmul.f32 %v1318, %v1320
  %v1322 = vadd.f32 %v1318, %v1321
  %vm1323 = vweird.f32 %v1317
  %vm1324 = vweird.f32 %v1318
  %vm1325 = vmor %vm1323, %vm1324
  %v1326 = vsel %vm1325, %v1318, %v1322
  %v1327 = vand.u32 2147483647, %v1317
  %vm1328 = vcmp.eq.f32.partialorder %v1327, 8.507059e+37
  %v1329 = vand.u32 %v1317, 2147483648
  %v1330 = vor.u32 1.1754944e-38, %v1329
  %v1331 = vsel %vm1328, %v1330, %v1326
  %v1332 = vmul.f32 1.0, %v1331
  %1333 = vmatpush.bf16.msra.mxu0 0
  %1334 = vmatpush.bf16.msra.mxu0 0
  %1335 = vmatpush.bf16.msra.mxu0 0
  %1336 = vmatpush.bf16.msra.mxu0 0
  %1337 = vmatpush.bf16.msra.mxu0 0
  %1338 = vmatpush.bf16.msra.mxu0 0
  %1339 = vmatpush.bf16.msra.mxu0 %v1062
  %1340 = vmatpush.bf16.msra.mxu0 %v1061
  %1341 = vmatmul.bf16.gmra.mxu0 %v1298
  %v1342 = vpop.f32.mrf.mxu0
  %v1343 = vadd.f32 %v1004, %v1342
  %v1344 = vpop.f32.mrf.mxu0
  %1345 = vdwg.mxu0
  %v1346 = vmul.f32 %v1332, %v1343
  %v1347 = vadd.f32 %v1295, %v1346
  %v1348 = vtanh.pop %v1347
  %v1349 = vsub.f32 %v1292, %v1348
  %1351 = vrot.lane.b32.xlu0 %v1349, 32
  %v1352 = vpop.permute.xlu0 %1351
  %v1354 = vmul.f32 %v1332, %v1352
  %1356 = vrot.lane.b32.xlu0 %v1354, 96
  %v1357 = vpop.permute.xlu0 %1356
  %v1359 = vadd.f32 %v1348, %v1357
  %1360 = vst.msk [vmem:[%s644] sm:$0xff] %vm255, %v1359
  %v1361 = vld [vmem:[%s646] sm:$0xff]
  %v1362 = vld [vmem:[%s648] sm:$0xff]
  %v1363 = vpack.c.bf16 %v1359, %v1359
  %v1365 = vsel %vm255, %v1363, 0
  %1367 = vmatpush.bf16.msra.mxu0 0
  %1368 = vmatpush.bf16.msra.mxu0 0
  %1369 = vmatpush.bf16.msra.mxu0 0
  %1370 = vmatpush.bf16.msra.mxu0 0
  %1371 = vmatpush.bf16.msra.mxu0 0
  %1372 = vmatpush.bf16.msra.mxu0 0
  %1373 = vmatpush.bf16.msra.mxu0 %v1017
  %1374 = vmatpush.bf16.msra.mxu0 %v1016
  %1375 = vmatmul.bf16.gmra.mxu0 %v1365
  %v1376 = vpop.f32.mrf.mxu0
  %v1377 = vadd.f32 0.0, %v1376
  %v1378 = vpop.f32.mrf.mxu0
  %1379 = vdwg.mxu0
  %v1380 = vadd.f32 %v1361, %v1377
  %v1381 = vxor.u32 %v1380, 2147483648
  %v1382 = vmul.f32 %v1381, 1.442695
  %v1383 = vpow.pop %v1382
  %v1384 = vadd.f32 %v1383, 1.0
  %v1385 = vrcp.pop %v1384
  %v1386 = vmul.f32 %v1384, %v1385
  %v1387 = vsub.f32 1.0, %v1386
  %v1388 = vmul.f32 %v1385, %v1387
  %v1389 = vadd.f32 %v1385, %v1388
  %vm1390 = vweird.f32 %v1384
  %vm1391 = vweird.f32 %v1385
  %vm1392 = vmor %vm1390, %vm1391
  %v1393 = vsel %vm1392, %v1385, %v1389
  %v1394 = vand.u32 2147483647, %v1384
  %vm1395 = vcmp.eq.f32.partialorder %v1394, 8.507059e+37
  %v1396 = vand.u32 %v1384, 2147483648
  %v1397 = vor.u32 1.1754944e-38, %v1396
  %v1398 = vsel %vm1395, %v1397, %v1393
  %v1399 = vmul.f32 1.0, %v1398
  %1400 = vmatpush.bf16.msra.mxu0 0
  %1401 = vmatpush.bf16.msra.mxu0 0
  %1402 = vmatpush.bf16.msra.mxu0 0
  %1403 = vmatpush.bf16.msra.mxu0 0
  %1404 = vmatpush.bf16.msra.mxu0 0
  %1405 = vmatpush.bf16.msra.mxu0 0
  %1406 = vmatpush.bf16.msra.mxu0 %v1062
  %1407 = vmatpush.bf16.msra.mxu0 %v1061
  %1408 = vmatmul.bf16.gmra.mxu0 %v1365
  %v1409 = vpop.f32.mrf.mxu0
  %v1410 = vadd.f32 %v1004, %v1409
  %v1411 = vpop.f32.mrf.mxu0
  %1412 = vdwg.mxu0
  %v1413 = vmul.f32 %v1399, %v1410
  %v1414 = vadd.f32 %v1362, %v1413
  %v1415 = vtanh.pop %v1414
  %v1416 = vsub.f32 %v1359, %v1415
  %1418 = vrot.lane.b32.xlu0 %v1416, 32
  %v1419 = vpop.permute.xlu0 %1418
  %v1421 = vmul.f32 %v1399, %v1419
  %1423 = vrot.lane.b32.xlu0 %v1421, 96
  %v1424 = vpop.permute.xlu0 %1423
  %v1426 = vadd.f32 %v1415, %v1424
  %1427 = vst.msk [vmem:[%s714] sm:$0xff] %vm255, %v1426
  %v1428 = vld [vmem:[%s716] sm:$0xff]
  %v1429 = vld [vmem:[%s718] sm:$0xff]
  %v1430 = vpack.c.bf16 %v1426, %v1426
  %v1432 = vsel %vm255, %v1430, 0
  %1434 = vmatpush.bf16.msra.mxu0 0
  %1435 = vmatpush.bf16.msra.mxu0 0
  %1436 = vmatpush.bf16.msra.mxu0 0
  %1437 = vmatpush.bf16.msra.mxu0 0
  %1438 = vmatpush.bf16.msra.mxu0 0
  %1439 = vmatpush.bf16.msra.mxu0 0
  %1440 = vmatpush.bf16.msra.mxu0 %v1017
  %1441 = vmatpush.bf16.msra.mxu0 %v1016
  %1442 = vmatmul.bf16.gmra.mxu0 %v1432
  %v1443 = vpop.f32.mrf.mxu0
  %v1444 = vadd.f32 0.0, %v1443
  %v1445 = vpop.f32.mrf.mxu0
  %1446 = vdwg.mxu0
  %v1447 = vadd.f32 %v1428, %v1444
  %v1448 = vxor.u32 %v1447, 2147483648
  %v1449 = vmul.f32 %v1448, 1.442695
  %v1450 = vpow.pop %v1449
  %v1451 = vadd.f32 %v1450, 1.0
  %v1452 = vrcp.pop %v1451
  %v1453 = vmul.f32 %v1451, %v1452
  %v1454 = vsub.f32 1.0, %v1453
  %v1455 = vmul.f32 %v1452, %v1454
  %v1456 = vadd.f32 %v1452, %v1455
  %vm1457 = vweird.f32 %v1451
  %vm1458 = vweird.f32 %v1452
  %vm1459 = vmor %vm1457, %vm1458
  %v1460 = vsel %vm1459, %v1452, %v1456
  %v1461 = vand.u32 2147483647, %v1451
  %vm1462 = vcmp.eq.f32.partialorder %v1461, 8.507059e+37
  %v1463 = vand.u32 %v1451, 2147483648
  %v1464 = vor.u32 1.1754944e-38, %v1463
  %v1465 = vsel %vm1462, %v1464, %v1460
  %v1466 = vmul.f32 1.0, %v1465
  %1467 = vmatpush.bf16.msra.mxu0 0
  %1468 = vmatpush.bf16.msra.mxu0 0
  %1469 = vmatpush.bf16.msra.mxu0 0
  %1470 = vmatpush.bf16.msra.mxu0 0
  %1471 = vmatpush.bf16.msra.mxu0 0
  %1472 = vmatpush.bf16.msra.mxu0 0
  %1473 = vmatpush.bf16.msra.mxu0 %v1062
  %1474 = vmatpush.bf16.msra.mxu0 %v1061
  %1475 = vmatmul.bf16.gmra.mxu0 %v1432
  %v1476 = vpop.f32.mrf.mxu0
  %v1477 = vadd.f32 %v1004, %v1476
  %v1478 = vpop.f32.mrf.mxu0
  %1479 = vdwg.mxu0
  %v1480 = vmul.f32 %v1466, %v1477
  %v1481 = vadd.f32 %v1429, %v1480
  %v1482 = vtanh.pop %v1481
  %v1483 = vsub.f32 %v1426, %v1482
  %1485 = vrot.lane.b32.xlu0 %v1483, 32
  %v1486 = vpop.permute.xlu0 %1485
  %v1488 = vmul.f32 %v1466, %v1486
  %1490 = vrot.lane.b32.xlu0 %v1488, 96
  %v1491 = vpop.permute.xlu0 %1490
  %v1493 = vadd.f32 %v1482, %v1491
  %1494 = vst.msk [vmem:[%s784] sm:$0xff] %vm255, %v1493
  %v1495 = vld [vmem:[%s786] sm:$0xff]
  %v1496 = vld [vmem:[%s788] sm:$0xff]
  %v1497 = vpack.c.bf16 %v1493, %v1493
  %v1499 = vsel %vm255, %v1497, 0
  %1501 = vmatpush.bf16.msra.mxu0 0
  %1502 = vmatpush.bf16.msra.mxu0 0
  %1503 = vmatpush.bf16.msra.mxu0 0
  %1504 = vmatpush.bf16.msra.mxu0 0
  %1505 = vmatpush.bf16.msra.mxu0 0
  %1506 = vmatpush.bf16.msra.mxu0 0
  %1507 = vmatpush.bf16.msra.mxu0 %v1017
  %1508 = vmatpush.bf16.msra.mxu0 %v1016
  %1509 = vmatmul.bf16.gmra.mxu0 %v1499
  %v1510 = vpop.f32.mrf.mxu0
  %v1511 = vadd.f32 0.0, %v1510
  %v1512 = vpop.f32.mrf.mxu0
  %1513 = vdwg.mxu0
  %v1514 = vadd.f32 %v1495, %v1511
  %v1515 = vxor.u32 %v1514, 2147483648
  %v1516 = vmul.f32 %v1515, 1.442695
  %v1517 = vpow.pop %v1516
  %v1518 = vadd.f32 %v1517, 1.0
  %v1519 = vrcp.pop %v1518
  %v1520 = vmul.f32 %v1518, %v1519
  %v1521 = vsub.f32 1.0, %v1520
  %v1522 = vmul.f32 %v1519, %v1521
  %v1523 = vadd.f32 %v1519, %v1522
  %vm1524 = vweird.f32 %v1518
  %vm1525 = vweird.f32 %v1519
  %vm1526 = vmor %vm1524, %vm1525
  %v1527 = vsel %vm1526, %v1519, %v1523
  %v1528 = vand.u32 2147483647, %v1518
  %vm1529 = vcmp.eq.f32.partialorder %v1528, 8.507059e+37
  %v1530 = vand.u32 %v1518, 2147483648
  %v1531 = vor.u32 1.1754944e-38, %v1530
  %v1532 = vsel %vm1529, %v1531, %v1527
  %v1533 = vmul.f32 1.0, %v1532
  %1534 = vmatpush.bf16.msra.mxu0 0
  %1535 = vmatpush.bf16.msra.mxu0 0
  %1536 = vmatpush.bf16.msra.mxu0 0
  %1537 = vmatpush.bf16.msra.mxu0 0
  %1538 = vmatpush.bf16.msra.mxu0 0
  %1539 = vmatpush.bf16.msra.mxu0 0
  %1540 = vmatpush.bf16.msra.mxu0 %v1062
  %1541 = vmatpush.bf16.msra.mxu0 %v1061
  %1542 = vmatmul.bf16.gmra.mxu0 %v1499
  %v1543 = vpop.f32.mrf.mxu0
  %v1544 = vadd.f32 %v1004, %v1543
  %v1545 = vpop.f32.mrf.mxu0
  %1546 = vdwg.mxu0
  %v1547 = vmul.f32 %v1533, %v1544
  %v1548 = vadd.f32 %v1496, %v1547
  %v1549 = vtanh.pop %v1548
  %v1550 = vsub.f32 %v1493, %v1549
  %1552 = vrot.lane.b32.xlu0 %v1550, 32
  %v1553 = vpop.permute.xlu0 %1552
  %v1555 = vmul.f32 %v1533, %v1553
  %1557 = vrot.lane.b32.xlu0 %v1555, 96
  %v1558 = vpop.permute.xlu0 %1557
  %v1560 = vadd.f32 %v1549, %v1558
  %1561 = vst.msk [vmem:[%s854] sm:$0xff] %vm255, %v1560
  %v1562 = vpack.c.bf16 %v1560, %v1560
  %v1563 = vld [vmem:[%s31] sm:$0xf]
  %v1564 = vld [vmem:[%s31 + $0x4] sm:$0xf]
  %v1565 = vld [vmem:[%s31 + $0x8] sm:$0xf]
  %v1566 = vld [vmem:[%s31 + $0xc] sm:$0xf]
  %v1567 = vld [vmem:[%s33] sm:$0x1]
  %v1569 = vperm.slane %v1567, 0
  %v1575 = vunpack.c.l.b16 %v1563
  %v1576 = vunpack.c.l.b16 %v1564
  %v1577 = vunpack.c.l.b16 %v1565
  %v1578 = vunpack.c.l.b16 %v1566
  %v1579 = vpack.c.b16 %v1576, %v1575
  %v1580 = vpack.c.b16 %v1578, %v1577
  %v1584 = vsel %vm255, %v1562, 0
  %1586 = vmatpush.bf16.msra.mxu0 0
  %1587 = vmatpush.bf16.msra.mxu0 0
  %1588 = vmatpush.bf16.msra.mxu0 0
  %1589 = vmatpush.bf16.msra.mxu0 0
  %1590 = vmatpush.bf16.msra.mxu0 0
  %1591 = vmatpush.bf16.msra.mxu0 0
  %1592 = vmatpush.bf16.msra.mxu0 %v1580
  %1593 = vmatpush.bf16.msra.mxu0 %v1579
  %1594 = vmatmul.bf16.gmra.mxu0 %v1584
  %v1595 = vpop.f32.mrf.mxu0
  %v1596 = vadd.f32 %v1569, %v1595
  %v1597 = vpop.f32.mrf.mxu0
  %1598 = vdwg.mxu0
  %v1599 = vpack.c.bf16 %v1596, %v1596
  %v1600 = vld [vmem:[%s35] sm:$0xf]
  %v1601 = vld [vmem:[%s43] sm:$0x1]
  %v1603 = vperm.slane %v1601, 0
  %vm1605 = vcmask 64512
  %v1607 = vsel %vm1605, %v1599, 0
  %vm1609 = vcmask 1043456
  %v1611 = vsel %vm1609, %v1600, 0
  %1613 = vmatpush.bf16.msra.mxu0 0
  %1614 = vmatpush.bf16.msra.mxu0 0
  %1615 = vmatpush.bf16.msra.mxu0 0
  %1616 = vmatpush.bf16.msra.mxu0 0
  %1617 = vmatpush.bf16.msra.mxu0 0
  %1618 = vmatpush.bf16.msra.mxu0 0
  %1619 = vmatpush.bf16.msra.mxu0 0
  %1620 = vmatpush.bf16.msra.mxu0 %v1611
  %1621 = vmatmul.bf16.gmra.mxu0 %v1607
  %v1622 = vpop.f32.mrf.mxu0
  %v1623 = vadd.f32 %v1603, %v1622
  %v1624 = vpop.f32.mrf.mxu0
  %1625 = vdwg.mxu0
  %v1626 = vld [vmem:[%s37] sm:$0xf]
  %v1627 = vld [vmem:[%s45] sm:$0x1]
  %v1629 = vperm.slane %v1627, 0
  %v1632 = vsel %vm1609, %v1626, 0
  %1634 = vmatpush.bf16.msra.mxu0 0
  %1635 = vmatpush.bf16.msra.mxu0 0
  %1636 = vmatpush.bf16.msra.mxu0 0
  %1637 = vmatpush.bf16.msra.mxu0 0
  %1638 = vmatpush.bf16.msra.mxu0 0
  %1639 = vmatpush.bf16.msra.mxu0 0
  %1640 = vmatpush.bf16.msra.mxu0 0
  %1641 = vmatpush.bf16.msra.mxu0 %v1632
  %1642 = vmatmul.bf16.gmra.mxu0 %v1607
  %v1643 = vpop.f32.mrf.mxu0
  %v1644 = vadd.f32 %v1629, %v1643
  %v1645 = vpop.f32.mrf.mxu0
  %1646 = vdwg.mxu0
  %v1647 = vld [vmem:[%s39] sm:$0xf]
  %v1648 = vld [vmem:[%s39 + $0x4] sm:$0xf]
  %v1649 = vld [vmem:[%s39 + $0x8] sm:$0xf]
  %v1650 = vld [vmem:[%s39 + $0xc] sm:$0xf]
  %v1651 = vld [vmem:[%s41] sm:$0xf]
  %v1652 = vld [vmem:[%s41 + $0x4] sm:$0xf]
  %v1653 = vld [vmem:[%s41 + $0x8] sm:$0xf]
  %v1654 = vld [vmem:[%s41 + $0xc] sm:$0xf]
  %v1655 = vld [vmem:[%s47] sm:$0x1]
  %v1657 = vperm.slane %v1655, 0
  %v1663 = vunpack.c.l.b16 %v1647
  %v1664 = vunpack.c.l.b16 %v1648
  %v1665 = vunpack.c.l.b16 %v1649
  %v1666 = vunpack.c.l.b16 %v1650
  %v1667 = vpack.c.b16 %v1664, %v1663
  %v1668 = vpack.c.b16 %v1666, %v1665
  %1671 = vmatpush.bf16.msra.mxu0 0
  %1672 = vmatpush.bf16.msra.mxu0 0
  %1673 = vmatpush.bf16.msra.mxu0 0
  %1674 = vmatpush.bf16.msra.mxu0 0
  %1675 = vmatpush.bf16.msra.mxu0 0
  %1676 = vmatpush.bf16.msra.mxu0 0
  %1677 = vmatpush.bf16.msra.mxu0 %v1668
  %1678 = vmatpush.bf16.msra.mxu0 %v1667
  %1679 = vmatmul.bf16.gmra.mxu0 %v291
  %v1680 = vpop.f32.mrf.mxu0
  %v1681 = vadd.f32 0.0, %v1680
  %v1682 = vpop.f32.mrf.mxu0
  %1683 = vdwg.mxu0
  %v1684 = vadd.f32 %v1623, %v1681
  %v1685 = vxor.u32 %v1684, 2147483648
  %v1686 = vmul.f32 %v1685, 1.442695
  %v1687 = vpow.pop %v1686
  %v1688 = vadd.f32 %v1687, 1.0
  %v1689 = vrcp.pop %v1688
  %v1690 = vmul.f32 %v1688, %v1689
  %v1691 = vsub.f32 1.0, %v1690
  %v1692 = vmul.f32 %v1689, %v1691
  %v1693 = vadd.f32 %v1689, %v1692
  %vm1694 = vweird.f32 %v1688
  %vm1695 = vweird.f32 %v1689
  %vm1696 = vmor %vm1694, %vm1695
  %v1697 = vsel %vm1696, %v1689, %v1693
  %v1698 = vand.u32 2147483647, %v1688
  %vm1699 = vcmp.eq.f32.partialorder %v1698, 8.507059e+37
  %v1700 = vand.u32 %v1688, 2147483648
  %v1701 = vor.u32 1.1754944e-38, %v1700
  %v1702 = vsel %vm1699, %v1701, %v1697
  %v1703 = vmul.f32 1.0, %v1702
  %v1708 = vunpack.c.l.b16 %v1651
  %v1709 = vunpack.c.l.b16 %v1652
  %v1710 = vunpack.c.l.b16 %v1653
  %v1711 = vunpack.c.l.b16 %v1654
  %v1712 = vpack.c.b16 %v1709, %v1708
  %v1713 = vpack.c.b16 %v1711, %v1710
  %1716 = vmatpush.bf16.msra.mxu0 0
  %1717 = vmatpush.bf16.msra.mxu0 0
  %1718 = vmatpush.bf16.msra.mxu0 0
  %1719 = vmatpush.bf16.msra.mxu0 0
  %1720 = vmatpush.bf16.msra.mxu0 0
  %1721 = vmatpush.bf16.msra.mxu0 0
  %1722 = vmatpush.bf16.msra.mxu0 %v1713
  %1723 = vmatpush.bf16.msra.mxu0 %v1712
  %1724 = vmatmul.bf16.gmra.mxu0 %v291
  %v1725 = vpop.f32.mrf.mxu0
  %v1726 = vadd.f32 %v1657, %v1725
  %v1727 = vpop.f32.mrf.mxu0
  %1728 = vdwg.mxu0
  %v1729 = vmul.f32 %v1703, %v1726
  %v1730 = vadd.f32 %v1644, %v1729
  %v1731 = vtanh.pop %v1730
  %v1732 = vsub.f32 0.0, %v1731
  %1734 = vrot.lane.b32.xlu0 %v1732, 32
  %v1735 = vpop.permute.xlu0 %1734
  %v1737 = vmul.f32 %v1703, %v1735
  %1739 = vrot.lane.b32.xlu0 %v1737, 96
  %v1740 = vpop.permute.xlu0 %1739
  %v1742 = vadd.f32 %v1731, %v1740
  %1743 = vst.msk [vmem:[#allocation2] sm:$0xff] %vm255, %v1742
  %v1744 = vpack.c.bf16 %v1742, %v1742
  %v1746 = vsel %vm255, %v1744, 0
  %1748 = vmatpush.bf16.msra.mxu0 0
  %1749 = vmatpush.bf16.msra.mxu0 0
  %1750 = vmatpush.bf16.msra.mxu0 0
  %1751 = vmatpush.bf16.msra.mxu0 0
  %1752 = vmatpush.bf16.msra.mxu0 0
  %1753 = vmatpush.bf16.msra.mxu0 0
  %1754 = vmatpush.bf16.msra.mxu0 %v1668
  %1755 = vmatpush.bf16.msra.mxu0 %v1667
  %1756 = vmatmul.bf16.gmra.mxu0 %v1746
  %v1757 = vpop.f32.mrf.mxu0
  %v1758 = vadd.f32 0.0, %v1757
  %v1759 = vpop.f32.mrf.mxu0
  %1760 = vdwg.mxu0
  %v1761 = vadd.f32 %v1623, %v1758
  %v1762 = vxor.u32 %v1761, 2147483648
  %v1763 = vmul.f32 %v1762, 1.442695
  %v1764 = vpow.pop %v1763
  %v1765 = vadd.f32 %v1764, 1.0
  %v1766 = vrcp.pop %v1765
  %v1767 = vmul.f32 %v1765, %v1766
  %v1768 = vsub.f32 1.0, %v1767
  %v1769 = vmul.f32 %v1766, %v1768
  %v1770 = vadd.f32 %v1766, %v1769
  %vm1771 = vweird.f32 %v1765
  %vm1772 = vweird.f32 %v1766
  %vm1773 = vmor %vm1771, %vm1772
  %v1774 = vsel %vm1773, %v1766, %v1770
  %v1775 = vand.u32 2147483647, %v1765
  %vm1776 = vcmp.eq.f32.partialorder %v1775, 8.507059e+37
  %v1777 = vand.u32 %v1765, 2147483648
  %v1778 = vor.u32 1.1754944e-38, %v1777
  %v1779 = vsel %vm1776, %v1778, %v1774
  %v1780 = vmul.f32 1.0, %v1779
  %1781 = vmatpush.bf16.msra.mxu0 0
  %1782 = vmatpush.bf16.msra.mxu0 0
  %1783 = vmatpush.bf16.msra.mxu0 0
  %1784 = vmatpush.bf16.msra.mxu0 0
  %1785 = vmatpush.bf16.msra.mxu0 0
  %1786 = vmatpush.bf16.msra.mxu0 0
  %1787 = vmatpush.bf16.msra.mxu0 %v1713
  %1788 = vmatpush.bf16.msra.mxu0 %v1712
  %1789 = vmatmul.bf16.gmra.mxu0 %v1746
  %v1790 = vpop.f32.mrf.mxu0
  %v1791 = vadd.f32 %v1657, %v1790
  %v1792 = vpop.f32.mrf.mxu0
  %1793 = vdwg.mxu0
  %v1794 = vmul.f32 %v1780, %v1791
  %v1795 = vadd.f32 %v1644, %v1794
  %v1796 = vtanh.pop %v1795
  %v1797 = vsub.f32 %v1742, %v1796
  %1799 = vrot.lane.b32.xlu0 %v1797, 32
  %v1800 = vpop.permute.xlu0 %1799
  %v1802 = vmul.f32 %v1780, %v1800
  %1804 = vrot.lane.b32.xlu0 %v1802, 96
  %v1805 = vpop.permute.xlu0 %1804
  %v1807 = vadd.f32 %v1796, %v1805
  %1808 = vst.msk [vmem:[%s434] sm:$0xff] %vm255, %v1807
  %v1809 = vpack.c.bf16 %v1807, %v1807
  %v1811 = vsel %vm255, %v1809, 0
  %1813 = vmatpush.bf16.msra.mxu0 0
  %1814 = vmatpush.bf16.msra.mxu0 0
  %1815 = vmatpush.bf16.msra.mxu0 0
  %1816 = vmatpush.bf16.msra.mxu0 0
  %1817 = vmatpush.bf16.msra.mxu0 0
  %1818 = vmatpush.bf16.msra.mxu0 0
  %1819 = vmatpush.bf16.msra.mxu0 %v1668
  %1820 = vmatpush.bf16.msra.mxu0 %v1667
  %1821 = vmatmul.bf16.gmra.mxu0 %v1811
  %v1822 = vpop.f32.mrf.mxu0
  %v1823 = vadd.f32 0.0, %v1822
  %v1824 = vpop.f32.mrf.mxu0
  %1825 = vdwg.mxu0
  %v1826 = vadd.f32 %v1623, %v1823
  %v1827 = vxor.u32 %v1826, 2147483648
  %v1828 = vmul.f32 %v1827, 1.442695
  %v1829 = vpow.pop %v1828
  %v1830 = vadd.f32 %v1829, 1.0
  %v1831 = vrcp.pop %v1830
  %v1832 = vmul.f32 %v1830, %v1831
  %v1833 = vsub.f32 1.0, %v1832
  %v1834 = vmul.f32 %v1831, %v1833
  %v1835 = vadd.f32 %v1831, %v1834
  %vm1836 = vweird.f32 %v1830
  %vm1837 = vweird.f32 %v1831
  %vm1838 = vmor %vm1836, %vm1837
  %v1839 = vsel %vm1838, %v1831, %v1835
  %v1840 = vand.u32 2147483647, %v1830
  %vm1841 = vcmp.eq.f32.partialorder %v1840, 8.507059e+37
  %v1842 = vand.u32 %v1830, 2147483648
  %v1843 = vor.u32 1.1754944e-38, %v1842
  %v1844 = vsel %vm1841, %v1843, %v1839
  %v1845 = vmul.f32 1.0, %v1844
  %1846 = vmatpush.bf16.msra.mxu0 0
  %1847 = vmatpush.bf16.msra.mxu0 0
  %1848 = vmatpush.bf16.msra.mxu0 0
  %1849 = vmatpush.bf16.msra.mxu0 0
  %1850 = vmatpush.bf16.msra.mxu0 0
  %1851 = vmatpush.bf16.msra.mxu0 0
  %1852 = vmatpush.bf16.msra.mxu0 %v1713
  %1853 = vmatpush.bf16.msra.mxu0 %v1712
  %1854 = vmatmul.bf16.gmra.mxu0 %v1811
  %v1855 = vpop.f32.mrf.mxu0
  %v1856 = vadd.f32 %v1657, %v1855
  %v1857 = vpop.f32.mrf.mxu0
  %1858 = vdwg.mxu0
  %v1859 = vmul.f32 %v1845, %v1856
  %v1860 = vadd.f32 %v1644, %v1859
  %v1861 = vtanh.pop %v1860
  %v1862 = vsub.f32 %v1807, %v1861
  %1864 = vrot.lane.b32.xlu0 %v1862, 32
  %v1865 = vpop.permute.xlu0 %1864
  %v1867 = vmul.f32 %v1845, %v1865
  %1869 = vrot.lane.b32.xlu0 %v1867, 96
  %v1870 = vpop.permute.xlu0 %1869
  %v1872 = vadd.f32 %v1861, %v1870
  %1873 = vst.msk [vmem:[%s504] sm:$0xff] %vm255, %v1872
  %v1874 = vpack.c.bf16 %v1872, %v1872
  %v1876 = vsel %vm255, %v1874, 0
  %1878 = vmatpush.bf16.msra.mxu0 0
  %1879 = vmatpush.bf16.msra.mxu0 0
  %1880 = vmatpush.bf16.msra.mxu0 0
  %1881 = vmatpush.bf16.msra.mxu0 0
  %1882 = vmatpush.bf16.msra.mxu0 0
  %1883 = vmatpush.bf16.msra.mxu0 0
  %1884 = vmatpush.bf16.msra.mxu0 %v1668
  %1885 = vmatpush.bf16.msra.mxu0 %v1667
  %1886 = vmatmul.bf16.gmra.mxu0 %v1876
  %v1887 = vpop.f32.mrf.mxu0
  %v1888 = vadd.f32 0.0, %v1887
  %v1889 = vpop.f32.mrf.mxu0
  %1890 = vdwg.mxu0
  %v1891 = vadd.f32 %v1623, %v1888
  %v1892 = vxor.u32 %v1891, 2147483648
  %v1893 = vmul.f32 %v1892, 1.442695
  %v1894 = vpow.pop %v1893
  %v1895 = vadd.f32 %v1894, 1.0
  %v1896 = vrcp.pop %v1895
  %v1897 = vmul.f32 %v1895, %v1896
  %v1898 = vsub.f32 1.0, %v1897
  %v1899 = vmul.f32 %v1896, %v1898
  %v1900 = vadd.f32 %v1896, %v1899
  %vm1901 = vweird.f32 %v1895
  %vm1902 = vweird.f32 %v1896
  %vm1903 = vmor %vm1901, %vm1902
  %v1904 = vsel %vm1903, %v1896, %v1900
  %v1905 = vand.u32 2147483647, %v1895
  %vm1906 = vcmp.eq.f32.partialorder %v1905, 8.507059e+37
  %v1907 = vand.u32 %v1895, 2147483648
  %v1908 = vor.u32 1.1754944e-38, %v1907
  %v1909 = vsel %vm1906, %v1908, %v1904
  %v1910 = vmul.f32 1.0, %v1909
  %1911 = vmatpush.bf16.msra.mxu0 0
  %1912 = vmatpush.bf16.msra.mxu0 0
  %1913 = vmatpush.bf16.msra.mxu0 0
  %1914 = vmatpush.bf16.msra.mxu0 0
  %1915 = vmatpush.bf16.msra.mxu0 0
  %1916 = vmatpush.bf16.msra.mxu0 0
  %1917 = vmatpush.bf16.msra.mxu0 %v1713
  %1918 = vmatpush.bf16.msra.mxu0 %v1712
  %1919 = vmatmul.bf16.gmra.mxu0 %v1876
  %v1920 = vpop.f32.mrf.mxu0
  %v1921 = vadd.f32 %v1657, %v1920
  %v1922 = vpop.f32.mrf.mxu0
  %1923 = vdwg.mxu0
  %v1924 = vmul.f32 %v1910, %v1921
  %v1925 = vadd.f32 %v1644, %v1924
  %v1926 = vtanh.pop %v1925
  %v1927 = vsub.f32 %v1872, %v1926
  %1929 = vrot.lane.b32.xlu0 %v1927, 32
  %v1930 = vpop.permute.xlu0 %1929
  %v1932 = vmul.f32 %v1910, %v1930
  %1934 = vrot.lane.b32.xlu0 %v1932, 96
  %v1935 = vpop.permute.xlu0 %1934
  %v1937 = vadd.f32 %v1926, %v1935
  %1938 = vst.msk [vmem:[%s574] sm:$0xff] %vm255, %v1937
  %v1939 = vpack.c.bf16 %v1937, %v1937
  %v1941 = vsel %vm255, %v1939, 0
  %1943 = vmatpush.bf16.msra.mxu0 0
  %1944 = vmatpush.bf16.msra.mxu0 0
  %1945 = vmatpush.bf16.msra.mxu0 0
  %1946 = vmatpush.bf16.msra.mxu0 0
  %1947 = vmatpush.bf16.msra.mxu0 0
  %1948 = vmatpush.bf16.msra.mxu0 0
  %1949 = vmatpush.bf16.msra.mxu0 %v1668
  %1950 = vmatpush.bf16.msra.mxu0 %v1667
  %1951 = vmatmul.bf16.gmra.mxu0 %v1941
  %v1952 = vpop.f32.mrf.mxu0
  %v1953 = vadd.f32 0.0, %v1952
  %v1954 = vpop.f32.mrf.mxu0
  %1955 = vdwg.mxu0
  %v1956 = vadd.f32 %v1623, %v1953
  %v1957 = vxor.u32 %v1956, 2147483648
  %v1958 = vmul.f32 %v1957, 1.442695
  %v1959 = vpow.pop %v1958
  %v1960 = vadd.f32 %v1959, 1.0
  %v1961 = vrcp.pop %v1960
  %v1962 = vmul.f32 %v1960, %v1961
  %v1963 = vsub.f32 1.0, %v1962
  %v1964 = vmul.f32 %v1961, %v1963
  %v1965 = vadd.f32 %v1961, %v1964
  %vm1966 = vweird.f32 %v1960
  %vm1967 = vweird.f32 %v1961
  %vm1968 = vmor %vm1966, %vm1967
  %v1969 = vsel %vm1968, %v1961, %v1965
  %v1970 = vand.u32 2147483647, %v1960
  %vm1971 = vcmp.eq.f32.partialorder %v1970, 8.507059e+37
  %v1972 = vand.u32 %v1960, 2147483648
  %v1973 = vor.u32 1.1754944e-38, %v1972
  %v1974 = vsel %vm1971, %v1973, %v1969
  %v1975 = vmul.f32 1.0, %v1974
  %1976 = vmatpush.bf16.msra.mxu0 0
  %1977 = vmatpush.bf16.msra.mxu0 0
  %1978 = vmatpush.bf16.msra.mxu0 0
  %1979 = vmatpush.bf16.msra.mxu0 0
  %1980 = vmatpush.bf16.msra.mxu0 0
  %1981 = vmatpush.bf16.msra.mxu0 0
  %1982 = vmatpush.bf16.msra.mxu0 %v1713
  %1983 = vmatpush.bf16.msra.mxu0 %v1712
  %1984 = vmatmul.bf16.gmra.mxu0 %v1941
  %v1985 = vpop.f32.mrf.mxu0
  %v1986 = vadd.f32 %v1657, %v1985
  %v1987 = vpop.f32.mrf.mxu0
  %1988 = vdwg.mxu0
  %v1989 = vmul.f32 %v1975, %v1986
  %v1990 = vadd.f32 %v1644, %v1989
  %v1991 = vtanh.pop %v1990
  %v1992 = vsub.f32 %v1937, %v1991
  %1994 = vrot.lane.b32.xlu0 %v1992, 32
  %v1995 = vpop.permute.xlu0 %1994
  %v1997 = vmul.f32 %v1975, %v1995
  %1999 = vrot.lane.b32.xlu0 %v1997, 96
  %v2000 = vpop.permute.xlu0 %1999
  %v2002 = vadd.f32 %v1991, %v2000
  %2003 = vst.msk [vmem:[%s644] sm:$0xff] %vm255, %v2002
  %v2004 = vpack.c.bf16 %v2002, %v2002
  %v2006 = vsel %vm255, %v2004, 0
  %2008 = vmatpush.bf16.msra.mxu0 0
  %2009 = vmatpush.bf16.msra.mxu0 0
  %2010 = vmatpush.bf16.msra.mxu0 0
  %2011 = vmatpush.bf16.msra.mxu0 0
  %2012 = vmatpush.bf16.msra.mxu0 0
  %2013 = vmatpush.bf16.msra.mxu0 0
  %2014 = vmatpush.bf16.msra.mxu0 %v1668
  %2015 = vmatpush.bf16.msra.mxu0 %v1667
  %2016 = vmatmul.bf16.gmra.mxu0 %v2006
  %v2017 = vpop.f32.mrf.mxu0
  %v2018 = vadd.f32 0.0, %v2017
  %v2019 = vpop.f32.mrf.mxu0
  %2020 = vdwg.mxu0
  %v2021 = vadd.f32 %v1623, %v2018
  %v2022 = vxor.u32 %v2021, 2147483648
  %v2023 = vmul.f32 %v2022, 1.442695
  %v2024 = vpow.pop %v2023
  %v2025 = vadd.f32 %v2024, 1.0
  %v2026 = vrcp.pop %v2025
  %v2027 = vmul.f32 %v2025, %v2026
  %v2028 = vsub.f32 1.0, %v2027
  %v2029 = vmul.f32 %v2026, %v2028
  %v2030 = vadd.f32 %v2026, %v2029
  %vm2031 = vweird.f32 %v2025
  %vm2032 = vweird.f32 %v2026
  %vm2033 = vmor %vm2031, %vm2032
  %v2034 = vsel %vm2033, %v2026, %v2030
  %v2035 = vand.u32 2147483647, %v2025
  %vm2036 = vcmp.eq.f32.partialorder %v2035, 8.507059e+37
  %v2037 = vand.u32 %v2025, 2147483648
  %v2038 = vor.u32 1.1754944e-38, %v2037
  %v2039 = vsel %vm2036, %v2038, %v2034
  %v2040 = vmul.f32 1.0, %v2039
  %2041 = vmatpush.bf16.msra.mxu0 0
  %2042 = vmatpush.bf16.msra.mxu0 0
  %2043 = vmatpush.bf16.msra.mxu0 0
  %2044 = vmatpush.bf16.msra.mxu0 0
  %2045 = vmatpush.bf16.msra.mxu0 0
  %2046 = vmatpush.bf16.msra.mxu0 0
  %2047 = vmatpush.bf16.msra.mxu0 %v1713
  %2048 = vmatpush.bf16.msra.mxu0 %v1712
  %2049 = vmatmul.bf16.gmra.mxu0 %v2006
  %v2050 = vpop.f32.mrf.mxu0
  %v2051 = vadd.f32 %v1657, %v2050
  %v2052 = vpop.f32.mrf.mxu0
  %2053 = vdwg.mxu0
  %v2054 = vmul.f32 %v2040, %v2051
  %v2055 = vadd.f32 %v1644, %v2054
  %v2056 = vtanh.pop %v2055
  %v2057 = vsub.f32 %v2002, %v2056
  %2059 = vrot.lane.b32.xlu0 %v2057, 32
  %v2060 = vpop.permute.xlu0 %2059
  %v2062 = vmul.f32 %v2040, %v2060
  %2064 = vrot.lane.b32.xlu0 %v2062, 96
  %v2065 = vpop.permute.xlu0 %2064
  %v2067 = vadd.f32 %v2056, %v2065
  %2068 = vst.msk [vmem:[%s714] sm:$0xff] %vm255, %v2067
  %v2069 = vpack.c.bf16 %v2067, %v2067
  %v2071 = vsel %vm255, %v2069, 0
  %2073 = vmatpush.bf16.msra.mxu0 0
  %2074 = vmatpush.bf16.msra.mxu0 0
  %2075 = vmatpush.bf16.msra.mxu0 0
  %2076 = vmatpush.bf16.msra.mxu0 0
  %2077 = vmatpush.bf16.msra.mxu0 0
  %2078 = vmatpush.bf16.msra.mxu0 0
  %2079 = vmatpush.bf16.msra.mxu0 %v1668
  %2080 = vmatpush.bf16.msra.mxu0 %v1667
  %2081 = vmatmul.bf16.gmra.mxu0 %v2071
  %v2082 = vpop.f32.mrf.mxu0
  %v2083 = vadd.f32 0.0, %v2082
  %v2084 = vpop.f32.mrf.mxu0
  %2085 = vdwg.mxu0
  %v2086 = vadd.f32 %v1623, %v2083
  %v2087 = vxor.u32 %v2086, 2147483648
  %v2088 = vmul.f32 %v2087, 1.442695
  %v2089 = vpow.pop %v2088
  %v2090 = vadd.f32 %v2089, 1.0
  %v2091 = vrcp.pop %v2090
  %v2092 = vmul.f32 %v2090, %v2091
  %v2093 = vsub.f32 1.0, %v2092
  %v2094 = vmul.f32 %v2091, %v2093
  %v2095 = vadd.f32 %v2091, %v2094
  %vm2096 = vweird.f32 %v2090
  %vm2097 = vweird.f32 %v2091
  %vm2098 = vmor %vm2096, %vm2097
  %v2099 = vsel %vm2098, %v2091, %v2095
  %v2100 = vand.u32 2147483647, %v2090
  %vm2101 = vcmp.eq.f32.partialorder %v2100, 8.507059e+37
  %v2102 = vand.u32 %v2090, 2147483648
  %v2103 = vor.u32 1.1754944e-38, %v2102
  %v2104 = vsel %vm2101, %v2103, %v2099
  %v2105 = vmul.f32 1.0, %v2104
  %2106 = vmatpush.bf16.msra.mxu0 0
  %2107 = vmatpush.bf16.msra.mxu0 0
  %2108 = vmatpush.bf16.msra.mxu0 0
  %2109 = vmatpush.bf16.msra.mxu0 0
  %2110 = vmatpush.bf16.msra.mxu0 0
  %2111 = vmatpush.bf16.msra.mxu0 0
  %2112 = vmatpush.bf16.msra.mxu0 %v1713
  %2113 = vmatpush.bf16.msra.mxu0 %v1712
  %2114 = vmatmul.bf16.gmra.mxu0 %v2071
  %v2115 = vpop.f32.mrf.mxu0
  %v2116 = vadd.f32 %v1657, %v2115
  %v2117 = vpop.f32.mrf.mxu0
  %2118 = vdwg.mxu0
  %v2119 = vmul.f32 %v2105, %v2116
  %v2120 = vadd.f32 %v1644, %v2119
  %v2121 = vtanh.pop %v2120
  %v2122 = vsub.f32 %v2067, %v2121
  %2124 = vrot.lane.b32.xlu0 %v2122, 32
  %v2125 = vpop.permute.xlu0 %2124
  %v2127 = vmul.f32 %v2105, %v2125
  %2129 = vrot.lane.b32.xlu0 %v2127, 96
  %v2130 = vpop.permute.xlu0 %2129
  %v2132 = vadd.f32 %v2121, %v2130
  %2133 = vst.msk [vmem:[%s784] sm:$0xff] %vm255, %v2132
  %v2134 = vpack.c.bf16 %v2132, %v2132
  %v2136 = vsel %vm255, %v2134, 0
  %2138 = vmatpush.bf16.msra.mxu0 0
  %2139 = vmatpush.bf16.msra.mxu0 0
  %2140 = vmatpush.bf16.msra.mxu0 0
  %2141 = vmatpush.bf16.msra.mxu0 0
  %2142 = vmatpush.bf16.msra.mxu0 0
  %2143 = vmatpush.bf16.msra.mxu0 0
  %2144 = vmatpush.bf16.msra.mxu0 %v1668
  %2145 = vmatpush.bf16.msra.mxu0 %v1667
  %2146 = vmatmul.bf16.gmra.mxu0 %v2136
  %v2147 = vpop.f32.mrf.mxu0
  %v2148 = vadd.f32 0.0, %v2147
  %v2149 = vpop.f32.mrf.mxu0
  %2150 = vdwg.mxu0
  %v2151 = vadd.f32 %v1623, %v2148
  %v2152 = vxor.u32 %v2151, 2147483648
  %v2153 = vmul.f32 %v2152, 1.442695
  %v2154 = vpow.pop %v2153
  %v2155 = vadd.f32 %v2154, 1.0
  %v2156 = vrcp.pop %v2155
  %v2157 = vmul.f32 %v2155, %v2156
  %v2158 = vsub.f32 1.0, %v2157
  %v2159 = vmul.f32 %v2156, %v2158
  %v2160 = vadd.f32 %v2156, %v2159
  %vm2161 = vweird.f32 %v2155
  %vm2162 = vweird.f32 %v2156
  %vm2163 = vmor %vm2161, %vm2162
  %v2164 = vsel %vm2163, %v2156, %v2160
  %v2165 = vand.u32 2147483647, %v2155
  %vm2166 = vcmp.eq.f32.partialorder %v2165, 8.507059e+37
  %v2167 = vand.u32 %v2155, 2147483648
  %v2168 = vor.u32 1.1754944e-38, %v2167
  %v2169 = vsel %vm2166, %v2168, %v2164
  %v2170 = vmul.f32 1.0, %v2169
  %2171 = vmatpush.bf16.msra.mxu0 0
  %2172 = vmatpush.bf16.msra.mxu0 0
  %2173 = vmatpush.bf16.msra.mxu0 0
  %2174 = vmatpush.bf16.msra.mxu0 0
  %2175 = vmatpush.bf16.msra.mxu0 0
  %2176 = vmatpush.bf16.msra.mxu0 0
  %2177 = vmatpush.bf16.msra.mxu0 %v1713
  %2178 = vmatpush.bf16.msra.mxu0 %v1712
  %2179 = vmatmul.bf16.gmra.mxu0 %v2136
  %v2180 = vpop.f32.mrf.mxu0
  %v2181 = vadd.f32 %v1657, %v2180
  %v2182 = vpop.f32.mrf.mxu0
  %2183 = vdwg.mxu0
  %v2184 = vmul.f32 %v2170, %v2181
  %v2185 = vadd.f32 %v1644, %v2184
  %v2186 = vtanh.pop %v2185
  %v2187 = vsub.f32 %v2132, %v2186
  %2189 = vrot.lane.b32.xlu0 %v2187, 32
  %v2190 = vpop.permute.xlu0 %2189
  %v2192 = vmul.f32 %v2170, %v2190
  %2194 = vrot.lane.b32.xlu0 %v2192, 96
  %v2195 = vpop.permute.xlu0 %2194
  %v2197 = vadd.f32 %v2186, %v2195
  %2198 = vst.msk [vmem:[%s854] sm:$0xff] %vm255, %v2197
  %v2199 = vld [vmem:[#allocation2] sm:$0xff]
  %v2200 = vld [vmem:[#allocation2 + $0x8] sm:$0xff]
  %v2201 = vld [vmem:[#allocation2 + $0x10] sm:$0xff]
  %v2202 = vld [vmem:[#allocation2 + $0x18] sm:$0xff]
  %v2203 = vld [vmem:[#allocation2 + $0x20] sm:$0xff]
  %v2204 = vld [vmem:[#allocation2 + $0x28] sm:$0xff]
  %v2205 = vld [vmem:[#allocation2 + $0x30] sm:$0xff]
  %v2206 = vld [vmem:[#allocation2 + $0x38] sm:$0xff]
  %v2207 = vpack.c.bf16 %v2200, %v2199
  %v2208 = vpack.c.bf16 %v2202, %v2201
  %v2209 = vpack.c.bf16 %v2204, %v2203
  %v2210 = vpack.c.bf16 %v2206, %v2205
  %v2211 = vld [vmem:[%s49] sm:$0xf]
  %v2212 = vld [vmem:[%s49 + $0x4] sm:$0xf]
  %v2213 = vld [vmem:[%s49 + $0x8] sm:$0xf]
  %v2214 = vld [vmem:[%s49 + $0xc] sm:$0xf]
  %v2215 = vld [vmem:[%s57] sm:$0x1]
  %v2217 = vperm.slane %v2215, 0
  %v2223 = vunpack.c.l.b16 %v2211
  %v2224 = vunpack.c.l.b16 %v2212
  %v2225 = vunpack.c.l.b16 %v2213
  %v2226 = vunpack.c.l.b16 %v2214
  %v2227 = vpack.c.b16 %v2224, %v2223
  %v2228 = vpack.c.b16 %v2226, %v2225
  %v2232 = vsel %vm255, %v2207, 0
  %v2235 = vsel %vm255, %v2208, 0
  %v2238 = vsel %vm255, %v2209, 0
  %v2241 = vsel %vm255, %v2210, 0
  %2243 = vmatpush.bf16.msra.mxu0 0
  %2244 = vmatpush.bf16.msra.mxu0 0
  %2245 = vmatpush.bf16.msra.mxu0 0
  %2246 = vmatpush.bf16.msra.mxu0 0
  %2247 = vmatpush.bf16.msra.mxu0 0
  %2248 = vmatpush.bf16.msra.mxu0 0
  %2249 = vmatpush.bf16.msra.mxu0 %v2228
  %2250 = vmatpush.bf16.msra.mxu0 %v2227
  %2251 = vmatmul.bf16.gmra.mxu0 %v2232
  %v2252 = vpop.f32.mrf.mxu0
  %v2253 = vadd.f32 %v2217, %v2252
  %v2254 = vpop.f32.mrf.mxu0
  %v2255 = vadd.f32 %v2217, %v2254
  %2256 = vmatmul.bf16.gmra.mxu0 %v2235
  %v2257 = vpop.f32.mrf.mxu0
  %v2258 = vadd.f32 %v2217, %v2257
  %v2259 = vpop.f32.mrf.mxu0
  %v2260 = vadd.f32 %v2217, %v2259
  %2261 = vmatmul.bf16.gmra.mxu0 %v2238
  %v2262 = vpop.f32.mrf.mxu0
  %v2263 = vadd.f32 %v2217, %v2262
  %v2264 = vpop.f32.mrf.mxu0
  %v2265 = vadd.f32 %v2217, %v2264
  %2266 = vmatmul.bf16.gmra.mxu0 %v2241
  %v2267 = vpop.f32.mrf.mxu0
  %v2268 = vadd.f32 %v2217, %v2267
  %v2269 = vpop.f32.mrf.mxu0
  %v2270 = vadd.f32 %v2217, %v2269
  %2271 = vdwg.mxu0
  %2272 = vst.msk [vmem:[#allocation3] sm:$0xff] %vm205, %v2253
  %2273 = vst.msk [vmem:[#allocation3 + $0x8] sm:$0xff] %vm205, %v2255
  %2274 = vst.msk [vmem:[#allocation3 + $0x10] sm:$0xff] %vm205, %v2258
  %2275 = vst.msk [vmem:[#allocation3 + $0x18] sm:$0xff] %vm205, %v2260
  %2276 = vst.msk [vmem:[#allocation3 + $0x20] sm:$0xff] %vm205, %v2263
  %2277 = vst.msk [vmem:[#allocation3 + $0x28] sm:$0xff] %vm205, %v2265
  %2278 = vst.msk [vmem:[#allocation3 + $0x30] sm:$0xff] %vm205, %v2268
  %2279 = vst.msk [vmem:[#allocation3 + $0x38] sm:$0xff] %vm205, %v2270
  %v2280 = vld [vmem:[%s51] sm:$0xf]
  %v2281 = vld [vmem:[%s51 + $0x4] sm:$0xf]
  %v2282 = vld [vmem:[%s51 + $0x8] sm:$0xf]
  %v2283 = vld [vmem:[%s51 + $0xc] sm:$0xf]
  %v2284 = vld [vmem:[%s59] sm:$0x1]
  %v2286 = vperm.slane %v2284, 0
  %v2292 = vunpack.c.l.b16 %v2280
  %v2293 = vunpack.c.l.b16 %v2281
  %v2294 = vunpack.c.l.b16 %v2282
  %v2295 = vunpack.c.l.b16 %v2283
  %v2296 = vpack.c.b16 %v2293, %v2292
  %v2297 = vpack.c.b16 %v2295, %v2294
  %2300 = vmatpush.bf16.msra.mxu0 0
  %2301 = vmatpush.bf16.msra.mxu0 0
  %2302 = vmatpush.bf16.msra.mxu0 0
  %2303 = vmatpush.bf16.msra.mxu0 0
  %2304 = vmatpush.bf16.msra.mxu0 0
  %2305 = vmatpush.bf16.msra.mxu0 0
  %2306 = vmatpush.bf16.msra.mxu0 %v2297
  %2307 = vmatpush.bf16.msra.mxu0 %v2296
  %2308 = vmatmul.bf16.gmra.mxu0 %v2232
  %v2309 = vpop.f32.mrf.mxu0
  %v2310 = vadd.f32 %v2286, %v2309
  %v2311 = vpop.f32.mrf.mxu0
  %v2312 = vadd.f32 %v2286, %v2311
  %2313 = vmatmul.bf16.gmra.mxu0 %v2235
  %v2314 = vpop.f32.mrf.mxu0
  %v2315 = vadd.f32 %v2286, %v2314
  %v2316 = vpop.f32.mrf.mxu0
  %v2317 = vadd.f32 %v2286, %v2316
  %2318 = vmatmul.bf16.gmra.mxu0 %v2238
  %v2319 = vpop.f32.mrf.mxu0
  %v2320 = vadd.f32 %v2286, %v2319
  %v2321 = vpop.f32.mrf.mxu0
  %v2322 = vadd.f32 %v2286, %v2321
  %2323 = vmatmul.bf16.gmra.mxu0 %v2241
  %v2324 = vpop.f32.mrf.mxu0
  %v2325 = vadd.f32 %v2286, %v2324
  %v2326 = vpop.f32.mrf.mxu0
  %v2327 = vadd.f32 %v2286, %v2326
  %2328 = vdwg.mxu0
  %2329 = vst.msk [vmem:[#allocation4] sm:$0xff] %vm255, %v2310
  %2330 = vst.msk [vmem:[#allocation4 + $0x8] sm:$0xff] %vm255, %v2312
  %2331 = vst.msk [vmem:[#allocation4 + $0x10] sm:$0xff] %vm255, %v2315
  %2332 = vst.msk [vmem:[#allocation4 + $0x18] sm:$0xff] %vm255, %v2317
  %2333 = vst.msk [vmem:[#allocation4 + $0x20] sm:$0xff] %vm255, %v2320
  %2334 = vst.msk [vmem:[#allocation4 + $0x28] sm:$0xff] %vm255, %v2322
  %2335 = vst.msk [vmem:[#allocation4 + $0x30] sm:$0xff] %vm255, %v2325
  %2336 = vst.msk [vmem:[#allocation4 + $0x38] sm:$0xff] %vm255, %v2327
  %v2337 = vld [vmem:[%s53] sm:$0xf]
  %v2338 = vld [vmem:[%s53 + $0x4] sm:$0xf]
  %v2339 = vld [vmem:[%s53 + $0x8] sm:$0xf]
  %v2340 = vld [vmem:[%s53 + $0xc] sm:$0xf]
  %v2341 = vld [vmem:[%s55] sm:$0xf]
  %v2342 = vld [vmem:[%s55 + $0x4] sm:$0xf]
  %v2343 = vld [vmem:[%s55 + $0x8] sm:$0xf]
  %v2344 = vld [vmem:[%s55 + $0xc] sm:$0xf]
  %v2345 = vld [vmem:[%s61] sm:$0x1]
  %v2347 = vperm.slane %v2345, 0
  %v2349 = vld [vmem:[#allocation3] sm:$0xff]
  %v2350 = vld [vmem:[#allocation4] sm:$0xff]
  %v2355 = vunpack.c.l.b16 %v2337
  %v2356 = vunpack.c.l.b16 %v2338
  %v2357 = vunpack.c.l.b16 %v2339
  %v2358 = vunpack.c.l.b16 %v2340
  %v2359 = vpack.c.b16 %v2356, %v2355
  %v2360 = vpack.c.b16 %v2358, %v2357
  %2363 = vmatpush.bf16.msra.mxu0 0
  %2364 = vmatpush.bf16.msra.mxu0 0
  %2365 = vmatpush.bf16.msra.mxu0 0
  %2366 = vmatpush.bf16.msra.mxu0 0
  %2367 = vmatpush.bf16.msra.mxu0 0
  %2368 = vmatpush.bf16.msra.mxu0 0
  %2369 = vmatpush.bf16.msra.mxu0 %v2360
  %2370 = vmatpush.bf16.msra.mxu0 %v2359
  %2371 = vmatmul.bf16.gmra.mxu0 %v291
  %v2372 = vpop.f32.mrf.mxu0
  %v2373 = vadd.f32 0.0, %v2372
  %v2374 = vpop.f32.mrf.mxu0
  %2375 = vdwg.mxu0
  %v2376 = vadd.f32 %v2349, %v2373
  %v2377 = vxor.u32 %v2376, 2147483648
  %v2378 = vmul.f32 %v2377, 1.442695
  %v2379 = vpow.pop %v2378
  %v2380 = vadd.f32 %v2379, 1.0
  %v2381 = vrcp.pop %v2380
  %v2382 = vmul.f32 %v2380, %v2381
  %v2383 = vsub.f32 1.0, %v2382
  %v2384 = vmul.f32 %v2381, %v2383
  %v2385 = vadd.f32 %v2381, %v2384
  %vm2386 = vweird.f32 %v2380
  %vm2387 = vweird.f32 %v2381
  %vm2388 = vmor %vm2386, %vm2387
  %v2389 = vsel %vm2388, %v2381, %v2385
  %v2390 = vand.u32 2147483647, %v2380
  %vm2391 = vcmp.eq.f32.partialorder %v2390, 8.507059e+37
  %v2392 = vand.u32 %v2380, 2147483648
  %v2393 = vor.u32 1.1754944e-38, %v2392
  %v2394 = vsel %vm2391, %v2393, %v2389
  %v2395 = vmul.f32 1.0, %v2394
  %v2400 = vunpack.c.l.b16 %v2341
  %v2401 = vunpack.c.l.b16 %v2342
  %v2402 = vunpack.c.l.b16 %v2343
  %v2403 = vunpack.c.l.b16 %v2344
  %v2404 = vpack.c.b16 %v2401, %v2400
  %v2405 = vpack.c.b16 %v2403, %v2402
  %2408 = vmatpush.bf16.msra.mxu0 0
  %2409 = vmatpush.bf16.msra.mxu0 0
  %2410 = vmatpush.bf16.msra.mxu0 0
  %2411 = vmatpush.bf16.msra.mxu0 0
  %2412 = vmatpush.bf16.msra.mxu0 0
  %2413 = vmatpush.bf16.msra.mxu0 0
  %2414 = vmatpush.bf16.msra.mxu0 %v2405
  %2415 = vmatpush.bf16.msra.mxu0 %v2404
  %2416 = vmatmul.bf16.gmra.mxu0 %v291
  %v2417 = vpop.f32.mrf.mxu0
  %v2418 = vadd.f32 %v2347, %v2417
  %v2419 = vpop.f32.mrf.mxu0
  %2420 = vdwg.mxu0
  %v2421 = vmul.f32 %v2395, %v2418
  %v2422 = vadd.f32 %v2350, %v2421
  %v2423 = vtanh.pop %v2422
  %v2424 = vsub.f32 0.0, %v2423
  %2426 = vrot.lane.b32.xlu0 %v2424, 32
  %v2427 = vpop.permute.xlu0 %2426
  %v2429 = vmul.f32 %v2395, %v2427
  %2431 = vrot.lane.b32.xlu0 %v2429, 96
  %v2432 = vpop.permute.xlu0 %2431
  %v2434 = vadd.f32 %v2423, %v2432
  %2435 = vst.msk [vmem:[#allocation2] sm:$0xff] %vm255, %v2434
  %v2436 = vld [vmem:[%s366] sm:$0xff]
  %v2437 = vld [vmem:[%s368] sm:$0xff]
  %v2438 = vpack.c.bf16 %v2434, %v2434
  %v2440 = vsel %vm255, %v2438, 0
  %2442 = vmatpush.bf16.msra.mxu0 0
  %2443 = vmatpush.bf16.msra.mxu0 0
  %2444 = vmatpush.bf16.msra.mxu0 0
  %2445 = vmatpush.bf16.msra.mxu0 0
  %2446 = vmatpush.bf16.msra.mxu0 0
  %2447 = vmatpush.bf16.msra.mxu0 0
  %2448 = vmatpush.bf16.msra.mxu0 %v2360
  %2449 = vmatpush.bf16.msra.mxu0 %v2359
  %2450 = vmatmul.bf16.gmra.mxu0 %v2440
  %v2451 = vpop.f32.mrf.mxu0
  %v2452 = vadd.f32 0.0, %v2451
  %v2453 = vpop.f32.mrf.mxu0
  %2454 = vdwg.mxu0
  %v2455 = vadd.f32 %v2436, %v2452
  %v2456 = vxor.u32 %v2455, 2147483648
  %v2457 = vmul.f32 %v2456, 1.442695
  %v2458 = vpow.pop %v2457
  %v2459 = vadd.f32 %v2458, 1.0
  %v2460 = vrcp.pop %v2459
  %v2461 = vmul.f32 %v2459, %v2460
  %v2462 = vsub.f32 1.0, %v2461
  %v2463 = vmul.f32 %v2460, %v2462
  %v2464 = vadd.f32 %v2460, %v2463
  %vm2465 = vweird.f32 %v2459
  %vm2466 = vweird.f32 %v2460
  %vm2467 = vmor %vm2465, %vm2466
  %v2468 = vsel %vm2467, %v2460, %v2464
  %v2469 = vand.u32 2147483647, %v2459
  %vm2470 = vcmp.eq.f32.partialorder %v2469, 8.507059e+37
  %v2471 = vand.u32 %v2459, 2147483648
  %v2472 = vor.u32 1.1754944e-38, %v2471
  %v2473 = vsel %vm2470, %v2472, %v2468
  %v2474 = vmul.f32 1.0, %v2473
  %2475 = vmatpush.bf16.msra.mxu0 0
  %2476 = vmatpush.bf16.msra.mxu0 0
  %2477 = vmatpush.bf16.msra.mxu0 0
  %2478 = vmatpush.bf16.msra.mxu0 0
  %2479 = vmatpush.bf16.msra.mxu0 0
  %2480 = vmatpush.bf16.msra.mxu0 0
  %2481 = vmatpush.bf16.msra.mxu0 %v2405
  %2482 = vmatpush.bf16.msra.mxu0 %v2404
  %2483 = vmatmul.bf16.gmra.mxu0 %v2440
  %v2484 = vpop.f32.mrf.mxu0
  %v2485 = vadd.f32 %v2347, %v2484
  %v2486 = vpop.f32.mrf.mxu0
  %2487 = vdwg.mxu0
  %v2488 = vmul.f32 %v2474, %v2485
  %v2489 = vadd.f32 %v2437, %v2488
  %v2490 = vtanh.pop %v2489
  %v2491 = vsub.f32 %v2434, %v2490
  %2493 = vrot.lane.b32.xlu0 %v2491, 32
  %v2494 = vpop.permute.xlu0 %2493
  %v2496 = vmul.f32 %v2474, %v2494
  %2498 = vrot.lane.b32.xlu0 %v2496, 96
  %v2499 = vpop.permute.xlu0 %2498
  %v2501 = vadd.f32 %v2490, %v2499
  %2502 = vst.msk [vmem:[%s434] sm:$0xff] %vm255, %v2501
  %v2503 = vld [vmem:[%s436] sm:$0xff]
  %v2504 = vld [vmem:[%s438] sm:$0xff]
  %v2505 = vpack.c.bf16 %v2501, %v2501
  %v2507 = vsel %vm255, %v2505, 0
  %2509 = vmatpush.bf16.msra.mxu0 0
  %2510 = vmatpush.bf16.msra.mxu0 0
  %2511 = vmatpush.bf16.msra.mxu0 0
  %2512 = vmatpush.bf16.msra.mxu0 0
  %2513 = vmatpush.bf16.msra.mxu0 0
  %2514 = vmatpush.bf16.msra.mxu0 0
  %2515 = vmatpush.bf16.msra.mxu0 %v2360
  %2516 = vmatpush.bf16.msra.mxu0 %v2359
  %2517 = vmatmul.bf16.gmra.mxu0 %v2507
  %v2518 = vpop.f32.mrf.mxu0
  %v2519 = vadd.f32 0.0, %v2518
  %v2520 = vpop.f32.mrf.mxu0
  %2521 = vdwg.mxu0
  %v2522 = vadd.f32 %v2503, %v2519
  %v2523 = vxor.u32 %v2522, 2147483648
  %v2524 = vmul.f32 %v2523, 1.442695
  %v2525 = vpow.pop %v2524
  %v2526 = vadd.f32 %v2525, 1.0
  %v2527 = vrcp.pop %v2526
  %v2528 = vmul.f32 %v2526, %v2527
  %v2529 = vsub.f32 1.0, %v2528
  %v2530 = vmul.f32 %v2527, %v2529
  %v2531 = vadd.f32 %v2527, %v2530
  %vm2532 = vweird.f32 %v2526
  %vm2533 = vweird.f32 %v2527
  %vm2534 = vmor %vm2532, %vm2533
  %v2535 = vsel %vm2534, %v2527, %v2531
  %v2536 = vand.u32 2147483647, %v2526
  %vm2537 = vcmp.eq.f32.partialorder %v2536, 8.507059e+37
  %v2538 = vand.u32 %v2526, 2147483648
  %v2539 = vor.u32 1.1754944e-38, %v2538
  %v2540 = vsel %vm2537, %v2539, %v2535
  %v2541 = vmul.f32 1.0, %v2540
  %2542 = vmatpush.bf16.msra.mxu0 0
  %2543 = vmatpush.bf16.msra.mxu0 0
  %2544 = vmatpush.bf16.msra.mxu0 0
  %2545 = vmatpush.bf16.msra.mxu0 0
  %2546 = vmatpush.bf16.msra.mxu0 0
  %2547 = vmatpush.bf16.msra.mxu0 0
  %2548 = vmatpush.bf16.msra.mxu0 %v2405
  %2549 = vmatpush.bf16.msra.mxu0 %v2404
  %2550 = vmatmul.bf16.gmra.mxu0 %v2507
  %v2551 = vpop.f32.mrf.mxu0
  %v2552 = vadd.f32 %v2347, %v2551
  %v2553 = vpop.f32.mrf.mxu0
  %2554 = vdwg.mxu0
  %v2555 = vmul.f32 %v2541, %v2552
  %v2556 = vadd.f32 %v2504, %v2555
  %v2557 = vtanh.pop %v2556
  %v2558 = vsub.f32 %v2501, %v2557
  %2560 = vrot.lane.b32.xlu0 %v2558, 32
  %v2561 = vpop.permute.xlu0 %2560
  %v2563 = vmul.f32 %v2541, %v2561
  %2565 = vrot.lane.b32.xlu0 %v2563, 96
  %v2566 = vpop.permute.xlu0 %2565
  %v2568 = vadd.f32 %v2557, %v2566
  %2569 = vst.msk [vmem:[%s504] sm:$0xff] %vm255, %v2568
  %v2570 = vld [vmem:[%s506] sm:$0xff]
  %v2571 = vld [vmem:[%s508] sm:$0xff]
  %v2572 = vpack.c.bf16 %v2568, %v2568
  %v2574 = vsel %vm255, %v2572, 0
  %2576 = vmatpush.bf16.msra.mxu0 0
  %2577 = vmatpush.bf16.msra.mxu0 0
  %2578 = vmatpush.bf16.msra.mxu0 0
  %2579 = vmatpush.bf16.msra.mxu0 0
  %2580 = vmatpush.bf16.msra.mxu0 0
  %2581 = vmatpush.bf16.msra.mxu0 0
  %2582 = vmatpush.bf16.msra.mxu0 %v2360
  %2583 = vmatpush.bf16.msra.mxu0 %v2359
  %2584 = vmatmul.bf16.gmra.mxu0 %v2574
  %v2585 = vpop.f32.mrf.mxu0
  %v2586 = vadd.f32 0.0, %v2585
  %v2587 = vpop.f32.mrf.mxu0
  %2588 = vdwg.mxu0
  %v2589 = vadd.f32 %v2570, %v2586
  %v2590 = vxor.u32 %v2589, 2147483648
  %v2591 = vmul.f32 %v2590, 1.442695
  %v2592 = vpow.pop %v2591
  %v2593 = vadd.f32 %v2592, 1.0
  %v2594 = vrcp.pop %v2593
  %v2595 = vmul.f32 %v2593, %v2594
  %v2596 = vsub.f32 1.0, %v2595
  %v2597 = vmul.f32 %v2594, %v2596
  %v2598 = vadd.f32 %v2594, %v2597
  %vm2599 = vweird.f32 %v2593
  %vm2600 = vweird.f32 %v2594
  %vm2601 = vmor %vm2599, %vm2600
  %v2602 = vsel %vm2601, %v2594, %v2598
  %v2603 = vand.u32 2147483647, %v2593
  %vm2604 = vcmp.eq.f32.partialorder %v2603, 8.507059e+37
  %v2605 = vand.u32 %v2593, 2147483648
  %v2606 = vor.u32 1.1754944e-38, %v2605
  %v2607 = vsel %vm2604, %v2606, %v2602
  %v2608 = vmul.f32 1.0, %v2607
  %2609 = vmatpush.bf16.msra.mxu0 0
  %2610 = vmatpush.bf16.msra.mxu0 0
  %2611 = vmatpush.bf16.msra.mxu0 0
  %2612 = vmatpush.bf16.msra.mxu0 0
  %2613 = vmatpush.bf16.msra.mxu0 0
  %2614 = vmatpush.bf16.msra.mxu0 0
  %2615 = vmatpush.bf16.msra.mxu0 %v2405
  %2616 = vmatpush.bf16.msra.mxu0 %v2404
  %2617 = vmatmul.bf16.gmra.mxu0 %v2574
  %v2618 = vpop.f32.mrf.mxu0
  %v2619 = vadd.f32 %v2347, %v2618
  %v2620 = vpop.f32.mrf.mxu0
  %2621 = vdwg.mxu0
  %v2622 = vmul.f32 %v2608, %v2619
  %v2623 = vadd.f32 %v2571, %v2622
  %v2624 = vtanh.pop %v2623
  %v2625 = vsub.f32 %v2568, %v2624
  %2627 = vrot.lane.b32.xlu0 %v2625, 32
  %v2628 = vpop.permute.xlu0 %2627
  %v2630 = vmul.f32 %v2608, %v2628
  %2632 = vrot.lane.b32.xlu0 %v2630, 96
  %v2633 = vpop.permute.xlu0 %2632
  %v2635 = vadd.f32 %v2624, %v2633
  %2636 = vst.msk [vmem:[%s574] sm:$0xff] %vm255, %v2635
  %v2637 = vld [vmem:[%s576] sm:$0xff]
  %v2638 = vld [vmem:[%s578] sm:$0xff]
  %v2639 = vpack.c.bf16 %v2635, %v2635
  %v2641 = vsel %vm255, %v2639, 0
  %2643 = vmatpush.bf16.msra.mxu0 0
  %2644 = vmatpush.bf16.msra.mxu0 0
  %2645 = vmatpush.bf16.msra.mxu0 0
  %2646 = vmatpush.bf16.msra.mxu0 0
  %2647 = vmatpush.bf16.msra.mxu0 0
  %2648 = vmatpush.bf16.msra.mxu0 0
  %2649 = vmatpush.bf16.msra.mxu0 %v2360
  %2650 = vmatpush.bf16.msra.mxu0 %v2359
  %2651 = vmatmul.bf16.gmra.mxu0 %v2641
  %v2652 = vpop.f32.mrf.mxu0
  %v2653 = vadd.f32 0.0, %v2652
  %v2654 = vpop.f32.mrf.mxu0
  %2655 = vdwg.mxu0
  %v2656 = vadd.f32 %v2637, %v2653
  %v2657 = vxor.u32 %v2656, 2147483648
  %v2658 = vmul.f32 %v2657, 1.442695
  %v2659 = vpow.pop %v2658
  %v2660 = vadd.f32 %v2659, 1.0
  %v2661 = vrcp.pop %v2660
  %v2662 = vmul.f32 %v2660, %v2661
  %v2663 = vsub.f32 1.0, %v2662
  %v2664 = vmul.f32 %v2661, %v2663
  %v2665 = vadd.f32 %v2661, %v2664
  %vm2666 = vweird.f32 %v2660
  %vm2667 = vweird.f32 %v2661
  %vm2668 = vmor %vm2666, %vm2667
  %v2669 = vsel %vm2668, %v2661, %v2665
  %v2670 = vand.u32 2147483647, %v2660
  %vm2671 = vcmp.eq.f32.partialorder %v2670, 8.507059e+37
  %v2672 = vand.u32 %v2660, 2147483648
  %v2673 = vor.u32 1.1754944e-38, %v2672
  %v2674 = vsel %vm2671, %v2673, %v2669
  %v2675 = vmul.f32 1.0, %v2674
  %2676 = vmatpush.bf16.msra.mxu0 0
  %2677 = vmatpush.bf16.msra.mxu0 0
  %2678 = vmatpush.bf16.msra.mxu0 0
  %2679 = vmatpush.bf16.msra.mxu0 0
  %2680 = vmatpush.bf16.msra.mxu0 0
  %2681 = vmatpush.bf16.msra.mxu0 0
  %2682 = vmatpush.bf16.msra.mxu0 %v2405
  %2683 = vmatpush.bf16.msra.mxu0 %v2404
  %2684 = vmatmul.bf16.gmra.mxu0 %v2641
  %v2685 = vpop.f32.mrf.mxu0
  %v2686 = vadd.f32 %v2347, %v2685
  %v2687 = vpop.f32.mrf.mxu0
  %2688 = vdwg.mxu0
  %v2689 = vmul.f32 %v2675, %v2686
  %v2690 = vadd.f32 %v2638, %v2689
  %v2691 = vtanh.pop %v2690
  %v2692 = vsub.f32 %v2635, %v2691
  %2694 = vrot.lane.b32.xlu0 %v2692, 32
  %v2695 = vpop.permute.xlu0 %2694
  %v2697 = vmul.f32 %v2675, %v2695
  %2699 = vrot.lane.b32.xlu0 %v2697, 96
  %v2700 = vpop.permute.xlu0 %2699
  %v2702 = vadd.f32 %v2691, %v2700
  %2703 = vst.msk [vmem:[%s644] sm:$0xff] %vm255, %v2702
  %v2704 = vld [vmem:[%s646] sm:$0xff]
  %v2705 = vld [vmem:[%s648] sm:$0xff]
  %v2706 = vpack.c.bf16 %v2702, %v2702
  %v2708 = vsel %vm255, %v2706, 0
  %2710 = vmatpush.bf16.msra.mxu0 0
  %2711 = vmatpush.bf16.msra.mxu0 0
  %2712 = vmatpush.bf16.msra.mxu0 0
  %2713 = vmatpush.bf16.msra.mxu0 0
  %2714 = vmatpush.bf16.msra.mxu0 0
  %2715 = vmatpush.bf16.msra.mxu0 0
  %2716 = vmatpush.bf16.msra.mxu0 %v2360
  %2717 = vmatpush.bf16.msra.mxu0 %v2359
  %2718 = vmatmul.bf16.gmra.mxu0 %v2708
  %v2719 = vpop.f32.mrf.mxu0
  %v2720 = vadd.f32 0.0, %v2719
  %v2721 = vpop.f32.mrf.mxu0
  %2722 = vdwg.mxu0
  %v2723 = vadd.f32 %v2704, %v2720
  %v2724 = vxor.u32 %v2723, 2147483648
  %v2725 = vmul.f32 %v2724, 1.442695
  %v2726 = vpow.pop %v2725
  %v2727 = vadd.f32 %v2726, 1.0
  %v2728 = vrcp.pop %v2727
  %v2729 = vmul.f32 %v2727, %v2728
  %v2730 = vsub.f32 1.0, %v2729
  %v2731 = vmul.f32 %v2728, %v2730
  %v2732 = vadd.f32 %v2728, %v2731
  %vm2733 = vweird.f32 %v2727
  %vm2734 = vweird.f32 %v2728
  %vm2735 = vmor %vm2733, %vm2734
  %v2736 = vsel %vm2735, %v2728, %v2732
  %v2737 = vand.u32 2147483647, %v2727
  %vm2738 = vcmp.eq.f32.partialorder %v2737, 8.507059e+37
  %v2739 = vand.u32 %v2727, 2147483648
  %v2740 = vor.u32 1.1754944e-38, %v2739
  %v2741 = vsel %vm2738, %v2740, %v2736
  %v2742 = vmul.f32 1.0, %v2741
  %2743 = vmatpush.bf16.msra.mxu0 0
  %2744 = vmatpush.bf16.msra.mxu0 0
  %2745 = vmatpush.bf16.msra.mxu0 0
  %2746 = vmatpush.bf16.msra.mxu0 0
  %2747 = vmatpush.bf16.msra.mxu0 0
  %2748 = vmatpush.bf16.msra.mxu0 0
  %2749 = vmatpush.bf16.msra.mxu0 %v2405
  %2750 = vmatpush.bf16.msra.mxu0 %v2404
  %2751 = vmatmul.bf16.gmra.mxu0 %v2708
  %v2752 = vpop.f32.mrf.mxu0
  %v2753 = vadd.f32 %v2347, %v2752
  %v2754 = vpop.f32.mrf.mxu0
  %2755 = vdwg.mxu0
  %v2756 = vmul.f32 %v2742, %v2753
  %v2757 = vadd.f32 %v2705, %v2756
  %v2758 = vtanh.pop %v2757
  %v2759 = vsub.f32 %v2702, %v2758
  %2761 = vrot.lane.b32.xlu0 %v2759, 32
  %v2762 = vpop.permute.xlu0 %2761
  %v2764 = vmul.f32 %v2742, %v2762
  %2766 = vrot.lane.b32.xlu0 %v2764, 96
  %v2767 = vpop.permute.xlu0 %2766
  %v2769 = vadd.f32 %v2758, %v2767
  %2770 = vst.msk [vmem:[%s714] sm:$0xff] %vm255, %v2769
  %v2771 = vld [vmem:[%s716] sm:$0xff]
  %v2772 = vld [vmem:[%s718] sm:$0xff]
  %v2773 = vpack.c.bf16 %v2769, %v2769
  %v2775 = vsel %vm255, %v2773, 0
  %2777 = vmatpush.bf16.msra.mxu0 0
  %2778 = vmatpush.bf16.msra.mxu0 0
  %2779 = vmatpush.bf16.msra.mxu0 0
  %2780 = vmatpush.bf16.msra.mxu0 0
  %2781 = vmatpush.bf16.msra.mxu0 0
  %2782 = vmatpush.bf16.msra.mxu0 0
  %2783 = vmatpush.bf16.msra.mxu0 %v2360
  %2784 = vmatpush.bf16.msra.mxu0 %v2359
  %2785 = vmatmul.bf16.gmra.mxu0 %v2775
  %v2786 = vpop.f32.mrf.mxu0
  %v2787 = vadd.f32 0.0, %v2786
  %v2788 = vpop.f32.mrf.mxu0
  %2789 = vdwg.mxu0
  %v2790 = vadd.f32 %v2771, %v2787
  %v2791 = vxor.u32 %v2790, 2147483648
  %v2792 = vmul.f32 %v2791, 1.442695
  %v2793 = vpow.pop %v2792
  %v2794 = vadd.f32 %v2793, 1.0
  %v2795 = vrcp.pop %v2794
  %v2796 = vmul.f32 %v2794, %v2795
  %v2797 = vsub.f32 1.0, %v2796
  %v2798 = vmul.f32 %v2795, %v2797
  %v2799 = vadd.f32 %v2795, %v2798
  %vm2800 = vweird.f32 %v2794
  %vm2801 = vweird.f32 %v2795
  %vm2802 = vmor %vm2800, %vm2801
  %v2803 = vsel %vm2802, %v2795, %v2799
  %v2804 = vand.u32 2147483647, %v2794
  %vm2805 = vcmp.eq.f32.partialorder %v2804, 8.507059e+37
  %v2806 = vand.u32 %v2794, 2147483648
  %v2807 = vor.u32 1.1754944e-38, %v2806
  %v2808 = vsel %vm2805, %v2807, %v2803
  %v2809 = vmul.f32 1.0, %v2808
  %2810 = vmatpush.bf16.msra.mxu0 0
  %2811 = vmatpush.bf16.msra.mxu0 0
  %2812 = vmatpush.bf16.msra.mxu0 0
  %2813 = vmatpush.bf16.msra.mxu0 0
  %2814 = vmatpush.bf16.msra.mxu0 0
  %2815 = vmatpush.bf16.msra.mxu0 0
  %2816 = vmatpush.bf16.msra.mxu0 %v2405
  %2817 = vmatpush.bf16.msra.mxu0 %v2404
  %2818 = vmatmul.bf16.gmra.mxu0 %v2775
  %v2819 = vpop.f32.mrf.mxu0
  %v2820 = vadd.f32 %v2347, %v2819
  %v2821 = vpop.f32.mrf.mxu0
  %2822 = vdwg.mxu0
  %v2823 = vmul.f32 %v2809, %v2820
  %v2824 = vadd.f32 %v2772, %v2823
  %v2825 = vtanh.pop %v2824
  %v2826 = vsub.f32 %v2769, %v2825
  %2828 = vrot.lane.b32.xlu0 %v2826, 32
  %v2829 = vpop.permute.xlu0 %2828
  %v2831 = vmul.f32 %v2809, %v2829
  %2833 = vrot.lane.b32.xlu0 %v2831, 96
  %v2834 = vpop.permute.xlu0 %2833
  %v2836 = vadd.f32 %v2825, %v2834
  %2837 = vst.msk [vmem:[%s784] sm:$0xff] %vm255, %v2836
  %v2838 = vld [vmem:[%s786] sm:$0xff]
  %v2839 = vld [vmem:[%s788] sm:$0xff]
  %v2840 = vpack.c.bf16 %v2836, %v2836
  %v2842 = vsel %vm255, %v2840, 0
  %2844 = vmatpush.bf16.msra.mxu0 0
  %2845 = vmatpush.bf16.msra.mxu0 0
  %2846 = vmatpush.bf16.msra.mxu0 0
  %2847 = vmatpush.bf16.msra.mxu0 0
  %2848 = vmatpush.bf16.msra.mxu0 0
  %2849 = vmatpush.bf16.msra.mxu0 0
  %2850 = vmatpush.bf16.msra.mxu0 %v2360
  %2851 = vmatpush.bf16.msra.mxu0 %v2359
  %2852 = vmatmul.bf16.gmra.mxu0 %v2842
  %v2853 = vpop.f32.mrf.mxu0
  %v2854 = vadd.f32 0.0, %v2853
  %v2855 = vpop.f32.mrf.mxu0
  %2856 = vdwg.mxu0
  %v2857 = vadd.f32 %v2838, %v2854
  %v2858 = vxor.u32 %v2857, 2147483648
  %v2859 = vmul.f32 %v2858, 1.442695
  %v2860 = vpow.pop %v2859
  %v2861 = vadd.f32 %v2860, 1.0
  %v2862 = vrcp.pop %v2861
  %v2863 = vmul.f32 %v2861, %v2862
  %v2864 = vsub.f32 1.0, %v2863
  %v2865 = vmul.f32 %v2862, %v2864
  %v2866 = vadd.f32 %v2862, %v2865
  %vm2867 = vweird.f32 %v2861
  %vm2868 = vweird.f32 %v2862
  %vm2869 = vmor %vm2867, %vm2868
  %v2870 = vsel %vm2869, %v2862, %v2866
  %v2871 = vand.u32 2147483647, %v2861
  %vm2872 = vcmp.eq.f32.partialorder %v2871, 8.507059e+37
  %v2873 = vand.u32 %v2861, 2147483648
  %v2874 = vor.u32 1.1754944e-38, %v2873
  %v2875 = vsel %vm2872, %v2874, %v2870
  %v2876 = vmul.f32 1.0, %v2875
  %2877 = vmatpush.bf16.msra.mxu0 0
  %2878 = vmatpush.bf16.msra.mxu0 0
  %2879 = vmatpush.bf16.msra.mxu0 0
  %2880 = vmatpush.bf16.msra.mxu0 0
  %2881 = vmatpush.bf16.msra.mxu0 0
  %2882 = vmatpush.bf16.msra.mxu0 0
  %2883 = vmatpush.bf16.msra.mxu0 %v2405
  %2884 = vmatpush.bf16.msra.mxu0 %v2404
  %2885 = vmatmul.bf16.gmra.mxu0 %v2842
  %v2886 = vpop.f32.mrf.mxu0
  %v2887 = vadd.f32 %v2347, %v2886
  %v2888 = vpop.f32.mrf.mxu0
  %2889 = vdwg.mxu0
  %v2890 = vmul.f32 %v2876, %v2887
  %v2891 = vadd.f32 %v2839, %v2890
  %v2892 = vtanh.pop %v2891
  %v2893 = vsub.f32 %v2836, %v2892
  %2895 = vrot.lane.b32.xlu0 %v2893, 32
  %v2896 = vpop.permute.xlu0 %2895
  %v2898 = vmul.f32 %v2876, %v2896
  %2900 = vrot.lane.b32.xlu0 %v2898, 96
  %v2901 = vpop.permute.xlu0 %2900
  %v2903 = vadd.f32 %v2892, %v2901
  %2904 = vst.msk [vmem:[%s854] sm:$0xff] %vm255, %v2903
  %v2905 = vld [vmem:[#allocation2] sm:$0xff]
  %v2906 = vld [vmem:[#allocation2 + $0x8] sm:$0xff]
  %v2907 = vld [vmem:[#allocation2 + $0x10] sm:$0xff]
  %v2908 = vld [vmem:[#allocation2 + $0x18] sm:$0xff]
  %v2909 = vld [vmem:[#allocation2 + $0x20] sm:$0xff]
  %v2910 = vld [vmem:[#allocation2 + $0x28] sm:$0xff]
  %v2911 = vld [vmem:[#allocation2 + $0x30] sm:$0xff]
  %v2912 = vld [vmem:[#allocation2 + $0x38] sm:$0xff]
  %v2913 = vpack.c.bf16 %v2906, %v2905
  %v2914 = vpack.c.bf16 %v2908, %v2907
  %v2915 = vpack.c.bf16 %v2910, %v2909
  %v2916 = vpack.c.bf16 %v2912, %v2911
  %v2917 = vld [vmem:[%s63] sm:$0xf]
  %v2918 = vld [vmem:[%s63 + $0x4] sm:$0xf]
  %v2919 = vld [vmem:[%s63 + $0x8] sm:$0xf]
  %v2920 = vld [vmem:[%s63 + $0xc] sm:$0xf]
  %v2921 = vld [vmem:[%s65] sm:$0x1]
  %v2923 = vperm.slane %v2921, 0
  %v2929 = vunpack.c.l.b16 %v2917
  %v2930 = vunpack.c.l.b16 %v2918
  %v2931 = vunpack.c.l.b16 %v2919
  %v2932 = vunpack.c.l.b16 %v2920
  %v2933 = vpack.c.b16 %v2930, %v2929
  %v2934 = vpack.c.b16 %v2932, %v2931
  %v2938 = vsel %vm255, %v2913, 0
  %v2941 = vsel %vm255, %v2914, 0
  %v2944 = vsel %vm255, %v2915, 0
  %v2947 = vsel %vm255, %v2916, 0
  %2949 = vmatpush.bf16.msra.mxu0 0
  %2950 = vmatpush.bf16.msra.mxu0 0
  %2951 = vmatpush.bf16.msra.mxu0 0
  %2952 = vmatpush.bf16.msra.mxu0 0
  %2953 = vmatpush.bf16.msra.mxu0 0
  %2954 = vmatpush.bf16.msra.mxu0 0
  %2955 = vmatpush.bf16.msra.mxu0 %v2934
  %2956 = vmatpush.bf16.msra.mxu0 %v2933
  %2957 = vmatmul.bf16.gmra.mxu0 %v2938
  %v2958 = vpop.f32.mrf.mxu0
  %v2959 = vadd.f32 %v2923, %v2958
  %v2960 = vpop.f32.mrf.mxu0
  %v2961 = vadd.f32 %v2923, %v2960
  %2962 = vmatmul.bf16.gmra.mxu0 %v2941
  %v2963 = vpop.f32.mrf.mxu0
  %v2964 = vadd.f32 %v2923, %v2963
  %v2965 = vpop.f32.mrf.mxu0
  %v2966 = vadd.f32 %v2923, %v2965
  %2967 = vmatmul.bf16.gmra.mxu0 %v2944
  %v2968 = vpop.f32.mrf.mxu0
  %v2969 = vadd.f32 %v2923, %v2968
  %v2970 = vpop.f32.mrf.mxu0
  %v2971 = vadd.f32 %v2923, %v2970
  %2972 = vmatmul.bf16.gmra.mxu0 %v2947
  %v2973 = vpop.f32.mrf.mxu0
  %v2974 = vadd.f32 %v2923, %v2973
  %v2975 = vpop.f32.mrf.mxu0
  %v2976 = vadd.f32 %v2923, %v2975
  %2977 = vdwg.mxu0
  %2978 = vst [vmem:[%s67] sm:$0xff] %v2959
  %2979 = vst [vmem:[%s67 + $0x8] sm:$0xff] %v2961
  %2980 = vst [vmem:[%s67 + $0x10] sm:$0xff] %v2964
  %2981 = vst [vmem:[%s67 + $0x18] sm:$0xff] %v2966
  %2982 = vst [vmem:[%s67 + $0x20] sm:$0xff] %v2969
  %2983 = vst [vmem:[%s67 + $0x28] sm:$0xff] %v2971
  %2984 = vst [vmem:[%s67 + $0x30] sm:$0xff] %v2974
  %2985 = vst [vmem:[%s67 + $0x38] sm:$0xff] %v2976
  // Predicated region
  $region134: #{gru_autoencoder_forward.1} parent=0 // pred_check
    _
  $region135: #{gru_autoencoder_forward.1} parent=0 // pred_check_branch
    %2987 = sbr.rel (0) target = $region137
  $region136: #{gru_autoencoder_forward.1} parent=0 // pred_region
    _
  $region137: #{gru_autoencoder_forward.1} parent=0 // pred_fallthru
    _
  // Predicated region
  $region138: #{gru_autoencoder_forward.1} parent=0 // pred_check
    _
  $region139: #{gru_autoencoder_forward.1} parent=0 // pred_check_branch
    %2989 = sbr.rel (0) target = $region141
  $region140: #{gru_autoencoder_forward.1} parent=0 // pred_region
    _
  $region141: #{gru_autoencoder_forward.1} parent=0 // pred_fallthru
    _

</llo_original>
